<compile_context>
chip_gen: v7x
topology: tpu7x:2x2x1
jax: 0.10.0
libtpu: 0.0.40
codegen_flags: <defaults>
</compile_context>

<pallas_src>
import functools

import jax
import jax.numpy as jnp
from jax.experimental import pallas as pl
from jax.experimental.pallas import tpu as pltpu


DIMS = (498, 380, 250, 100, 52)     # logical PyTorch layer widths
LANE = 128


def _round_up(n, m):
    return ((n + m - 1) // m) * m


PAD_DIMS = tuple(_round_up(d, LANE) for d in DIMS)   # (512, 384, 256, 128, 128)


def dqn_kernel(x_ref,
               w1_ref, b1_ref,
               w2_ref, b2_ref,
               w3_ref, b3_ref,
               w4_ref, b4_ref,
               o_ref):
    """Fused 4-layer MLP with ReLU after every layer (matches the PyTorch forward).

    All weights/biases are resident in VMEM for every grid step (<1.5 MiB total);
    the grid only tiles the batch dimension. Activations are cast to the weight
    dtype before each dot so bf16 weights drive the MXU at bf16 rate; accumulation
    (preferred_element_type), bias add and ReLU stay in f32.
    """
    h = x_ref[...]   # already f32, no redundant cast
    for w_ref, b_ref in ((w1_ref, b1_ref), (w2_ref, b2_ref),
                         (w3_ref, b3_ref), (w4_ref, b4_ref)):
        h = jnp.dot(h.astype(w_ref.dtype), w_ref[...],
                    preferred_element_type=jnp.float32)
        h = jnp.maximum(h + b_ref[...], 0.0)
    o_ref[...] = h.astype(o_ref.dtype)


@functools.partial(jax.jit, static_argnames=("batch_tile", "vmem_limit_bytes"))
def dqn_forward(x, padded_params, *, batch_tile=256, vmem_limit_bytes=None):
    """x: [B, 498] float32. padded_params: output of prepare_params().

    Pads the batch to a multiple of batch_tile and the feature dim to 512, runs
    the fused kernel over a 1-D batch grid, then slices back to [B, 52].
    """
    B, dim = x.shape
    assert dim == DIMS[0]

    (w1, b1), (w2, b2), (w3, b3), (w4, b4) = padded_params

    n_tiles = (B + batch_tile - 1) // batch_tile       # ceil-div grid sizing
    B_pad = n_tiles * batch_tile

    # Zero-pad batch rows (tail tile) and feature lanes once, outside the kernel.
    x_pad = jnp.pad(x, ((0, B_pad - B), (0, PAD_DIMS[0] - dim)))

    def full_spec(arr):
        # Whole (padded) weight/bias as one VMEM-resident block, same every step.
        return pl.BlockSpec(arr.shape, lambda i: (0, 0))

    flops = 2 * B_pad * sum(PAD_DIMS[i] * PAD_DIMS[i + 1] for i in range(4))
    bytes_accessed = (
        x_pad.size * x_pad.dtype.itemsize
        + sum(w.size * w.dtype.itemsize + b.size * b.dtype.itemsize
              for w, b in padded_params)
        + B_pad * PAD_DIMS[-1] * 4)

    out = pl.pallas_call(
        dqn_kernel,
        out_shape=jax.ShapeDtypeStruct((B_pad, PAD_DIMS[-1]), jnp.float32),
        grid_spec=pltpu.PrefetchScalarGridSpec(
            num_scalar_prefetch=0,
            grid=(n_tiles,),
            in_specs=[
                pl.BlockSpec((batch_tile, PAD_DIMS[0]), lambda i: (i, 0)),
                full_spec(w1), full_spec(b1),
                full_spec(w2), full_spec(b2),
                full_spec(w3), full_spec(b3),
                full_spec(w4), full_spec(b4),
            ],
            out_specs=pl.BlockSpec((batch_tile, PAD_DIMS[-1]), lambda i: (i, 0)),
        ),
        compiler_params=pltpu.CompilerParams(
            # Batch tiles are independent -> megacore sharding on v7x when the
            # grid has >= 2 iterations.
            dimension_semantics=("parallel",),
            # Only needed for very large batch tiles (>= ~2048 rows); default
            # scoped VMEM is plenty for 128-1024 row tiles.
            vmem_limit_bytes=vmem_limit_bytes,
        ),
        cost_estimate=pl.CostEstimate(
            flops=flops, transcendentals=0, bytes_accessed=bytes_accessed),
    )(x_pad, w1, b1, w2, b2, w3, b3, w4, b4)

    return out[:B, :DIMS[-1]]


def prepare_params(params, weight_dtype=jnp.bfloat16):
    """Zero-pad (in, out) weights / (1, out) biases to lane-aligned widths and
    cast weights to `weight_dtype` (bf16 recommended on v6e/v7x, f32 on v5e).

    Zero padding preserves semantics exactly: padded input lanes of x are zero,
    padded output columns have zero weights and zero bias, and ReLU keeps them
    at 0 going into the next layer.
    """
    out = []
    for li, (w_t, b) in enumerate(params):
        in_p, out_p = PAD_DIMS[li], PAD_DIMS[li + 1]
        w_pad = jnp.pad(w_t, ((0, in_p - w_t.shape[0]), (0, out_p - w_t.shape[1])))
        b_pad = jnp.pad(b, ((0, 0), (0, out_p - b.shape[1])))
        out.append((w_pad.astype(weight_dtype), b_pad.astype(jnp.float32)))
    return out


def init_params(key):
    """PyTorch nn.Linear-style init (U(-1/sqrt(fan_in), +1/sqrt(fan_in))).
    Weights are returned already transposed to (in, out)."""
    params = []
    for li in range(4):
        fan_in, fan_out = DIMS[li], DIMS[li + 1]
        key, kw, kb = jax.random.split(key, 3)
        bound = 1.0 / jnp.sqrt(jnp.float32(fan_in))
        w_t = jax.random.uniform(kw, (fan_in, fan_out), jnp.float32, -bound, bound)
        b = jax.random.uniform(kb, (1, fan_out), jnp.float32, -bound, bound)
        params.append((w_t, b))
    return params


def reference_forward(x, params):
    h = x
    for w_t, b in params:
        h = jnp.maximum(h @ w_t + b, 0.0)
    return h


if __name__ == "__main__":
    key = jax.random.PRNGKey(0)
    kparams, kx1, kx2 = jax.random.split(key, 3)

    params = init_params(kparams)

    # Small batch (padded up to one batch tile inside the wrapper).
    x_small = jax.random.normal(kx1, (8, DIMS[0]), jnp.float32)
    # Ragged batch: not a multiple of the tile -> exercises cdiv grid + tail padding.
    x_big = jax.random.normal(kx2, (300, DIMS[0]), jnp.float32)

    ref_small = reference_forward(x_small, params)
    ref_big = reference_forward(x_big, params)

    # f32 weights: tight check against the pure-JAX reference.
    p_f32 = prepare_params(params, jnp.float32)
    out_small = jax.block_until_ready(dqn_forward(x_small, p_f32))
    out_big = jax.block_until_ready(dqn_forward(x_big, p_f32))
    assert out_small.shape == (8, DIMS[-1])
    assert out_big.shape == (300, DIMS[-1])
    assert jnp.max(jnp.abs(out_small - ref_small)) < 1e-4
    assert jnp.max(jnp.abs(out_big - ref_big)) < 1e-4

    # bf16 weights (recommended on v6e/v7x): f32 accumulation, looser tolerance.
    p_bf16 = prepare_params(params, jnp.bfloat16)
    out_bf16 = jax.block_until_ready(dqn_forward(x_big, p_bf16))
    rel_err = jnp.max(jnp.abs(out_bf16 - ref_big)) / (jnp.max(jnp.abs(ref_big)) + 1e-6)
    assert rel_err < 5e-2

    # NOTE: ReLU after fc4 is kept because the PyTorch module's forward applies it.
    print("KERNEL_OK")
</pallas_src>

<mosaic_0001>
module attributes {stable_mosaic.version = 11 : i64} {
  func.func @dqn_kernel(%arg0: i32, %arg1: memref<256x512xf32, #tpu.memory_space<vmem>>, %arg2: memref<512x384xf32, #tpu.memory_space<vmem>>, %arg3: memref<1x384xf32, #tpu.memory_space<vmem>>, %arg4: memref<384x256xf32, #tpu.memory_space<vmem>>, %arg5: memref<1x256xf32, #tpu.memory_space<vmem>>, %arg6: memref<256x128xf32, #tpu.memory_space<vmem>>, %arg7: memref<1x128xf32, #tpu.memory_space<vmem>>, %arg8: memref<128x128xf32, #tpu.memory_space<vmem>>, %arg9: memref<1x128xf32, #tpu.memory_space<vmem>>, %arg10: memref<256x128xf32, #tpu.memory_space<vmem>>) attributes {dimension_semantics = [#tpu.dimension_semantics<parallel>], iteration_bounds = array<i64: 1>, scalar_prefetch = 0 : i64, scratch_operands = 0 : i64, tpu.core_type = #tpu.core_type<tc>, window_params = [{transform_indices = @transform_0, window_bounds = array<i64: 256, 512>}, {pipeline_mode = #tpu.pipeline_mode<synchronous>, transform_indices = @transform_1, window_bounds = array<i64: 512, 384>}, {pipeline_mode = #tpu.pipeline_mode<synchronous>, transform_indices = @transform_2, window_bounds = array<i64: 1, 384>}, {pipeline_mode = #tpu.pipeline_mode<synchronous>, transform_indices = @transform_3, window_bounds = array<i64: 384, 256>}, {pipeline_mode = #tpu.pipeline_mode<synchronous>, transform_indices = @transform_4, window_bounds = array<i64: 1, 256>}, {pipeline_mode = #tpu.pipeline_mode<synchronous>, transform_indices = @transform_5, window_bounds = array<i64: 256, 128>}, {pipeline_mode = #tpu.pipeline_mode<synchronous>, transform_indices = @transform_6, window_bounds = array<i64: 1, 128>}, {pipeline_mode = #tpu.pipeline_mode<synchronous>, transform_indices = @transform_7, window_bounds = array<i64: 128, 128>}, {pipeline_mode = #tpu.pipeline_mode<synchronous>, transform_indices = @transform_8, window_bounds = array<i64: 1, 128>}, {transform_indices = @transform_9, window_bounds = array<i64: 256, 128>}]} {
    %c0 = arith.constant 0 : index
    %c0_0 = arith.constant 0 : index
    %0 = vector.load %arg1[%c0, %c0_0] : memref<256x512xf32, #tpu.memory_space<vmem>>, vector<256x512xf32>
    %c0_1 = arith.constant 0 : index
    %c0_2 = arith.constant 0 : index
    %1 = vector.load %arg2[%c0_1, %c0_2] : memref<512x384xf32, #tpu.memory_space<vmem>>, vector<512x384xf32>
    %cst = arith.constant dense<0.000000e+00> : vector<256x384xf32>
    %2 = tpu.matmul %0, %1, %cst {dimension_numbers = #tpu.dot_dimension_numbers<[1], [0], [0], [1], [0, 0, 1, 1], [], []>} : vector<256x512xf32>, vector<512x384xf32>, vector<256x384xf32> -> vector<256x384xf32>
    %c0_3 = arith.constant 0 : index
    %c0_4 = arith.constant 0 : index
    %3 = vector.load %arg3[%c0_3, %c0_4] : memref<1x384xf32, #tpu.memory_space<vmem>>, vector<1x384xf32>
    %4 = vector.broadcast %3 : vector<1x384xf32> to vector<256x384xf32>
    %5 = arith.addf %2, %4 : vector<256x384xf32>
    %cst_5 = arith.constant 0.000000e+00 : f32
    %6 = vector.broadcast %cst_5 : f32 to vector<256x384xf32>
    %7 = arith.maximumf %5, %6 : vector<256x384xf32>
    %c0_6 = arith.constant 0 : index
    %c0_7 = arith.constant 0 : index
    %8 = vector.load %arg4[%c0_6, %c0_7] : memref<384x256xf32, #tpu.memory_space<vmem>>, vector<384x256xf32>
    %cst_8 = arith.constant dense<0.000000e+00> : vector<256x256xf32>
    %9 = tpu.matmul %7, %8, %cst_8 {dimension_numbers = #tpu.dot_dimension_numbers<[1], [0], [0], [1], [0, 0, 1, 1], [], []>} : vector<256x384xf32>, vector<384x256xf32>, vector<256x256xf32> -> vector<256x256xf32>
    %c0_9 = arith.constant 0 : index
    %c0_10 = arith.constant 0 : index
    %10 = vector.load %arg5[%c0_9, %c0_10] : memref<1x256xf32, #tpu.memory_space<vmem>>, vector<1x256xf32>
    %11 = vector.broadcast %10 : vector<1x256xf32> to vector<256x256xf32>
    %12 = arith.addf %9, %11 : vector<256x256xf32>
    %cst_11 = arith.constant 0.000000e+00 : f32
    %13 = vector.broadcast %cst_11 : f32 to vector<256x256xf32>
    %14 = arith.maximumf %12, %13 : vector<256x256xf32>
    %c0_12 = arith.constant 0 : index
    %c0_13 = arith.constant 0 : index
    %15 = vector.load %arg6[%c0_12, %c0_13] : memref<256x128xf32, #tpu.memory_space<vmem>>, vector<256x128xf32>
    %cst_14 = arith.constant dense<0.000000e+00> : vector<256x128xf32>
    %16 = tpu.matmul %14, %15, %cst_14 {dimension_numbers = #tpu.dot_dimension_numbers<[1], [0], [0], [1], [0, 0, 1, 1], [], []>} : vector<256x256xf32>, vector<256x128xf32>, vector<256x128xf32> -> vector<256x128xf32>
    %c0_15 = arith.constant 0 : index
    %c0_16 = arith.constant 0 : index
    %17 = vector.load %arg7[%c0_15, %c0_16] : memref<1x128xf32, #tpu.memory_space<vmem>>, vector<1x128xf32>
    %18 = vector.broadcast %17 : vector<1x128xf32> to vector<256x128xf32>
    %19 = arith.addf %16, %18 : vector<256x128xf32>
    %cst_17 = arith.constant 0.000000e+00 : f32
    %20 = vector.broadcast %cst_17 : f32 to vector<256x128xf32>
    %21 = arith.maximumf %19, %20 : vector<256x128xf32>
    %c0_18 = arith.constant 0 : index
    %c0_19 = arith.constant 0 : index
    %22 = vector.load %arg8[%c0_18, %c0_19] : memref<128x128xf32, #tpu.memory_space<vmem>>, vector<128x128xf32>
    %cst_20 = arith.constant dense<0.000000e+00> : vector<256x128xf32>
    %23 = tpu.matmul %21, %22, %cst_20 {dimension_numbers = #tpu.dot_dimension_numbers<[1], [0], [0], [1], [0, 0, 1, 1], [], []>} : vector<256x128xf32>, vector<128x128xf32>, vector<256x128xf32> -> vector<256x128xf32>
    %c0_21 = arith.constant 0 : index
    %c0_22 = arith.constant 0 : index
    %24 = vector.load %arg9[%c0_21, %c0_22] : memref<1x128xf32, #tpu.memory_space<vmem>>, vector<1x128xf32>
    %25 = vector.broadcast %24 : vector<1x128xf32> to vector<256x128xf32>
    %26 = arith.addf %23, %25 : vector<256x128xf32>
    %cst_23 = arith.constant 0.000000e+00 : f32
    %27 = vector.broadcast %cst_23 : f32 to vector<256x128xf32>
    %28 = arith.maximumf %26, %27 : vector<256x128xf32>
    %c0_24 = arith.constant 0 : index
    %c0_25 = arith.constant 0 : index
    %29 = vector.load %arg10[%c0_24, %c0_25] : memref<256x128xf32, #tpu.memory_space<vmem>>, vector<256x128xf32>
    tpu.vector_store %arg10[%c0_24, %c0_25], %28 {strides = array<i32>} : memref<256x128xf32, #tpu.memory_space<vmem>>, vector<256x128xf32>,
    return
  }
  func.func @transform_0(%arg0: i32) -> (i32, i32) {
    %c0_i32 = arith.constant 0 : i32
    %c0_i32_0 = arith.constant 0 : i32
    return %arg0, %c0_i32 : i32, i32
  }
  func.func @transform_1(%arg0: i32) -> (i32, i32) {
    %c0_i32 = arith.constant 0 : i32
    %c0_i32_0 = arith.constant 0 : i32
    %c0_i32_1 = arith.constant 0 : i32
    return %c0_i32, %c0_i32_0 : i32, i32
  }
  func.func @transform_2(%arg0: i32) -> (i32, i32) {
    %c0_i32 = arith.constant 0 : i32
    %c0_i32_0 = arith.constant 0 : i32
    %c0_i32_1 = arith.constant 0 : i32
    return %c0_i32, %c0_i32_0 : i32, i32
  }
  func.func @transform_3(%arg0: i32) -> (i32, i32) {
    %c0_i32 = arith.constant 0 : i32
    %c0_i32_0 = arith.constant 0 : i32
    %c0_i32_1 = arith.constant 0 : i32
    return %c0_i32, %c0_i32_0 : i32, i32
  }
  func.func @transform_4(%arg0: i32) -> (i32, i32) {
    %c0_i32 = arith.constant 0 : i32
    %c0_i32_0 = arith.constant 0 : i32
    %c0_i32_1 = arith.constant 0 : i32
    return %c0_i32, %c0_i32_0 : i32, i32
  }
  func.func @transform_5(%arg0: i32) -> (i32, i32) {
    %c0_i32 = arith.constant 0 : i32
    %c0_i32_0 = arith.constant 0 : i32
    %c0_i32_1 = arith.constant 0 : i32
    return %c0_i32, %c0_i32_0 : i32, i32
  }
  func.func @transform_6(%arg0: i32) -> (i32, i32) {
    %c0_i32 = arith.constant 0 : i32
    %c0_i32_0 = arith.constant 0 : i32
    %c0_i32_1 = arith.constant 0 : i32
    return %c0_i32, %c0_i32_0 : i32, i32
  }
  func.func @transform_7(%arg0: i32) -> (i32, i32) {
    %c0_i32 = arith.constant 0 : i32
    %c0_i32_0 = arith.constant 0 : i32
    %c0_i32_1 = arith.constant 0 : i32
    return %c0_i32, %c0_i32_0 : i32, i32
  }
  func.func @transform_8(%arg0: i32) -> (i32, i32) {
    %c0_i32 = arith.constant 0 : i32
    %c0_i32_0 = arith.constant 0 : i32
    %c0_i32_1 = arith.constant 0 : i32
    return %c0_i32, %c0_i32_0 : i32, i32
  }
  func.func @transform_9(%arg0: i32) -> (i32, i32) {
    %c0_i32 = arith.constant 0 : i32
    %c0_i32_0 = arith.constant 0 : i32
    return %arg0, %c0_i32 : i32, i32
  }
}

</mosaic_0001>

<llo_original>
// kernel: dqn_forward.1
$region0: #{dqn_forward.1}
  #allocation0 [shape = 'u32[]', space=smem, size = 0x4, offset = 0x4, fixed_abs, tag = 'smem constant byte address 0x4 - core index']
  #allocation1 [shape = 'u32[144,128]{1,0:T(1,128)}', space=vmem, size = 0x12000, scoped, tag = 'internal scratch']
  %s0 = inlined_call_operand.vmem [shape: f32[256,512], index: 0, kind: input, shape index: {}]
  %s1 = inlined_call_operand.hbm [shape: f32[512,384], index: 1, kind: input, shape index: {}]
  %s2 = inlined_call_operand.vmem [shape: f32[1,384], index: 2, kind: input, shape index: {}]
  %s3 = inlined_call_operand.vmem [shape: f32[384,256], index: 3, kind: input, shape index: {}]
  %s4 = inlined_call_operand.vmem [shape: f32[1,256], index: 4, kind: input, shape index: {}]
  %s5 = inlined_call_operand.vmem [shape: f32[256,128], index: 5, kind: input, shape index: {}]
  %s6 = inlined_call_operand.vmem [shape: f32[1,128], index: 6, kind: input, shape index: {}]
  %s7 = inlined_call_operand.hbm [shape: f32[128,128], index: 7, kind: input, shape index: {}]
  %s8 = inlined_call_operand.vmem [shape: f32[1,128], index: 8, kind: input, shape index: {}]
  %s9 = inlined_call_operand.vmem [shape: f32[256,128], index: 9, kind: output, shape index: {}]
  %s10 = sld [smem:[#allocation0]]
  $region54: #{dqn_forward.1} parent=0
    _
  %s12 = ssub.s32 1, %s10
  %s13 = scalar_select 0, %s12, %s10
  $region1: #{dqn_forward.1} parent=0
    #allocation2 [shape = 'u8[786432]{0}', space=vmem, size = 0xc0000, scoped, tag = 'input window, operand 1, single buffered']
    #allocation3 [shape = 's32[1]{0}', space=sflag, size = 0x4, scoped, tag = 'scoped memory for dqn_forward.1']
    #allocation4 [shape = 'u8[65536]{0}', space=vmem, size = 0x10000, scoped, tag = 'input window, operand 7, single buffered']
    #allocation5 [shape = 's32[1]{0}', space=sflag, size = 0x4, scoped, tag = 'scoped memory for dqn_forward.1']
    %14 = vsyncpa [#allocation3], 0
    %15 = vsyncpa [#allocation5], 0
    // Predicated region
    $region2: #{dqn_forward.1} parent=1 // pred_check
      _
    $region3: #{dqn_forward.1} parent=1 // pred_check_branch
      %17 = sbr.rel (0) target = $region5
    $region4: #{dqn_forward.1} parent=1 // pred_region
      _
    $region5: #{dqn_forward.1} parent=1 // pred_fallthru
      _
    // Predicated region
    $region6: #{dqn_forward.1} parent=1 // pred_check
      _
    $region7: #{dqn_forward.1} parent=1 // pred_check_branch
      %19 = sbr.rel (0) target = $region9
    $region8: #{dqn_forward.1} parent=1 // pred_region
      %s21 = ssub.s32 24576, 24576
      %22 = vsyncadd [#allocation3], %s21
      %s23 = sshll.u32 [#allocation2], 4
      %s24 = int_to_ptr.vmem [resolvable:$true] %s23
      %29 = dma.hbm_to_vmem [thread:$0]  %s1, 24576, %s24, [#allocation3], 384, 384, 24
    $region9: #{dqn_forward.1} parent=1 // pred_fallthru
      _
    // Predicated region
    $region10: #{dqn_forward.1} parent=1 // pred_check
      _
    $region11: #{dqn_forward.1} parent=1 // pred_check_branch
      %31 = sbr.rel (0) target = $region13
    $region12: #{dqn_forward.1} parent=1 // pred_region
      _
    $region13: #{dqn_forward.1} parent=1 // pred_fallthru
      _
    // Predicated region
    $region14: #{dqn_forward.1} parent=1 // pred_check
      _
    $region15: #{dqn_forward.1} parent=1 // pred_check_branch
      %33 = sbr.rel (0) target = $region17
    $region16: #{dqn_forward.1} parent=1 // pred_region
      _
    $region17: #{dqn_forward.1} parent=1 // pred_fallthru
      _
    // Predicated region
    $region18: #{dqn_forward.1} parent=1 // pred_check
      _
    $region19: #{dqn_forward.1} parent=1 // pred_check_branch
      %35 = sbr.rel (0) target = $region21
    $region20: #{dqn_forward.1} parent=1 // pred_region
      _
    $region21: #{dqn_forward.1} parent=1 // pred_fallthru
      _
    // Predicated region
    $region22: #{dqn_forward.1} parent=1 // pred_check
      _
    $region23: #{dqn_forward.1} parent=1 // pred_check_branch
      %37 = sbr.rel (0) target = $region25
    $region24: #{dqn_forward.1} parent=1 // pred_region
      _
    $region25: #{dqn_forward.1} parent=1 // pred_fallthru
      _
    // Predicated region
    $region26: #{dqn_forward.1} parent=1 // pred_check
      _
    $region27: #{dqn_forward.1} parent=1 // pred_check_branch
      %39 = sbr.rel (0) target = $region29
    $region28: #{dqn_forward.1} parent=1 // pred_region
      _
    $region29: #{dqn_forward.1} parent=1 // pred_fallthru
      _
    // Predicated region
    $region30: #{dqn_forward.1} parent=1 // pred_check
      _
    $region31: #{dqn_forward.1} parent=1 // pred_check_branch
      %41 = sbr.rel (0) target = $region33
    $region32: #{dqn_forward.1} parent=1 // pred_region
      %s43 = ssub.s32 2048, 2048
      %44 = vsyncadd [#allocation5], %s43
      %s45 = sshll.u32 [#allocation4], 4
      %s46 = int_to_ptr.vmem [resolvable:$true] %s45
      %51 = dma.hbm_to_vmem [thread:$0]  %s7, 2048, %s46, [#allocation5], 128, 128, 8
    $region33: #{dqn_forward.1} parent=1 // pred_fallthru
      _
    // Predicated region
    $region34: #{dqn_forward.1} parent=1 // pred_check
      _
    $region35: #{dqn_forward.1} parent=1 // pred_check_branch
      %53 = sbr.rel (0) target = $region37
    $region36: #{dqn_forward.1} parent=1 // pred_region
      _
    $region37: #{dqn_forward.1} parent=1 // pred_fallthru
      _
    // Predicated region
    $region38: #{dqn_forward.1} parent=1 // pred_check
      _
    $region39: #{dqn_forward.1} parent=1 // pred_check_branch
      %55 = sbr.rel (0) target = $region41
    $region40: #{dqn_forward.1} parent=1 // pred_region
      %56 = dma.done [#allocation3], 24576
    $region41: #{dqn_forward.1} parent=1 // pred_fallthru
      _
    // Predicated region
    $region42: #{dqn_forward.1} parent=1 // pred_check
      _
    $region43: #{dqn_forward.1} parent=1 // pred_check_branch
      %58 = sbr.rel (0) target = $region45
    $region44: #{dqn_forward.1} parent=1 // pred_region
      %59 = dma.done [#allocation5], 2048
    $region45: #{dqn_forward.1} parent=1 // pred_fallthru
      _
    %v60 = vld [vmem:[%s0] sm:$0xff]
    %v61 = vld [vmem:[%s0 + $0x8] sm:$0xff]
    %v62 = vld [vmem:[%s0 + $0x10] sm:$0xff]
    %v63 = vld [vmem:[%s0 + $0x18] sm:$0xff]
    %v64 = vld [vmem:[%s0 + $0x20] sm:$0xff]
    %v65 = vld [vmem:[%s0 + $0x28] sm:$0xff]
    %v66 = vld [vmem:[%s0 + $0x30] sm:$0xff]
    %v67 = vld [vmem:[%s0 + $0x38] sm:$0xff]
    %v68 = vld [vmem:[%s0 + $0x40] sm:$0xff]
    %v69 = vld [vmem:[%s0 + $0x48] sm:$0xff]
    %v70 = vld [vmem:[%s0 + $0x50] sm:$0xff]
    %v71 = vld [vmem:[%s0 + $0x58] sm:$0xff]
    %v72 = vld [vmem:[%s0 + $0x60] sm:$0xff]
    %v73 = vld [vmem:[%s0 + $0x68] sm:$0xff]
    %v74 = vld [vmem:[%s0 + $0x70] sm:$0xff]
    %v75 = vld [vmem:[%s0 + $0x78] sm:$0xff]
    %v76 = vld [vmem:[%s0 + $0x80] sm:$0xff]
    %v77 = vld [vmem:[%s0 + $0x88] sm:$0xff]
    %v78 = vld [vmem:[%s0 + $0x90] sm:$0xff]
    %v79 = vld [vmem:[%s0 + $0x98] sm:$0xff]
    %v80 = vld [vmem:[%s0 + $0xa0] sm:$0xff]
    %v81 = vld [vmem:[%s0 + $0xa8] sm:$0xff]
    %v82 = vld [vmem:[%s0 + $0xb0] sm:$0xff]
    %v83 = vld [vmem:[%s0 + $0xb8] sm:$0xff]
    %v84 = vld [vmem:[%s0 + $0xc0] sm:$0xff]
    %v85 = vld [vmem:[%s0 + $0xc8] sm:$0xff]
    %v86 = vld [vmem:[%s0 + $0xd0] sm:$0xff]
    %v87 = vld [vmem:[%s0 + $0xd8] sm:$0xff]
    %v88 = vld [vmem:[%s0 + $0xe0] sm:$0xff]
    %v89 = vld [vmem:[%s0 + $0xe8] sm:$0xff]
    %v90 = vld [vmem:[%s0 + $0xf0] sm:$0xff]
    %v91 = vld [vmem:[%s0 + $0xf8] sm:$0xff]
    %v92 = vld [vmem:[%s0 + $0x100] sm:$0xff]
    %v93 = vld [vmem:[%s0 + $0x108] sm:$0xff]
    %v94 = vld [vmem:[%s0 + $0x110] sm:$0xff]
    %v95 = vld [vmem:[%s0 + $0x118] sm:$0xff]
    %v96 = vld [vmem:[%s0 + $0x120] sm:$0xff]
    %v97 = vld [vmem:[%s0 + $0x128] sm:$0xff]
    %v98 = vld [vmem:[%s0 + $0x130] sm:$0xff]
    %v99 = vld [vmem:[%s0 + $0x138] sm:$0xff]
    %v100 = vld [vmem:[%s0 + $0x140] sm:$0xff]
    %v101 = vld [vmem:[%s0 + $0x148] sm:$0xff]
    %v102 = vld [vmem:[%s0 + $0x150] sm:$0xff]
    %v103 = vld [vmem:[%s0 + $0x158] sm:$0xff]
    %v104 = vld [vmem:[%s0 + $0x160] sm:$0xff]
    %v105 = vld [vmem:[%s0 + $0x168] sm:$0xff]
    %v106 = vld [vmem:[%s0 + $0x170] sm:$0xff]
    %v107 = vld [vmem:[%s0 + $0x178] sm:$0xff]
    %v108 = vld [vmem:[%s0 + $0x180] sm:$0xff]
    %v109 = vld [vmem:[%s0 + $0x188] sm:$0xff]
    %v110 = vld [vmem:[%s0 + $0x190] sm:$0xff]
    %v111 = vld [vmem:[%s0 + $0x198] sm:$0xff]
    %v112 = vld [vmem:[%s0 + $0x1a0] sm:$0xff]
    %v113 = vld [vmem:[%s0 + $0x1a8] sm:$0xff]
    %v114 = vld [vmem:[%s0 + $0x1b0] sm:$0xff]
    %v115 = vld [vmem:[%s0 + $0x1b8] sm:$0xff]
    %v116 = vld [vmem:[%s0 + $0x1c0] sm:$0xff]
    %v117 = vld [vmem:[%s0 + $0x1c8] sm:$0xff]
    %v118 = vld [vmem:[%s0 + $0x1d0] sm:$0xff]
    %v119 = vld [vmem:[%s0 + $0x1d8] sm:$0xff]
    %v120 = vld [vmem:[%s0 + $0x1e0] sm:$0xff]
    %v121 = vld [vmem:[%s0 + $0x1e8] sm:$0xff]
    %v122 = vld [vmem:[%s0 + $0x1f0] sm:$0xff]
    %v123 = vld [vmem:[%s0 + $0x1f8] sm:$0xff]
    %v124 = vld [vmem:[%s0 + $0x200] sm:$0xff]
    %v125 = vld [vmem:[%s0 + $0x208] sm:$0xff]
    %v126 = vld [vmem:[%s0 + $0x210] sm:$0xff]
    %v127 = vld [vmem:[%s0 + $0x218] sm:$0xff]
    %v128 = vld [vmem:[%s0 + $0x220] sm:$0xff]
    %v129 = vld [vmem:[%s0 + $0x228] sm:$0xff]
    %v130 = vld [vmem:[%s0 + $0x230] sm:$0xff]
    %v131 = vld [vmem:[%s0 + $0x238] sm:$0xff]
    %v132 = vld [vmem:[%s0 + $0x240] sm:$0xff]
    %v133 = vld [vmem:[%s0 + $0x248] sm:$0xff]
    %v134 = vld [vmem:[%s0 + $0x250] sm:$0xff]
    %v135 = vld [vmem:[%s0 + $0x258] sm:$0xff]
    %v136 = vld [vmem:[%s0 + $0x260] sm:$0xff]
    %v137 = vld [vmem:[%s0 + $0x268] sm:$0xff]
    %v138 = vld [vmem:[%s0 + $0x270] sm:$0xff]
    %v139 = vld [vmem:[%s0 + $0x278] sm:$0xff]
    %v140 = vld [vmem:[%s0 + $0x280] sm:$0xff]
    %v141 = vld [vmem:[%s0 + $0x288] sm:$0xff]
    %v142 = vld [vmem:[%s0 + $0x290] sm:$0xff]
    %v143 = vld [vmem:[%s0 + $0x298] sm:$0xff]
    %v144 = vld [vmem:[%s0 + $0x2a0] sm:$0xff]
    %v145 = vld [vmem:[%s0 + $0x2a8] sm:$0xff]
    %v146 = vld [vmem:[%s0 + $0x2b0] sm:$0xff]
    %v147 = vld [vmem:[%s0 + $0x2b8] sm:$0xff]
    %v148 = vld [vmem:[%s0 + $0x2c0] sm:$0xff]
    %v149 = vld [vmem:[%s0 + $0x2c8] sm:$0xff]
    %v150 = vld [vmem:[%s0 + $0x2d0] sm:$0xff]
    %v151 = vld [vmem:[%s0 + $0x2d8] sm:$0xff]
    %v152 = vld [vmem:[%s0 + $0x2e0] sm:$0xff]
    %v153 = vld [vmem:[%s0 + $0x2e8] sm:$0xff]
    %v154 = vld [vmem:[%s0 + $0x2f0] sm:$0xff]
    %v155 = vld [vmem:[%s0 + $0x2f8] sm:$0xff]
    %v156 = vld [vmem:[%s0 + $0x300] sm:$0xff]
    %v157 = vld [vmem:[%s0 + $0x308] sm:$0xff]
    %v158 = vld [vmem:[%s0 + $0x310] sm:$0xff]
    %v159 = vld [vmem:[%s0 + $0x318] sm:$0xff]
    %v160 = vld [vmem:[%s0 + $0x320] sm:$0xff]
    %v161 = vld [vmem:[%s0 + $0x328] sm:$0xff]
    %v162 = vld [vmem:[%s0 + $0x330] sm:$0xff]
    %v163 = vld [vmem:[%s0 + $0x338] sm:$0xff]
    %v164 = vld [vmem:[%s0 + $0x340] sm:$0xff]
    %v165 = vld [vmem:[%s0 + $0x348] sm:$0xff]
    %v166 = vld [vmem:[%s0 + $0x350] sm:$0xff]
    %v167 = vld [vmem:[%s0 + $0x358] sm:$0xff]
    %v168 = vld [vmem:[%s0 + $0x360] sm:$0xff]
    %v169 = vld [vmem:[%s0 + $0x368] sm:$0xff]
    %v170 = vld [vmem:[%s0 + $0x370] sm:$0xff]
    %v171 = vld [vmem:[%s0 + $0x378] sm:$0xff]
    %v172 = vld [vmem:[%s0 + $0x380] sm:$0xff]
    %v173 = vld [vmem:[%s0 + $0x388] sm:$0xff]
    %v174 = vld [vmem:[%s0 + $0x390] sm:$0xff]
    %v175 = vld [vmem:[%s0 + $0x398] sm:$0xff]
    %v176 = vld [vmem:[%s0 + $0x3a0] sm:$0xff]
    %v177 = vld [vmem:[%s0 + $0x3a8] sm:$0xff]
    %v178 = vld [vmem:[%s0 + $0x3b0] sm:$0xff]
    %v179 = vld [vmem:[%s0 + $0x3b8] sm:$0xff]
    %v180 = vld [vmem:[%s0 + $0x3c0] sm:$0xff]
    %v181 = vld [vmem:[%s0 + $0x3c8] sm:$0xff]
    %v182 = vld [vmem:[%s0 + $0x3d0] sm:$0xff]
    %v183 = vld [vmem:[%s0 + $0x3d8] sm:$0xff]
    %v184 = vld [vmem:[%s0 + $0x3e0] sm:$0xff]
    %v185 = vld [vmem:[%s0 + $0x3e8] sm:$0xff]
    %v186 = vld [vmem:[%s0 + $0x3f0] sm:$0xff]
    %v187 = vld [vmem:[%s0 + $0x3f8] sm:$0xff]
    %v188 = vld [vmem:[#allocation2] sm:$0xff]
    %v189 = vld [vmem:[#allocation2 + $0x8] sm:$0xff]
    %v190 = vld [vmem:[#allocation2 + $0x10] sm:$0xff]
    %v191 = vld [vmem:[#allocation2 + $0x18] sm:$0xff]
    %v192 = vld [vmem:[#allocation2 + $0x20] sm:$0xff]
    %v193 = vld [vmem:[#allocation2 + $0x28] sm:$0xff]
    %v194 = vld [vmem:[#allocation2 + $0x30] sm:$0xff]
    %v195 = vld [vmem:[#allocation2 + $0x38] sm:$0xff]
    %v196 = vld [vmem:[#allocation2 + $0x40] sm:$0xff]
    %v197 = vld [vmem:[#allocation2 + $0x48] sm:$0xff]
    %v198 = vld [vmem:[#allocation2 + $0x50] sm:$0xff]
    %v199 = vld [vmem:[#allocation2 + $0x58] sm:$0xff]
    %v200 = vld [vmem:[#allocation2 + $0x60] sm:$0xff]
    %v201 = vld [vmem:[#allocation2 + $0x68] sm:$0xff]
    %v202 = vld [vmem:[#allocation2 + $0x70] sm:$0xff]
    %v203 = vld [vmem:[#allocation2 + $0x78] sm:$0xff]
    %v204 = vld [vmem:[#allocation2 + $0x80] sm:$0xff]
    %v205 = vld [vmem:[#allocation2 + $0x88] sm:$0xff]
    %v206 = vld [vmem:[#allocation2 + $0x90] sm:$0xff]
    %v207 = vld [vmem:[#allocation2 + $0x98] sm:$0xff]
    %v208 = vld [vmem:[#allocation2 + $0xa0] sm:$0xff]
    %v209 = vld [vmem:[#allocation2 + $0xa8] sm:$0xff]
    %v210 = vld [vmem:[#allocation2 + $0xb0] sm:$0xff]
    %v211 = vld [vmem:[#allocation2 + $0xb8] sm:$0xff]
    %v212 = vld [vmem:[#allocation2 + $0xc0] sm:$0xff]
    %v213 = vld [vmem:[#allocation2 + $0xc8] sm:$0xff]
    %v214 = vld [vmem:[#allocation2 + $0xd0] sm:$0xff]
    %v215 = vld [vmem:[#allocation2 + $0xd8] sm:$0xff]
    %v216 = vld [vmem:[#allocation2 + $0xe0] sm:$0xff]
    %v217 = vld [vmem:[#allocation2 + $0xe8] sm:$0xff]
    %v218 = vld [vmem:[#allocation2 + $0xf0] sm:$0xff]
    %v219 = vld [vmem:[#allocation2 + $0xf8] sm:$0xff]
    %v220 = vld [vmem:[#allocation2 + $0x100] sm:$0xff]
    %v221 = vld [vmem:[#allocation2 + $0x108] sm:$0xff]
    %v222 = vld [vmem:[#allocation2 + $0x110] sm:$0xff]
    %v223 = vld [vmem:[#allocation2 + $0x118] sm:$0xff]
    %v224 = vld [vmem:[#allocation2 + $0x120] sm:$0xff]
    %v225 = vld [vmem:[#allocation2 + $0x128] sm:$0xff]
    %v226 = vld [vmem:[#allocation2 + $0x130] sm:$0xff]
    %v227 = vld [vmem:[#allocation2 + $0x138] sm:$0xff]
    %v228 = vld [vmem:[#allocation2 + $0x140] sm:$0xff]
    %v229 = vld [vmem:[#allocation2 + $0x148] sm:$0xff]
    %v230 = vld [vmem:[#allocation2 + $0x150] sm:$0xff]
    %v231 = vld [vmem:[#allocation2 + $0x158] sm:$0xff]
    %v232 = vld [vmem:[#allocation2 + $0x160] sm:$0xff]
    %v233 = vld [vmem:[#allocation2 + $0x168] sm:$0xff]
    %v234 = vld [vmem:[#allocation2 + $0x170] sm:$0xff]
    %v235 = vld [vmem:[#allocation2 + $0x178] sm:$0xff]
    %v236 = vld [vmem:[#allocation2 + $0x180] sm:$0xff]
    %v237 = vld [vmem:[#allocation2 + $0x188] sm:$0xff]
    %v238 = vld [vmem:[#allocation2 + $0x190] sm:$0xff]
    %v239 = vld [vmem:[#allocation2 + $0x198] sm:$0xff]
    %v240 = vld [vmem:[#allocation2 + $0x1a0] sm:$0xff]
    %v241 = vld [vmem:[#allocation2 + $0x1a8] sm:$0xff]
    %v242 = vld [vmem:[#allocation2 + $0x1b0] sm:$0xff]
    %v243 = vld [vmem:[#allocation2 + $0x1b8] sm:$0xff]
    %v244 = vld [vmem:[#allocation2 + $0x1c0] sm:$0xff]
    %v245 = vld [vmem:[#allocation2 + $0x1c8] sm:$0xff]
    %v246 = vld [vmem:[#allocation2 + $0x1d0] sm:$0xff]
    %v247 = vld [vmem:[#allocation2 + $0x1d8] sm:$0xff]
    %v248 = vld [vmem:[#allocation2 + $0x1e0] sm:$0xff]
    %v249 = vld [vmem:[#allocation2 + $0x1e8] sm:$0xff]
    %v250 = vld [vmem:[#allocation2 + $0x1f0] sm:$0xff]
    %v251 = vld [vmem:[#allocation2 + $0x1f8] sm:$0xff]
    %v252 = vld [vmem:[#allocation2 + $0x200] sm:$0xff]
    %v253 = vld [vmem:[#allocation2 + $0x208] sm:$0xff]
    %v254 = vld [vmem:[#allocation2 + $0x210] sm:$0xff]
    %v255 = vld [vmem:[#allocation2 + $0x218] sm:$0xff]
    %v256 = vld [vmem:[#allocation2 + $0x220] sm:$0xff]
    %v257 = vld [vmem:[#allocation2 + $0x228] sm:$0xff]
    %v258 = vld [vmem:[#allocation2 + $0x230] sm:$0xff]
    %v259 = vld [vmem:[#allocation2 + $0x238] sm:$0xff]
    %v260 = vld [vmem:[#allocation2 + $0x240] sm:$0xff]
    %v261 = vld [vmem:[#allocation2 + $0x248] sm:$0xff]
    %v262 = vld [vmem:[#allocation2 + $0x250] sm:$0xff]
    %v263 = vld [vmem:[#allocation2 + $0x258] sm:$0xff]
    %v264 = vld [vmem:[#allocation2 + $0x260] sm:$0xff]
    %v265 = vld [vmem:[#allocation2 + $0x268] sm:$0xff]
    %v266 = vld [vmem:[#allocation2 + $0x270] sm:$0xff]
    %v267 = vld [vmem:[#allocation2 + $0x278] sm:$0xff]
    %v268 = vld [vmem:[#allocation2 + $0x280] sm:$0xff]
    %v269 = vld [vmem:[#allocation2 + $0x288] sm:$0xff]
    %v270 = vld [vmem:[#allocation2 + $0x290] sm:$0xff]
    %v271 = vld [vmem:[#allocation2 + $0x298] sm:$0xff]
    %v272 = vld [vmem:[#allocation2 + $0x2a0] sm:$0xff]
    %v273 = vld [vmem:[#allocation2 + $0x2a8] sm:$0xff]
    %v274 = vld [vmem:[#allocation2 + $0x2b0] sm:$0xff]
    %v275 = vld [vmem:[#allocation2 + $0x2b8] sm:$0xff]
    %v276 = vld [vmem:[#allocation2 + $0x2c0] sm:$0xff]
    %v277 = vld [vmem:[#allocation2 + $0x2c8] sm:$0xff]
    %v278 = vld [vmem:[#allocation2 + $0x2d0] sm:$0xff]
    %v279 = vld [vmem:[#allocation2 + $0x2d8] sm:$0xff]
    %v280 = vld [vmem:[#allocation2 + $0x2e0] sm:$0xff]
    %v281 = vld [vmem:[#allocation2 + $0x2e8] sm:$0xff]
    %v282 = vld [vmem:[#allocation2 + $0x2f0] sm:$0xff]
    %v283 = vld [vmem:[#allocation2 + $0x2f8] sm:$0xff]
    %v284 = vld [vmem:[#allocation2 + $0x300] sm:$0xff]
    %v285 = vld [vmem:[#allocation2 + $0x308] sm:$0xff]
    %v286 = vld [vmem:[#allocation2 + $0x310] sm:$0xff]
    %v287 = vld [vmem:[#allocation2 + $0x318] sm:$0xff]
    %v288 = vld [vmem:[#allocation2 + $0x320] sm:$0xff]
    %v289 = vld [vmem:[#allocation2 + $0x328] sm:$0xff]
    %v290 = vld [vmem:[#allocation2 + $0x330] sm:$0xff]
    %v291 = vld [vmem:[#allocation2 + $0x338] sm:$0xff]
    %v292 = vld [vmem:[#allocation2 + $0x340] sm:$0xff]
    %v293 = vld [vmem:[#allocation2 + $0x348] sm:$0xff]
    %v294 = vld [vmem:[#allocation2 + $0x350] sm:$0xff]
    %v295 = vld [vmem:[#allocation2 + $0x358] sm:$0xff]
    %v296 = vld [vmem:[#allocation2 + $0x360] sm:$0xff]
    %v297 = vld [vmem:[#allocation2 + $0x368] sm:$0xff]
    %v298 = vld [vmem:[#allocation2 + $0x370] sm:$0xff]
    %v299 = vld [vmem:[#allocation2 + $0x378] sm:$0xff]
    %v300 = vld [vmem:[#allocation2 + $0x380] sm:$0xff]
    %v301 = vld [vmem:[#allocation2 + $0x388] sm:$0xff]
    %v302 = vld [vmem:[#allocation2 + $0x390] sm:$0xff]
    %v303 = vld [vmem:[#allocation2 + $0x398] sm:$0xff]
    %v304 = vld [vmem:[#allocation2 + $0x3a0] sm:$0xff]
    %v305 = vld [vmem:[#allocation2 + $0x3a8] sm:$0xff]
    %v306 = vld [vmem:[#allocation2 + $0x3b0] sm:$0xff]
    %v307 = vld [vmem:[#allocation2 + $0x3b8] sm:$0xff]
    %v308 = vld [vmem:[#allocation2 + $0x3c0] sm:$0xff]
    %v309 = vld [vmem:[#allocation2 + $0x3c8] sm:$0xff]
    %v310 = vld [vmem:[#allocation2 + $0x3d0] sm:$0xff]
    %v311 = vld [vmem:[#allocation2 + $0x3d8] sm:$0xff]
    %v312 = vld [vmem:[#allocation2 + $0x3e0] sm:$0xff]
    %v313 = vld [vmem:[#allocation2 + $0x3e8] sm:$0xff]
    %v314 = vld [vmem:[#allocation2 + $0x3f0] sm:$0xff]
    %v315 = vld [vmem:[#allocation2 + $0x3f8] sm:$0xff]
    %v316 = vld [vmem:[#allocation2 + $0x400] sm:$0xff]
    %v317 = vld [vmem:[#allocation2 + $0x408] sm:$0xff]
    %v318 = vld [vmem:[#allocation2 + $0x410] sm:$0xff]
    %v319 = vld [vmem:[#allocation2 + $0x418] sm:$0xff]
    %v320 = vld [vmem:[#allocation2 + $0x420] sm:$0xff]
    %v321 = vld [vmem:[#allocation2 + $0x428] sm:$0xff]
    %v322 = vld [vmem:[#allocation2 + $0x430] sm:$0xff]
    %v323 = vld [vmem:[#allocation2 + $0x438] sm:$0xff]
    %v324 = vld [vmem:[#allocation2 + $0x440] sm:$0xff]
    %v325 = vld [vmem:[#allocation2 + $0x448] sm:$0xff]
    %v326 = vld [vmem:[#allocation2 + $0x450] sm:$0xff]
    %v327 = vld [vmem:[#allocation2 + $0x458] sm:$0xff]
    %v328 = vld [vmem:[#allocation2 + $0x460] sm:$0xff]
    %v329 = vld [vmem:[#allocation2 + $0x468] sm:$0xff]
    %v330 = vld [vmem:[#allocation2 + $0x470] sm:$0xff]
    %v331 = vld [vmem:[#allocation2 + $0x478] sm:$0xff]
    %v332 = vld [vmem:[#allocation2 + $0x480] sm:$0xff]
    %v333 = vld [vmem:[#allocation2 + $0x488] sm:$0xff]
    %v334 = vld [vmem:[#allocation2 + $0x490] sm:$0xff]
    %v335 = vld [vmem:[#allocation2 + $0x498] sm:$0xff]
    %v336 = vld [vmem:[#allocation2 + $0x4a0] sm:$0xff]
    %v337 = vld [vmem:[#allocation2 + $0x4a8] sm:$0xff]
    %v338 = vld [vmem:[#allocation2 + $0x4b0] sm:$0xff]
    %v339 = vld [vmem:[#allocation2 + $0x4b8] sm:$0xff]
    %v340 = vld [vmem:[#allocation2 + $0x4c0] sm:$0xff]
    %v341 = vld [vmem:[#allocation2 + $0x4c8] sm:$0xff]
    %v342 = vld [vmem:[#allocation2 + $0x4d0] sm:$0xff]
    %v343 = vld [vmem:[#allocation2 + $0x4d8] sm:$0xff]
    %v344 = vld [vmem:[#allocation2 + $0x4e0] sm:$0xff]
    %v345 = vld [vmem:[#allocation2 + $0x4e8] sm:$0xff]
    %v346 = vld [vmem:[#allocation2 + $0x4f0] sm:$0xff]
    %v347 = vld [vmem:[#allocation2 + $0x4f8] sm:$0xff]
    %v348 = vld [vmem:[#allocation2 + $0x500] sm:$0xff]
    %v349 = vld [vmem:[#allocation2 + $0x508] sm:$0xff]
    %v350 = vld [vmem:[#allocation2 + $0x510] sm:$0xff]
    %v351 = vld [vmem:[#allocation2 + $0x518] sm:$0xff]
    %v352 = vld [vmem:[#allocation2 + $0x520] sm:$0xff]
    %v353 = vld [vmem:[#allocation2 + $0x528] sm:$0xff]
    %v354 = vld [vmem:[#allocation2 + $0x530] sm:$0xff]
    %v355 = vld [vmem:[#allocation2 + $0x538] sm:$0xff]
    %v356 = vld [vmem:[#allocation2 + $0x540] sm:$0xff]
    %v357 = vld [vmem:[#allocation2 + $0x548] sm:$0xff]
    %v358 = vld [vmem:[#allocation2 + $0x550] sm:$0xff]
    %v359 = vld [vmem:[#allocation2 + $0x558] sm:$0xff]
    %v360 = vld [vmem:[#allocation2 + $0x560] sm:$0xff]
    %v361 = vld [vmem:[#allocation2 + $0x568] sm:$0xff]
    %v362 = vld [vmem:[#allocation2 + $0x570] sm:$0xff]
    %v363 = vld [vmem:[#allocation2 + $0x578] sm:$0xff]
    %v364 = vld [vmem:[#allocation2 + $0x580] sm:$0xff]
    %v365 = vld [vmem:[#allocation2 + $0x588] sm:$0xff]
    %v366 = vld [vmem:[#allocation2 + $0x590] sm:$0xff]
    %v367 = vld [vmem:[#allocation2 + $0x598] sm:$0xff]
    %v368 = vld [vmem:[#allocation2 + $0x5a0] sm:$0xff]
    %v369 = vld [vmem:[#allocation2 + $0x5a8] sm:$0xff]
    %v370 = vld [vmem:[#allocation2 + $0x5b0] sm:$0xff]
    %v371 = vld [vmem:[#allocation2 + $0x5b8] sm:$0xff]
    %v372 = vld [vmem:[#allocation2 + $0x5c0] sm:$0xff]
    %v373 = vld [vmem:[#allocation2 + $0x5c8] sm:$0xff]
    %v374 = vld [vmem:[#allocation2 + $0x5d0] sm:$0xff]
    %v375 = vld [vmem:[#allocation2 + $0x5d8] sm:$0xff]
    %v376 = vld [vmem:[#allocation2 + $0x5e0] sm:$0xff]
    %v377 = vld [vmem:[#allocation2 + $0x5e8] sm:$0xff]
    %v378 = vld [vmem:[#allocation2 + $0x5f0] sm:$0xff]
    %v379 = vld [vmem:[#allocation2 + $0x5f8] sm:$0xff]
    %v380 = vld [vmem:[%s2] sm:$0x7]
    %v382 = vlaneseq
    %v383 = vshrl.u32 %v382, 7
    %v384 = vsub.s32 0, %v383
    %v385 = vrot.slane %v380, %v384
    %v386 = vlaneseq
    %v387 = vshrl.u32 %v386, 7
    %v388 = vsub.s32 1, %v387
    %v389 = vrot.slane %v380, %v388
    %v390 = vlaneseq
    %v391 = vshrl.u32 %v390, 7
    %v392 = vsub.s32 2, %v391
    %v393 = vrot.slane %v380, %v392
    %397 = vmatprep.subr.mxu0 %v189
    %398 = vmatpush1.msra.mxu0 %v188
    %399 = vmatprep.subr.mxu0 %v192
    %400 = vmatpush1.msra.mxu0 %v191
    %401 = vmatprep.subr.mxu0 %v195
    %402 = vmatpush1.msra.mxu0 %v194
    %403 = vmatprep.subr.mxu0 %v198
    %404 = vmatpush1.msra.mxu0 %v197
    %405 = vmatprep.subr.mxu0 %v201
    %406 = vmatpush1.msra.mxu0 %v200
    %407 = vmatprep.subr.mxu0 %v204
    %408 = vmatpush1.msra.mxu0 %v203
    %409 = vmatprep.subr.mxu0 %v207
    %410 = vmatpush1.msra.mxu0 %v206
    %411 = vmatprep.subr.mxu0 %v210
    %412 = vmatpush1.msra.mxu0 %v209
    %413 = vmatprep.subr.mxu0 %v213
    %414 = vmatpush1.msra.mxu0 %v212
    %415 = vmatprep.subr.mxu0 %v216
    %416 = vmatpush1.msra.mxu0 %v215
    %417 = vmatprep.subr.mxu0 %v219
    %418 = vmatpush1.msra.mxu0 %v218
    %419 = vmatprep.subr.mxu0 %v222
    %420 = vmatpush1.msra.mxu0 %v221
    %421 = vmatprep.subr.mxu0 %v225
    %422 = vmatpush1.msra.mxu0 %v224
    %423 = vmatprep.subr.mxu0 %v228
    %424 = vmatpush1.msra.mxu0 %v227
    %425 = vmatprep.subr.mxu0 %v231
    %426 = vmatpush1.msra.mxu0 %v230
    %427 = vmatprep.subr.mxu0 %v234
    %428 = vmatpush1.msra.mxu0 %v233
    %429 = vmatprep.subr.mxu0 %v237
    %430 = vmatpush1.msra.mxu0 %v236
    %431 = vmatprep.subr.mxu0 %v240
    %432 = vmatpush1.msra.mxu0 %v239
    %433 = vmatprep.subr.mxu0 %v243
    %434 = vmatpush1.msra.mxu0 %v242
    %435 = vmatprep.subr.mxu0 %v246
    %436 = vmatpush1.msra.mxu0 %v245
    %437 = vmatprep.subr.mxu0 %v249
    %438 = vmatpush1.msra.mxu0 %v248
    %439 = vmatprep.subr.mxu0 %v252
    %440 = vmatpush1.msra.mxu0 %v251
    %441 = vmatprep.subr.mxu0 %v255
    %442 = vmatpush1.msra.mxu0 %v254
    %443 = vmatprep.subr.mxu0 %v258
    %444 = vmatpush1.msra.mxu0 %v257
    %445 = vmatprep.subr.mxu0 %v261
    %446 = vmatpush1.msra.mxu0 %v260
    %447 = vmatprep.subr.mxu0 %v264
    %448 = vmatpush1.msra.mxu0 %v263
    %449 = vmatprep.subr.mxu0 %v267
    %450 = vmatpush1.msra.mxu0 %v266
    %451 = vmatprep.subr.mxu0 %v270
    %452 = vmatpush1.msra.mxu0 %v269
    %453 = vmatprep.subr.mxu0 %v273
    %454 = vmatpush1.msra.mxu0 %v272
    %455 = vmatprep.subr.mxu0 %v276
    %456 = vmatpush1.msra.mxu0 %v275
    %457 = vmatprep.subr.mxu0 %v279
    %458 = vmatpush1.msra.mxu0 %v278
    %459 = vmatprep.subr.mxu0 %v282
    %460 = vmatpush1.msra.mxu0 %v281
    %461 = vmatprep.mubr.f32.mxu0 %v61
    %462 = vmatmul.mubr.f32.gmra.mrb[0].mxu0 %v60
    %v463 = vpop.f32.mrb[0].mxu0
    %v464 = vadd.f32 %v385, %v463
    %v465 = vpop.f32.mrb[0].mxu0
    %v466 = vadd.f32 %v389, %v465
    %467 = vmatprep.mubr.f32.mxu0 %v65
    %468 = vmatmul.mubr.f32.gmra.mrb[0].mxu0 %v64
    %v469 = vpop.f32.mrb[0].mxu0
    %v470 = vadd.f32 %v385, %v469
    %v471 = vpop.f32.mrb[0].mxu0
    %v472 = vadd.f32 %v389, %v471
    %473 = vmatprep.mubr.f32.mxu0 %v69
    %474 = vmatmul.mubr.f32.gmra.mrb[0].mxu0 %v68
    %v475 = vpop.f32.mrb[0].mxu0
    %v476 = vadd.f32 %v385, %v475
    %v477 = vpop.f32.mrb[0].mxu0
    %v478 = vadd.f32 %v389, %v477
    %479 = vmatprep.mubr.f32.mxu0 %v73
    %480 = vmatmul.mubr.f32.gmra.mrb[0].mxu0 %v72
    %v481 = vpop.f32.mrb[0].mxu0
    %v482 = vadd.f32 %v385, %v481
    %v483 = vpop.f32.mrb[0].mxu0
    %v484 = vadd.f32 %v389, %v483
    %485 = vmatprep.mubr.f32.mxu0 %v77
    %486 = vmatmul.mubr.f32.gmra.mrb[0].mxu0 %v76
    %v487 = vpop.f32.mrb[0].mxu0
    %v488 = vadd.f32 %v385, %v487
    %v489 = vpop.f32.mrb[0].mxu0
    %v490 = vadd.f32 %v389, %v489
    %491 = vmatprep.mubr.f32.mxu0 %v81
    %492 = vmatmul.mubr.f32.gmra.mrb[0].mxu0 %v80
    %v493 = vpop.f32.mrb[0].mxu0
    %v494 = vadd.f32 %v385, %v493
    %v495 = vpop.f32.mrb[0].mxu0
    %v496 = vadd.f32 %v389, %v495
    %497 = vmatprep.mubr.f32.mxu0 %v85
    %498 = vmatmul.mubr.f32.gmra.mrb[0].mxu0 %v84
    %v499 = vpop.f32.mrb[0].mxu0
    %v500 = vadd.f32 %v385, %v499
    %v501 = vpop.f32.mrb[0].mxu0
    %v502 = vadd.f32 %v389, %v501
    %503 = vmatprep.mubr.f32.mxu0 %v89
    %504 = vmatmul.mubr.f32.gmra.mrb[0].mxu0 %v88
    %v505 = vpop.f32.mrb[0].mxu0
    %v506 = vadd.f32 %v385, %v505
    %v507 = vpop.f32.mrb[0].mxu0
    %v508 = vadd.f32 %v389, %v507
    %509 = vmatprep.mubr.f32.mxu0 %v93
    %510 = vmatmul.mubr.f32.gmra.mrb[0].mxu0 %v92
    %v511 = vpop.f32.mrb[0].mxu0
    %v512 = vadd.f32 %v385, %v511
    %v513 = vpop.f32.mrb[0].mxu0
    %v514 = vadd.f32 %v389, %v513
    %515 = vmatprep.mubr.f32.mxu0 %v97
    %516 = vmatmul.mubr.f32.gmra.mrb[0].mxu0 %v96
    %v517 = vpop.f32.mrb[0].mxu0
    %v518 = vadd.f32 %v385, %v517
    %v519 = vpop.f32.mrb[0].mxu0
    %v520 = vadd.f32 %v389, %v519
    %521 = vmatprep.mubr.f32.mxu0 %v101
    %522 = vmatmul.mubr.f32.gmra.mrb[0].mxu0 %v100
    %v523 = vpop.f32.mrb[0].mxu0
    %v524 = vadd.f32 %v385, %v523
    %v525 = vpop.f32.mrb[0].mxu0
    %v526 = vadd.f32 %v389, %v525
    %527 = vmatprep.mubr.f32.mxu0 %v105
    %528 = vmatmul.mubr.f32.gmra.mrb[0].mxu0 %v104
    %v529 = vpop.f32.mrb[0].mxu0
    %v530 = vadd.f32 %v385, %v529
    %v531 = vpop.f32.mrb[0].mxu0
    %v532 = vadd.f32 %v389, %v531
    %533 = vmatprep.mubr.f32.mxu0 %v109
    %534 = vmatmul.mubr.f32.gmra.mrb[0].mxu0 %v108
    %v535 = vpop.f32.mrb[0].mxu0
    %v536 = vadd.f32 %v385, %v535
    %v537 = vpop.f32.mrb[0].mxu0
    %v538 = vadd.f32 %v389, %v537
    %539 = vmatprep.mubr.f32.mxu0 %v113
    %540 = vmatmul.mubr.f32.gmra.mrb[0].mxu0 %v112
    %v541 = vpop.f32.mrb[0].mxu0
    %v542 = vadd.f32 %v385, %v541
    %v543 = vpop.f32.mrb[0].mxu0
    %v544 = vadd.f32 %v389, %v543
    %545 = vmatprep.mubr.f32.mxu0 %v117
    %546 = vmatmul.mubr.f32.gmra.mrb[0].mxu0 %v116
    %v547 = vpop.f32.mrb[0].mxu0
    %v548 = vadd.f32 %v385, %v547
    %v549 = vpop.f32.mrb[0].mxu0
    %v550 = vadd.f32 %v389, %v549
    %551 = vmatprep.mubr.f32.mxu0 %v121
    %552 = vmatmul.mubr.f32.gmra.mrb[0].mxu0 %v120
    %v553 = vpop.f32.mrb[0].mxu0
    %v554 = vadd.f32 %v385, %v553
    %v555 = vpop.f32.mrb[0].mxu0
    %v556 = vadd.f32 %v389, %v555
    %557 = vmatprep.mubr.f32.mxu0 %v125
    %558 = vmatmul.mubr.f32.gmra.mrb[0].mxu0 %v124
    %v559 = vpop.f32.mrb[0].mxu0
    %v560 = vadd.f32 %v385, %v559
    %v561 = vpop.f32.mrb[0].mxu0
    %v562 = vadd.f32 %v389, %v561
    %563 = vmatprep.mubr.f32.mxu0 %v129
    %564 = vmatmul.mubr.f32.gmra.mrb[0].mxu0 %v128
    %v565 = vpop.f32.mrb[0].mxu0
    %v566 = vadd.f32 %v385, %v565
    %v567 = vpop.f32.mrb[0].mxu0
    %v568 = vadd.f32 %v389, %v567
    %569 = vmatprep.mubr.f32.mxu0 %v133
    %570 = vmatmul.mubr.f32.gmra.mrb[0].mxu0 %v132
    %v571 = vpop.f32.mrb[0].mxu0
    %v572 = vadd.f32 %v385, %v571
    %v573 = vpop.f32.mrb[0].mxu0
    %v574 = vadd.f32 %v389, %v573
    %575 = vmatprep.mubr.f32.mxu0 %v137
    %576 = vmatmul.mubr.f32.gmra.mrb[0].mxu0 %v136
    %v577 = vpop.f32.mrb[0].mxu0
    %v578 = vadd.f32 %v385, %v577
    %v579 = vpop.f32.mrb[0].mxu0
    %v580 = vadd.f32 %v389, %v579
    %581 = vmatprep.mubr.f32.mxu0 %v141
    %582 = vmatmul.mubr.f32.gmra.mrb[0].mxu0 %v140
    %v583 = vpop.f32.mrb[0].mxu0
    %v584 = vadd.f32 %v385, %v583
    %v585 = vpop.f32.mrb[0].mxu0
    %v586 = vadd.f32 %v389, %v585
    %587 = vmatprep.mubr.f32.mxu0 %v145
    %588 = vmatmul.mubr.f32.gmra.mrb[0].mxu0 %v144
    %v589 = vpop.f32.mrb[0].mxu0
    %v590 = vadd.f32 %v385, %v589
    %v591 = vpop.f32.mrb[0].mxu0
    %v592 = vadd.f32 %v389, %v591
    %593 = vmatprep.mubr.f32.mxu0 %v149
    %594 = vmatmul.mubr.f32.gmra.mrb[0].mxu0 %v148
    %v595 = vpop.f32.mrb[0].mxu0
    %v596 = vadd.f32 %v385, %v595
    %v597 = vpop.f32.mrb[0].mxu0
    %v598 = vadd.f32 %v389, %v597
    %599 = vmatprep.mubr.f32.mxu0 %v153
    %600 = vmatmul.mubr.f32.gmra.mrb[0].mxu0 %v152
    %v601 = vpop.f32.mrb[0].mxu0
    %v602 = vadd.f32 %v385, %v601
    %v603 = vpop.f32.mrb[0].mxu0
    %v604 = vadd.f32 %v389, %v603
    %605 = vmatprep.mubr.f32.mxu0 %v157
    %606 = vmatmul.mubr.f32.gmra.mrb[0].mxu0 %v156
    %v607 = vpop.f32.mrb[0].mxu0
    %v608 = vadd.f32 %v385, %v607
    %v609 = vpop.f32.mrb[0].mxu0
    %v610 = vadd.f32 %v389, %v609
    %611 = vmatprep.mubr.f32.mxu0 %v161
    %612 = vmatmul.mubr.f32.gmra.mrb[0].mxu0 %v160
    %v613 = vpop.f32.mrb[0].mxu0
    %v614 = vadd.f32 %v385, %v613
    %v615 = vpop.f32.mrb[0].mxu0
    %v616 = vadd.f32 %v389, %v615
    %617 = vmatprep.mubr.f32.mxu0 %v165
    %618 = vmatmul.mubr.f32.gmra.mrb[0].mxu0 %v164
    %v619 = vpop.f32.mrb[0].mxu0
    %v620 = vadd.f32 %v385, %v619
    %v621 = vpop.f32.mrb[0].mxu0
    %v622 = vadd.f32 %v389, %v621
    %623 = vmatprep.mubr.f32.mxu0 %v169
    %624 = vmatmul.mubr.f32.gmra.mrb[0].mxu0 %v168
    %v625 = vpop.f32.mrb[0].mxu0
    %v626 = vadd.f32 %v385, %v625
    %v627 = vpop.f32.mrb[0].mxu0
    %v628 = vadd.f32 %v389, %v627
    %629 = vmatprep.mubr.f32.mxu0 %v173
    %630 = vmatmul.mubr.f32.gmra.mrb[0].mxu0 %v172
    %v631 = vpop.f32.mrb[0].mxu0
    %v632 = vadd.f32 %v385, %v631
    %v633 = vpop.f32.mrb[0].mxu0
    %v634 = vadd.f32 %v389, %v633
    %635 = vmatprep.mubr.f32.mxu0 %v177
    %636 = vmatmul.mubr.f32.gmra.mrb[0].mxu0 %v176
    %v637 = vpop.f32.mrb[0].mxu0
    %v638 = vadd.f32 %v385, %v637
    %v639 = vpop.f32.mrb[0].mxu0
    %v640 = vadd.f32 %v389, %v639
    %641 = vmatprep.mubr.f32.mxu0 %v181
    %642 = vmatmul.mubr.f32.gmra.mrb[0].mxu0 %v180
    %v643 = vpop.f32.mrb[0].mxu0
    %v644 = vadd.f32 %v385, %v643
    %v645 = vpop.f32.mrb[0].mxu0
    %v646 = vadd.f32 %v389, %v645
    %647 = vmatprep.mubr.f32.mxu0 %v185
    %648 = vmatmul.mubr.f32.gmra.mrb[0].mxu0 %v184
    %v649 = vpop.f32.mrb[0].mxu0
    %v650 = vadd.f32 %v385, %v649
    %v651 = vpop.f32.mrb[0].mxu0
    %v652 = vadd.f32 %v389, %v651
    %653 = vdwg.mxu0
    %654 = vmatprep.subr.mxu0 %v285
    %655 = vmatpush1.msra.mxu0 %v284
    %656 = vmatprep.subr.mxu0 %v288
    %657 = vmatpush1.msra.mxu0 %v287
    %658 = vmatprep.subr.mxu0 %v291
    %659 = vmatpush1.msra.mxu0 %v290
    %660 = vmatprep.subr.mxu0 %v294
    %661 = vmatpush1.msra.mxu0 %v293
    %662 = vmatprep.subr.mxu0 %v297
    %663 = vmatpush1.msra.mxu0 %v296
    %664 = vmatprep.subr.mxu0 %v300
    %665 = vmatpush1.msra.mxu0 %v299
    %666 = vmatprep.subr.mxu0 %v303
    %667 = vmatpush1.msra.mxu0 %v302
    %668 = vmatprep.subr.mxu0 %v306
    %669 = vmatpush1.msra.mxu0 %v305
    %670 = vmatprep.subr.mxu0 %v309
    %671 = vmatpush1.msra.mxu0 %v308
    %672 = vmatprep.subr.mxu0 %v312
    %673 = vmatpush1.msra.mxu0 %v311
    %674 = vmatprep.subr.mxu0 %v315
    %675 = vmatpush1.msra.mxu0 %v314
    %676 = vmatprep.subr.mxu0 %v318
    %677 = vmatpush1.msra.mxu0 %v317
    %678 = vmatprep.subr.mxu0 %v321
    %679 = vmatpush1.msra.mxu0 %v320
    %680 = vmatprep.subr.mxu0 %v324
    %681 = vmatpush1.msra.mxu0 %v323
    %682 = vmatprep.subr.mxu0 %v327
    %683 = vmatpush1.msra.mxu0 %v326
    %684 = vmatprep.subr.mxu0 %v330
    %685 = vmatpush1.msra.mxu0 %v329
    %686 = vmatprep.subr.mxu0 %v333
    %687 = vmatpush1.msra.mxu0 %v332
    %688 = vmatprep.subr.mxu0 %v336
    %689 = vmatpush1.msra.mxu0 %v335
    %690 = vmatprep.subr.mxu0 %v339
    %691 = vmatpush1.msra.mxu0 %v338
    %692 = vmatprep.subr.mxu0 %v342
    %693 = vmatpush1.msra.mxu0 %v341
    %694 = vmatprep.subr.mxu0 %v345
    %695 = vmatpush1.msra.mxu0 %v344
    %696 = vmatprep.subr.mxu0 %v348
    %697 = vmatpush1.msra.mxu0 %v347
    %698 = vmatprep.subr.mxu0 %v351
    %699 = vmatpush1.msra.mxu0 %v350
    %700 = vmatprep.subr.mxu0 %v354
    %701 = vmatpush1.msra.mxu0 %v353
    %702 = vmatprep.subr.mxu0 %v357
    %703 = vmatpush1.msra.mxu0 %v356
    %704 = vmatprep.subr.mxu0 %v360
    %705 = vmatpush1.msra.mxu0 %v359
    %706 = vmatprep.subr.mxu0 %v363
    %707 = vmatpush1.msra.mxu0 %v362
    %708 = vmatprep.subr.mxu0 %v366
    %709 = vmatpush1.msra.mxu0 %v365
    %710 = vmatprep.subr.mxu0 %v369
    %711 = vmatpush1.msra.mxu0 %v368
    %712 = vmatprep.subr.mxu0 %v372
    %713 = vmatpush1.msra.mxu0 %v371
    %714 = vmatprep.subr.mxu0 %v375
    %715 = vmatpush1.msra.mxu0 %v374
    %716 = vmatprep.subr.mxu0 %v378
    %717 = vmatpush1.msra.mxu0 %v377
    %718 = vmatprep.mubr.f32.mxu0 %v63
    %719 = vmatmul.mubr.f32.gmra.mrb[0].mxu0 %v62
    %v720 = vpop.f32.mrb[0].mxu0
    %v721 = vadd.f32 %v464, %v720
    %v722 = vpop.f32.mrb[0].mxu0
    %v723 = vadd.f32 %v466, %v722
    %724 = vmatprep.mubr.f32.mxu0 %v67
    %725 = vmatmul.mubr.f32.gmra.mrb[0].mxu0 %v66
    %v726 = vpop.f32.mrb[0].mxu0
    %v727 = vadd.f32 %v470, %v726
    %v728 = vpop.f32.mrb[0].mxu0
    %v729 = vadd.f32 %v472, %v728
    %730 = vmatprep.mubr.f32.mxu0 %v71
    %731 = vmatmul.mubr.f32.gmra.mrb[0].mxu0 %v70
    %v732 = vpop.f32.mrb[0].mxu0
    %v733 = vadd.f32 %v476, %v732
    %v734 = vpop.f32.mrb[0].mxu0
    %v735 = vadd.f32 %v478, %v734
    %736 = vmatprep.mubr.f32.mxu0 %v75
    %737 = vmatmul.mubr.f32.gmra.mrb[0].mxu0 %v74
    %v738 = vpop.f32.mrb[0].mxu0
    %v739 = vadd.f32 %v482, %v738
    %v740 = vpop.f32.mrb[0].mxu0
    %v741 = vadd.f32 %v484, %v740
    %742 = vmatprep.mubr.f32.mxu0 %v79
    %743 = vmatmul.mubr.f32.gmra.mrb[0].mxu0 %v78
    %v744 = vpop.f32.mrb[0].mxu0
    %v745 = vadd.f32 %v488, %v744
    %v746 = vpop.f32.mrb[0].mxu0
    %v747 = vadd.f32 %v490, %v746
    %748 = vmatprep.mubr.f32.mxu0 %v83
    %749 = vmatmul.mubr.f32.gmra.mrb[0].mxu0 %v82
    %v750 = vpop.f32.mrb[0].mxu0
    %v751 = vadd.f32 %v494, %v750
    %v752 = vpop.f32.mrb[0].mxu0
    %v753 = vadd.f32 %v496, %v752
    %754 = vmatprep.mubr.f32.mxu0 %v87
    %755 = vmatmul.mubr.f32.gmra.mrb[0].mxu0 %v86
    %v756 = vpop.f32.mrb[0].mxu0
    %v757 = vadd.f32 %v500, %v756
    %v758 = vpop.f32.mrb[0].mxu0
    %v759 = vadd.f32 %v502, %v758
    %760 = vmatprep.mubr.f32.mxu0 %v91
    %761 = vmatmul.mubr.f32.gmra.mrb[0].mxu0 %v90
    %v762 = vpop.f32.mrb[0].mxu0
    %v763 = vadd.f32 %v506, %v762
    %v764 = vpop.f32.mrb[0].mxu0
    %v765 = vadd.f32 %v508, %v764
    %766 = vmatprep.mubr.f32.mxu0 %v95
    %767 = vmatmul.mubr.f32.gmra.mrb[0].mxu0 %v94
    %v768 = vpop.f32.mrb[0].mxu0
    %v769 = vadd.f32 %v512, %v768
    %v770 = vpop.f32.mrb[0].mxu0
    %v771 = vadd.f32 %v514, %v770
    %772 = vmatprep.mubr.f32.mxu0 %v99
    %773 = vmatmul.mubr.f32.gmra.mrb[0].mxu0 %v98
    %v774 = vpop.f32.mrb[0].mxu0
    %v775 = vadd.f32 %v518, %v774
    %v776 = vpop.f32.mrb[0].mxu0
    %v777 = vadd.f32 %v520, %v776
    %778 = vmatprep.mubr.f32.mxu0 %v103
    %779 = vmatmul.mubr.f32.gmra.mrb[0].mxu0 %v102
    %v780 = vpop.f32.mrb[0].mxu0
    %v781 = vadd.f32 %v524, %v780
    %v782 = vpop.f32.mrb[0].mxu0
    %v783 = vadd.f32 %v526, %v782
    %784 = vmatprep.mubr.f32.mxu0 %v107
    %785 = vmatmul.mubr.f32.gmra.mrb[0].mxu0 %v106
    %v786 = vpop.f32.mrb[0].mxu0
    %v787 = vadd.f32 %v530, %v786
    %v788 = vpop.f32.mrb[0].mxu0
    %v789 = vadd.f32 %v532, %v788
    %790 = vmatprep.mubr.f32.mxu0 %v111
    %791 = vmatmul.mubr.f32.gmra.mrb[0].mxu0 %v110
    %v792 = vpop.f32.mrb[0].mxu0
    %v793 = vadd.f32 %v536, %v792
    %v794 = vpop.f32.mrb[0].mxu0
    %v795 = vadd.f32 %v538, %v794
    %796 = vmatprep.mubr.f32.mxu0 %v115
    %797 = vmatmul.mubr.f32.gmra.mrb[0].mxu0 %v114
    %v798 = vpop.f32.mrb[0].mxu0
    %v799 = vadd.f32 %v542, %v798
    %v800 = vpop.f32.mrb[0].mxu0
    %v801 = vadd.f32 %v544, %v800
    %802 = vmatprep.mubr.f32.mxu0 %v119
    %803 = vmatmul.mubr.f32.gmra.mrb[0].mxu0 %v118
    %v804 = vpop.f32.mrb[0].mxu0
    %v805 = vadd.f32 %v548, %v804
    %v806 = vpop.f32.mrb[0].mxu0
    %v807 = vadd.f32 %v550, %v806
    %808 = vmatprep.mubr.f32.mxu0 %v123
    %809 = vmatmul.mubr.f32.gmra.mrb[0].mxu0 %v122
    %v810 = vpop.f32.mrb[0].mxu0
    %v811 = vadd.f32 %v554, %v810
    %v812 = vpop.f32.mrb[0].mxu0
    %v813 = vadd.f32 %v556, %v812
    %814 = vmatprep.mubr.f32.mxu0 %v127
    %815 = vmatmul.mubr.f32.gmra.mrb[0].mxu0 %v126
    %v816 = vpop.f32.mrb[0].mxu0
    %v817 = vadd.f32 %v560, %v816
    %v818 = vpop.f32.mrb[0].mxu0
    %v819 = vadd.f32 %v562, %v818
    %820 = vmatprep.mubr.f32.mxu0 %v131
    %821 = vmatmul.mubr.f32.gmra.mrb[0].mxu0 %v130
    %v822 = vpop.f32.mrb[0].mxu0
    %v823 = vadd.f32 %v566, %v822
    %v824 = vpop.f32.mrb[0].mxu0
    %v825 = vadd.f32 %v568, %v824
    %826 = vmatprep.mubr.f32.mxu0 %v135
    %827 = vmatmul.mubr.f32.gmra.mrb[0].mxu0 %v134
    %v828 = vpop.f32.mrb[0].mxu0
    %v829 = vadd.f32 %v572, %v828
    %v830 = vpop.f32.mrb[0].mxu0
    %v831 = vadd.f32 %v574, %v830
    %832 = vmatprep.mubr.f32.mxu0 %v139
    %833 = vmatmul.mubr.f32.gmra.mrb[0].mxu0 %v138
    %v834 = vpop.f32.mrb[0].mxu0
    %v835 = vadd.f32 %v578, %v834
    %v836 = vpop.f32.mrb[0].mxu0
    %v837 = vadd.f32 %v580, %v836
    %838 = vmatprep.mubr.f32.mxu0 %v143
    %839 = vmatmul.mubr.f32.gmra.mrb[0].mxu0 %v142
    %v840 = vpop.f32.mrb[0].mxu0
    %v841 = vadd.f32 %v584, %v840
    %v842 = vpop.f32.mrb[0].mxu0
    %v843 = vadd.f32 %v586, %v842
    %844 = vmatprep.mubr.f32.mxu0 %v147
    %845 = vmatmul.mubr.f32.gmra.mrb[0].mxu0 %v146
    %v846 = vpop.f32.mrb[0].mxu0
    %v847 = vadd.f32 %v590, %v846
    %v848 = vpop.f32.mrb[0].mxu0
    %v849 = vadd.f32 %v592, %v848
    %850 = vmatprep.mubr.f32.mxu0 %v151
    %851 = vmatmul.mubr.f32.gmra.mrb[0].mxu0 %v150
    %v852 = vpop.f32.mrb[0].mxu0
    %v853 = vadd.f32 %v596, %v852
    %v854 = vpop.f32.mrb[0].mxu0
    %v855 = vadd.f32 %v598, %v854
    %856 = vmatprep.mubr.f32.mxu0 %v155
    %857 = vmatmul.mubr.f32.gmra.mrb[0].mxu0 %v154
    %v858 = vpop.f32.mrb[0].mxu0
    %v859 = vadd.f32 %v602, %v858
    %v860 = vpop.f32.mrb[0].mxu0
    %v861 = vadd.f32 %v604, %v860
    %862 = vmatprep.mubr.f32.mxu0 %v159
    %863 = vmatmul.mubr.f32.gmra.mrb[0].mxu0 %v158
    %v864 = vpop.f32.mrb[0].mxu0
    %v865 = vadd.f32 %v608, %v864
    %v866 = vpop.f32.mrb[0].mxu0
    %v867 = vadd.f32 %v610, %v866
    %868 = vmatprep.mubr.f32.mxu0 %v163
    %869 = vmatmul.mubr.f32.gmra.mrb[0].mxu0 %v162
    %v870 = vpop.f32.mrb[0].mxu0
    %v871 = vadd.f32 %v614, %v870
    %v872 = vpop.f32.mrb[0].mxu0
    %v873 = vadd.f32 %v616, %v872
    %874 = vmatprep.mubr.f32.mxu0 %v167
    %875 = vmatmul.mubr.f32.gmra.mrb[0].mxu0 %v166
    %v876 = vpop.f32.mrb[0].mxu0
    %v877 = vadd.f32 %v620, %v876
    %v878 = vpop.f32.mrb[0].mxu0
    %v879 = vadd.f32 %v622, %v878
    %880 = vmatprep.mubr.f32.mxu0 %v171
    %881 = vmatmul.mubr.f32.gmra.mrb[0].mxu0 %v170
    %v882 = vpop.f32.mrb[0].mxu0
    %v883 = vadd.f32 %v626, %v882
    %v884 = vpop.f32.mrb[0].mxu0
    %v885 = vadd.f32 %v628, %v884
    %886 = vmatprep.mubr.f32.mxu0 %v175
    %887 = vmatmul.mubr.f32.gmra.mrb[0].mxu0 %v174
    %v888 = vpop.f32.mrb[0].mxu0
    %v889 = vadd.f32 %v632, %v888
    %v890 = vpop.f32.mrb[0].mxu0
    %v891 = vadd.f32 %v634, %v890
    %892 = vmatprep.mubr.f32.mxu0 %v179
    %893 = vmatmul.mubr.f32.gmra.mrb[0].mxu0 %v178
    %v894 = vpop.f32.mrb[0].mxu0
    %v895 = vadd.f32 %v638, %v894
    %v896 = vpop.f32.mrb[0].mxu0
    %v897 = vadd.f32 %v640, %v896
    %898 = vmatprep.mubr.f32.mxu0 %v183
    %899 = vmatmul.mubr.f32.gmra.mrb[0].mxu0 %v182
    %v900 = vpop.f32.mrb[0].mxu0
    %v901 = vadd.f32 %v644, %v900
    %v902 = vpop.f32.mrb[0].mxu0
    %v903 = vadd.f32 %v646, %v902
    %904 = vmatprep.mubr.f32.mxu0 %v187
    %905 = vmatmul.mubr.f32.gmra.mrb[0].mxu0 %v186
    %v906 = vpop.f32.mrb[0].mxu0
    %v907 = vadd.f32 %v650, %v906
    %v908 = vpop.f32.mrb[0].mxu0
    %v909 = vadd.f32 %v652, %v908
    %910 = vdwg.mxu0
    %911 = vmatprep.subr.mxu0 0.0
    %912 = vmatpush1.msra.mxu0 %v190
    %913 = vmatprep.subr.mxu0 0.0
    %914 = vmatpush1.msra.mxu0 %v193
    %915 = vmatprep.subr.mxu0 0.0
    %916 = vmatpush1.msra.mxu0 %v196
    %917 = vmatprep.subr.mxu0 0.0
    %918 = vmatpush1.msra.mxu0 %v199
    %919 = vmatprep.subr.mxu0 0.0
    %920 = vmatpush1.msra.mxu0 %v202
    %921 = vmatprep.subr.mxu0 0.0
    %922 = vmatpush1.msra.mxu0 %v205
    %923 = vmatprep.subr.mxu0 0.0
    %924 = vmatpush1.msra.mxu0 %v208
    %925 = vmatprep.subr.mxu0 0.0
    %926 = vmatpush1.msra.mxu0 %v211
    %927 = vmatprep.subr.mxu0 0.0
    %928 = vmatpush1.msra.mxu0 %v214
    %929 = vmatprep.subr.mxu0 0.0
    %930 = vmatpush1.msra.mxu0 %v217
    %931 = vmatprep.subr.mxu0 0.0
    %932 = vmatpush1.msra.mxu0 %v220
    %933 = vmatprep.subr.mxu0 0.0
    %934 = vmatpush1.msra.mxu0 %v223
    %935 = vmatprep.subr.mxu0 0.0
    %936 = vmatpush1.msra.mxu0 %v226
    %937 = vmatprep.subr.mxu0 0.0
    %938 = vmatpush1.msra.mxu0 %v229
    %939 = vmatprep.subr.mxu0 0.0
    %940 = vmatpush1.msra.mxu0 %v232
    %941 = vmatprep.subr.mxu0 0.0
    %942 = vmatpush1.msra.mxu0 %v235
    %943 = vmatprep.subr.mxu0 0.0
    %944 = vmatpush1.msra.mxu0 %v238
    %945 = vmatprep.subr.mxu0 0.0
    %946 = vmatpush1.msra.mxu0 %v241
    %947 = vmatprep.subr.mxu0 0.0
    %948 = vmatpush1.msra.mxu0 %v244
    %949 = vmatprep.subr.mxu0 0.0
    %950 = vmatpush1.msra.mxu0 %v247
    %951 = vmatprep.subr.mxu0 0.0
    %952 = vmatpush1.msra.mxu0 %v250
    %953 = vmatprep.subr.mxu0 0.0
    %954 = vmatpush1.msra.mxu0 %v253
    %955 = vmatprep.subr.mxu0 0.0
    %956 = vmatpush1.msra.mxu0 %v256
    %957 = vmatprep.subr.mxu0 0.0
    %958 = vmatpush1.msra.mxu0 %v259
    %959 = vmatprep.subr.mxu0 0.0
    %960 = vmatpush1.msra.mxu0 %v262
    %961 = vmatprep.subr.mxu0 0.0
    %962 = vmatpush1.msra.mxu0 %v265
    %963 = vmatprep.subr.mxu0 0.0
    %964 = vmatpush1.msra.mxu0 %v268
    %965 = vmatprep.subr.mxu0 0.0
    %966 = vmatpush1.msra.mxu0 %v271
    %967 = vmatprep.subr.mxu0 0.0
    %968 = vmatpush1.msra.mxu0 %v274
    %969 = vmatprep.subr.mxu0 0.0
    %970 = vmatpush1.msra.mxu0 %v277
    %971 = vmatprep.subr.mxu0 0.0
    %972 = vmatpush1.msra.mxu0 %v280
    %973 = vmatprep.subr.mxu0 0.0
    %974 = vmatpush1.msra.mxu0 %v283
    %975 = vmatprep.mubr.f32.mxu0 %v61
    %976 = vmatmul.mubr.f32.gmra.mrb[0].mxu0 %v60
    %v977 = vpop.f32.mrb[0].mxu0
    %v978 = vadd.f32 %v393, %v977
    %v979 = vpop.f32.mrb[0].mxu0
    %980 = vmatprep.mubr.f32.mxu0 %v65
    %981 = vmatmul.mubr.f32.gmra.mrb[0].mxu0 %v64
    %v982 = vpop.f32.mrb[0].mxu0
    %v983 = vadd.f32 %v393, %v982
    %v984 = vpop.f32.mrb[0].mxu0
    %985 = vmatprep.mubr.f32.mxu0 %v69
    %986 = vmatmul.mubr.f32.gmra.mrb[0].mxu0 %v68
    %v987 = vpop.f32.mrb[0].mxu0
    %v988 = vadd.f32 %v393, %v987
    %v989 = vpop.f32.mrb[0].mxu0
    %990 = vmatprep.mubr.f32.mxu0 %v73
    %991 = vmatmul.mubr.f32.gmra.mrb[0].mxu0 %v72
    %v992 = vpop.f32.mrb[0].mxu0
    %v993 = vadd.f32 %v393, %v992
    %v994 = vpop.f32.mrb[0].mxu0
    %995 = vmatprep.mubr.f32.mxu0 %v77
    %996 = vmatmul.mubr.f32.gmra.mrb[0].mxu0 %v76
    %v997 = vpop.f32.mrb[0].mxu0
    %v998 = vadd.f32 %v393, %v997
    %v999 = vpop.f32.mrb[0].mxu0
    %1000 = vmatprep.mubr.f32.mxu0 %v81
    %1001 = vmatmul.mubr.f32.gmra.mrb[0].mxu0 %v80
    %v1002 = vpop.f32.mrb[0].mxu0
    %v1003 = vadd.f32 %v393, %v1002
    %v1004 = vpop.f32.mrb[0].mxu0
    %1005 = vmatprep.mubr.f32.mxu0 %v85
    %1006 = vmatmul.mubr.f32.gmra.mrb[0].mxu0 %v84
    %v1007 = vpop.f32.mrb[0].mxu0
    %v1008 = vadd.f32 %v393, %v1007
    %v1009 = vpop.f32.mrb[0].mxu0
    %1010 = vmatprep.mubr.f32.mxu0 %v89
    %1011 = vmatmul.mubr.f32.gmra.mrb[0].mxu0 %v88
    %v1012 = vpop.f32.mrb[0].mxu0
    %v1013 = vadd.f32 %v393, %v1012
    %v1014 = vpop.f32.mrb[0].mxu0
    %1015 = vmatprep.mubr.f32.mxu0 %v93
    %1016 = vmatmul.mubr.f32.gmra.mrb[0].mxu0 %v92
    %v1017 = vpop.f32.mrb[0].mxu0
    %v1018 = vadd.f32 %v393, %v1017
    %v1019 = vpop.f32.mrb[0].mxu0
    %1020 = vmatprep.mubr.f32.mxu0 %v97
    %1021 = vmatmul.mubr.f32.gmra.mrb[0].mxu0 %v96
    %v1022 = vpop.f32.mrb[0].mxu0
    %v1023 = vadd.f32 %v393, %v1022
    %v1024 = vpop.f32.mrb[0].mxu0
    %1025 = vmatprep.mubr.f32.mxu0 %v101
    %1026 = vmatmul.mubr.f32.gmra.mrb[0].mxu0 %v100
    %v1027 = vpop.f32.mrb[0].mxu0
    %v1028 = vadd.f32 %v393, %v1027
    %v1029 = vpop.f32.mrb[0].mxu0
    %1030 = vmatprep.mubr.f32.mxu0 %v105
    %1031 = vmatmul.mubr.f32.gmra.mrb[0].mxu0 %v104
    %v1032 = vpop.f32.mrb[0].mxu0
    %v1033 = vadd.f32 %v393, %v1032
    %v1034 = vpop.f32.mrb[0].mxu0
    %1035 = vmatprep.mubr.f32.mxu0 %v109
    %1036 = vmatmul.mubr.f32.gmra.mrb[0].mxu0 %v108
    %v1037 = vpop.f32.mrb[0].mxu0
    %v1038 = vadd.f32 %v393, %v1037
    %v1039 = vpop.f32.mrb[0].mxu0
    %1040 = vmatprep.mubr.f32.mxu0 %v113
    %1041 = vmatmul.mubr.f32.gmra.mrb[0].mxu0 %v112
    %v1042 = vpop.f32.mrb[0].mxu0
    %v1043 = vadd.f32 %v393, %v1042
    %v1044 = vpop.f32.mrb[0].mxu0
    %1045 = vmatprep.mubr.f32.mxu0 %v117
    %1046 = vmatmul.mubr.f32.gmra.mrb[0].mxu0 %v116
    %v1047 = vpop.f32.mrb[0].mxu0
    %v1048 = vadd.f32 %v393, %v1047
    %v1049 = vpop.f32.mrb[0].mxu0
    %1050 = vmatprep.mubr.f32.mxu0 %v121
    %1051 = vmatmul.mubr.f32.gmra.mrb[0].mxu0 %v120
    %v1052 = vpop.f32.mrb[0].mxu0
    %v1053 = vadd.f32 %v393, %v1052
    %v1054 = vpop.f32.mrb[0].mxu0
    %1055 = vmatprep.mubr.f32.mxu0 %v125
    %1056 = vmatmul.mubr.f32.gmra.mrb[0].mxu0 %v124
    %v1057 = vpop.f32.mrb[0].mxu0
    %v1058 = vadd.f32 %v393, %v1057
    %v1059 = vpop.f32.mrb[0].mxu0
    %1060 = vmatprep.mubr.f32.mxu0 %v129
    %1061 = vmatmul.mubr.f32.gmra.mrb[0].mxu0 %v128
    %v1062 = vpop.f32.mrb[0].mxu0
    %v1063 = vadd.f32 %v393, %v1062
    %v1064 = vpop.f32.mrb[0].mxu0
    %1065 = vmatprep.mubr.f32.mxu0 %v133
    %1066 = vmatmul.mubr.f32.gmra.mrb[0].mxu0 %v132
    %v1067 = vpop.f32.mrb[0].mxu0
    %v1068 = vadd.f32 %v393, %v1067
    %v1069 = vpop.f32.mrb[0].mxu0
    %1070 = vmatprep.mubr.f32.mxu0 %v137
    %1071 = vmatmul.mubr.f32.gmra.mrb[0].mxu0 %v136
    %v1072 = vpop.f32.mrb[0].mxu0
    %v1073 = vadd.f32 %v393, %v1072
    %v1074 = vpop.f32.mrb[0].mxu0
    %1075 = vmatprep.mubr.f32.mxu0 %v141
    %1076 = vmatmul.mubr.f32.gmra.mrb[0].mxu0 %v140
    %v1077 = vpop.f32.mrb[0].mxu0
    %v1078 = vadd.f32 %v393, %v1077
    %v1079 = vpop.f32.mrb[0].mxu0
    %1080 = vmatprep.mubr.f32.mxu0 %v145
    %1081 = vmatmul.mubr.f32.gmra.mrb[0].mxu0 %v144
    %v1082 = vpop.f32.mrb[0].mxu0
    %v1083 = vadd.f32 %v393, %v1082
    %v1084 = vpop.f32.mrb[0].mxu0
    %1085 = vmatprep.mubr.f32.mxu0 %v149
    %1086 = vmatmul.mubr.f32.gmra.mrb[0].mxu0 %v148
    %v1087 = vpop.f32.mrb[0].mxu0
    %v1088 = vadd.f32 %v393, %v1087
    %v1089 = vpop.f32.mrb[0].mxu0
    %1090 = vmatprep.mubr.f32.mxu0 %v153
    %1091 = vmatmul.mubr.f32.gmra.mrb[0].mxu0 %v152
    %v1092 = vpop.f32.mrb[0].mxu0
    %v1093 = vadd.f32 %v393, %v1092
    %v1094 = vpop.f32.mrb[0].mxu0
    %1095 = vmatprep.mubr.f32.mxu0 %v157
    %1096 = vmatmul.mubr.f32.gmra.mrb[0].mxu0 %v156
    %v1097 = vpop.f32.mrb[0].mxu0
    %v1098 = vadd.f32 %v393, %v1097
    %v1099 = vpop.f32.mrb[0].mxu0
    %1100 = vmatprep.mubr.f32.mxu0 %v161
    %1101 = vmatmul.mubr.f32.gmra.mrb[0].mxu0 %v160
    %v1102 = vpop.f32.mrb[0].mxu0
    %v1103 = vadd.f32 %v393, %v1102
    %v1104 = vpop.f32.mrb[0].mxu0
    %1105 = vmatprep.mubr.f32.mxu0 %v165
    %1106 = vmatmul.mubr.f32.gmra.mrb[0].mxu0 %v164
    %v1107 = vpop.f32.mrb[0].mxu0
    %v1108 = vadd.f32 %v393, %v1107
    %v1109 = vpop.f32.mrb[0].mxu0
    %1110 = vmatprep.mubr.f32.mxu0 %v169
    %1111 = vmatmul.mubr.f32.gmra.mrb[0].mxu0 %v168
    %v1112 = vpop.f32.mrb[0].mxu0
    %v1113 = vadd.f32 %v393, %v1112
    %v1114 = vpop.f32.mrb[0].mxu0
    %1115 = vmatprep.mubr.f32.mxu0 %v173
    %1116 = vmatmul.mubr.f32.gmra.mrb[0].mxu0 %v172
    %v1117 = vpop.f32.mrb[0].mxu0
    %v1118 = vadd.f32 %v393, %v1117
    %v1119 = vpop.f32.mrb[0].mxu0
    %1120 = vmatprep.mubr.f32.mxu0 %v177
    %1121 = vmatmul.mubr.f32.gmra.mrb[0].mxu0 %v176
    %v1122 = vpop.f32.mrb[0].mxu0
    %v1123 = vadd.f32 %v393, %v1122
    %v1124 = vpop.f32.mrb[0].mxu0
    %1125 = vmatprep.mubr.f32.mxu0 %v181
    %1126 = vmatmul.mubr.f32.gmra.mrb[0].mxu0 %v180
    %v1127 = vpop.f32.mrb[0].mxu0
    %v1128 = vadd.f32 %v393, %v1127
    %v1129 = vpop.f32.mrb[0].mxu0
    %1130 = vmatprep.mubr.f32.mxu0 %v185
    %1131 = vmatmul.mubr.f32.gmra.mrb[0].mxu0 %v184
    %v1132 = vpop.f32.mrb[0].mxu0
    %v1133 = vadd.f32 %v393, %v1132
    %v1134 = vpop.f32.mrb[0].mxu0
    %1135 = vdwg.mxu0
    %1136 = vmatprep.subr.mxu0 0.0
    %1137 = vmatpush1.msra.mxu0 %v286
    %1138 = vmatprep.subr.mxu0 0.0
    %1139 = vmatpush1.msra.mxu0 %v289
    %1140 = vmatprep.subr.mxu0 0.0
    %1141 = vmatpush1.msra.mxu0 %v292
    %1142 = vmatprep.subr.mxu0 0.0
    %1143 = vmatpush1.msra.mxu0 %v295
    %1144 = vmatprep.subr.mxu0 0.0
    %1145 = vmatpush1.msra.mxu0 %v298
    %1146 = vmatprep.subr.mxu0 0.0
    %1147 = vmatpush1.msra.mxu0 %v301
    %1148 = vmatprep.subr.mxu0 0.0
    %1149 = vmatpush1.msra.mxu0 %v304
    %1150 = vmatprep.subr.mxu0 0.0
    %1151 = vmatpush1.msra.mxu0 %v307
    %1152 = vmatprep.subr.mxu0 0.0
    %1153 = vmatpush1.msra.mxu0 %v310
    %1154 = vmatprep.subr.mxu0 0.0
    %1155 = vmatpush1.msra.mxu0 %v313
    %1156 = vmatprep.subr.mxu0 0.0
    %1157 = vmatpush1.msra.mxu0 %v316
    %1158 = vmatprep.subr.mxu0 0.0
    %1159 = vmatpush1.msra.mxu0 %v319
    %1160 = vmatprep.subr.mxu0 0.0
    %1161 = vmatpush1.msra.mxu0 %v322
    %1162 = vmatprep.subr.mxu0 0.0
    %1163 = vmatpush1.msra.mxu0 %v325
    %1164 = vmatprep.subr.mxu0 0.0
    %1165 = vmatpush1.msra.mxu0 %v328
    %1166 = vmatprep.subr.mxu0 0.0
    %1167 = vmatpush1.msra.mxu0 %v331
    %1168 = vmatprep.subr.mxu0 0.0
    %1169 = vmatpush1.msra.mxu0 %v334
    %1170 = vmatprep.subr.mxu0 0.0
    %1171 = vmatpush1.msra.mxu0 %v337
    %1172 = vmatprep.subr.mxu0 0.0
    %1173 = vmatpush1.msra.mxu0 %v340
    %1174 = vmatprep.subr.mxu0 0.0
    %1175 = vmatpush1.msra.mxu0 %v343
    %1176 = vmatprep.subr.mxu0 0.0
    %1177 = vmatpush1.msra.mxu0 %v346
    %1178 = vmatprep.subr.mxu0 0.0
    %1179 = vmatpush1.msra.mxu0 %v349
    %1180 = vmatprep.subr.mxu0 0.0
    %1181 = vmatpush1.msra.mxu0 %v352
    %1182 = vmatprep.subr.mxu0 0.0
    %1183 = vmatpush1.msra.mxu0 %v355
    %1184 = vmatprep.subr.mxu0 0.0
    %1185 = vmatpush1.msra.mxu0 %v358
    %1186 = vmatprep.subr.mxu0 0.0
    %1187 = vmatpush1.msra.mxu0 %v361
    %1188 = vmatprep.subr.mxu0 0.0
    %1189 = vmatpush1.msra.mxu0 %v364
    %1190 = vmatprep.subr.mxu0 0.0
    %1191 = vmatpush1.msra.mxu0 %v367
    %1192 = vmatprep.subr.mxu0 0.0
    %1193 = vmatpush1.msra.mxu0 %v370
    %1194 = vmatprep.subr.mxu0 0.0
    %1195 = vmatpush1.msra.mxu0 %v373
    %1196 = vmatprep.subr.mxu0 0.0
    %1197 = vmatpush1.msra.mxu0 %v376
    %1198 = vmatprep.subr.mxu0 0.0
    %1199 = vmatpush1.msra.mxu0 %v379
    %1200 = vmatprep.mubr.f32.mxu0 %v63
    %1201 = vmatmul.mubr.f32.gmra.mrb[0].mxu0 %v62
    %v1202 = vpop.f32.mrb[0].mxu0
    %v1203 = vadd.f32 %v978, %v1202
    %v1204 = vpop.f32.mrb[0].mxu0
    %1205 = vmatprep.mubr.f32.mxu0 %v67
    %1206 = vmatmul.mubr.f32.gmra.mrb[0].mxu0 %v66
    %v1207 = vpop.f32.mrb[0].mxu0
    %v1208 = vadd.f32 %v983, %v1207
    %v1209 = vpop.f32.mrb[0].mxu0
    %1210 = vmatprep.mubr.f32.mxu0 %v71
    %1211 = vmatmul.mubr.f32.gmra.mrb[0].mxu0 %v70
    %v1212 = vpop.f32.mrb[0].mxu0
    %v1213 = vadd.f32 %v988, %v1212
    %v1214 = vpop.f32.mrb[0].mxu0
    %1215 = vmatprep.mubr.f32.mxu0 %v75
    %1216 = vmatmul.mubr.f32.gmra.mrb[0].mxu0 %v74
    %v1217 = vpop.f32.mrb[0].mxu0
    %v1218 = vadd.f32 %v993, %v1217
    %v1219 = vpop.f32.mrb[0].mxu0
    %1220 = vmatprep.mubr.f32.mxu0 %v79
    %1221 = vmatmul.mubr.f32.gmra.mrb[0].mxu0 %v78
    %v1222 = vpop.f32.mrb[0].mxu0
    %v1223 = vadd.f32 %v998, %v1222
    %v1224 = vpop.f32.mrb[0].mxu0
    %1225 = vmatprep.mubr.f32.mxu0 %v83
    %1226 = vmatmul.mubr.f32.gmra.mrb[0].mxu0 %v82
    %v1227 = vpop.f32.mrb[0].mxu0
    %v1228 = vadd.f32 %v1003, %v1227
    %v1229 = vpop.f32.mrb[0].mxu0
    %1230 = vmatprep.mubr.f32.mxu0 %v87
    %1231 = vmatmul.mubr.f32.gmra.mrb[0].mxu0 %v86
    %v1232 = vpop.f32.mrb[0].mxu0
    %v1233 = vadd.f32 %v1008, %v1232
    %v1234 = vpop.f32.mrb[0].mxu0
    %1235 = vmatprep.mubr.f32.mxu0 %v91
    %1236 = vmatmul.mubr.f32.gmra.mrb[0].mxu0 %v90
    %v1237 = vpop.f32.mrb[0].mxu0
    %v1238 = vadd.f32 %v1013, %v1237
    %v1239 = vpop.f32.mrb[0].mxu0
    %1240 = vmatprep.mubr.f32.mxu0 %v95
    %1241 = vmatmul.mubr.f32.gmra.mrb[0].mxu0 %v94
    %v1242 = vpop.f32.mrb[0].mxu0
    %v1243 = vadd.f32 %v1018, %v1242
    %v1244 = vpop.f32.mrb[0].mxu0
    %1245 = vmatprep.mubr.f32.mxu0 %v99
    %1246 = vmatmul.mubr.f32.gmra.mrb[0].mxu0 %v98
    %v1247 = vpop.f32.mrb[0].mxu0
    %v1248 = vadd.f32 %v1023, %v1247
    %v1249 = vpop.f32.mrb[0].mxu0
    %1250 = vmatprep.mubr.f32.mxu0 %v103
    %1251 = vmatmul.mubr.f32.gmra.mrb[0].mxu0 %v102
    %v1252 = vpop.f32.mrb[0].mxu0
    %v1253 = vadd.f32 %v1028, %v1252
    %v1254 = vpop.f32.mrb[0].mxu0
    %1255 = vmatprep.mubr.f32.mxu0 %v107
    %1256 = vmatmul.mubr.f32.gmra.mrb[0].mxu0 %v106
    %v1257 = vpop.f32.mrb[0].mxu0
    %v1258 = vadd.f32 %v1033, %v1257
    %v1259 = vpop.f32.mrb[0].mxu0
    %1260 = vmatprep.mubr.f32.mxu0 %v111
    %1261 = vmatmul.mubr.f32.gmra.mrb[0].mxu0 %v110
    %v1262 = vpop.f32.mrb[0].mxu0
    %v1263 = vadd.f32 %v1038, %v1262
    %v1264 = vpop.f32.mrb[0].mxu0
    %1265 = vmatprep.mubr.f32.mxu0 %v115
    %1266 = vmatmul.mubr.f32.gmra.mrb[0].mxu0 %v114
    %v1267 = vpop.f32.mrb[0].mxu0
    %v1268 = vadd.f32 %v1043, %v1267
    %v1269 = vpop.f32.mrb[0].mxu0
    %1270 = vmatprep.mubr.f32.mxu0 %v119
    %1271 = vmatmul.mubr.f32.gmra.mrb[0].mxu0 %v118
    %v1272 = vpop.f32.mrb[0].mxu0
    %v1273 = vadd.f32 %v1048, %v1272
    %v1274 = vpop.f32.mrb[0].mxu0
    %1275 = vmatprep.mubr.f32.mxu0 %v123
    %1276 = vmatmul.mubr.f32.gmra.mrb[0].mxu0 %v122
    %v1277 = vpop.f32.mrb[0].mxu0
    %v1278 = vadd.f32 %v1053, %v1277
    %v1279 = vpop.f32.mrb[0].mxu0
    %1280 = vmatprep.mubr.f32.mxu0 %v127
    %1281 = vmatmul.mubr.f32.gmra.mrb[0].mxu0 %v126
    %v1282 = vpop.f32.mrb[0].mxu0
    %v1283 = vadd.f32 %v1058, %v1282
    %v1284 = vpop.f32.mrb[0].mxu0
    %1285 = vmatprep.mubr.f32.mxu0 %v131
    %1286 = vmatmul.mubr.f32.gmra.mrb[0].mxu0 %v130
    %v1287 = vpop.f32.mrb[0].mxu0
    %v1288 = vadd.f32 %v1063, %v1287
    %v1289 = vpop.f32.mrb[0].mxu0
    %1290 = vmatprep.mubr.f32.mxu0 %v135
    %1291 = vmatmul.mubr.f32.gmra.mrb[0].mxu0 %v134
    %v1292 = vpop.f32.mrb[0].mxu0
    %v1293 = vadd.f32 %v1068, %v1292
    %v1294 = vpop.f32.mrb[0].mxu0
    %1295 = vmatprep.mubr.f32.mxu0 %v139
    %1296 = vmatmul.mubr.f32.gmra.mrb[0].mxu0 %v138
    %v1297 = vpop.f32.mrb[0].mxu0
    %v1298 = vadd.f32 %v1073, %v1297
    %v1299 = vpop.f32.mrb[0].mxu0
    %1300 = vmatprep.mubr.f32.mxu0 %v143
    %1301 = vmatmul.mubr.f32.gmra.mrb[0].mxu0 %v142
    %v1302 = vpop.f32.mrb[0].mxu0
    %v1303 = vadd.f32 %v1078, %v1302
    %v1304 = vpop.f32.mrb[0].mxu0
    %1305 = vmatprep.mubr.f32.mxu0 %v147
    %1306 = vmatmul.mubr.f32.gmra.mrb[0].mxu0 %v146
    %v1307 = vpop.f32.mrb[0].mxu0
    %v1308 = vadd.f32 %v1083, %v1307
    %v1309 = vpop.f32.mrb[0].mxu0
    %1310 = vmatprep.mubr.f32.mxu0 %v151
    %1311 = vmatmul.mubr.f32.gmra.mrb[0].mxu0 %v150
    %v1312 = vpop.f32.mrb[0].mxu0
    %v1313 = vadd.f32 %v1088, %v1312
    %v1314 = vpop.f32.mrb[0].mxu0
    %1315 = vmatprep.mubr.f32.mxu0 %v155
    %1316 = vmatmul.mubr.f32.gmra.mrb[0].mxu0 %v154
    %v1317 = vpop.f32.mrb[0].mxu0
    %v1318 = vadd.f32 %v1093, %v1317
    %v1319 = vpop.f32.mrb[0].mxu0
    %1320 = vmatprep.mubr.f32.mxu0 %v159
    %1321 = vmatmul.mubr.f32.gmra.mrb[0].mxu0 %v158
    %v1322 = vpop.f32.mrb[0].mxu0
    %v1323 = vadd.f32 %v1098, %v1322
    %v1324 = vpop.f32.mrb[0].mxu0
    %1325 = vmatprep.mubr.f32.mxu0 %v163
    %1326 = vmatmul.mubr.f32.gmra.mrb[0].mxu0 %v162
    %v1327 = vpop.f32.mrb[0].mxu0
    %v1328 = vadd.f32 %v1103, %v1327
    %v1329 = vpop.f32.mrb[0].mxu0
    %1330 = vmatprep.mubr.f32.mxu0 %v167
    %1331 = vmatmul.mubr.f32.gmra.mrb[0].mxu0 %v166
    %v1332 = vpop.f32.mrb[0].mxu0
    %v1333 = vadd.f32 %v1108, %v1332
    %v1334 = vpop.f32.mrb[0].mxu0
    %1335 = vmatprep.mubr.f32.mxu0 %v171
    %1336 = vmatmul.mubr.f32.gmra.mrb[0].mxu0 %v170
    %v1337 = vpop.f32.mrb[0].mxu0
    %v1338 = vadd.f32 %v1113, %v1337
    %v1339 = vpop.f32.mrb[0].mxu0
    %1340 = vmatprep.mubr.f32.mxu0 %v175
    %1341 = vmatmul.mubr.f32.gmra.mrb[0].mxu0 %v174
    %v1342 = vpop.f32.mrb[0].mxu0
    %v1343 = vadd.f32 %v1118, %v1342
    %v1344 = vpop.f32.mrb[0].mxu0
    %1345 = vmatprep.mubr.f32.mxu0 %v179
    %1346 = vmatmul.mubr.f32.gmra.mrb[0].mxu0 %v178
    %v1347 = vpop.f32.mrb[0].mxu0
    %v1348 = vadd.f32 %v1123, %v1347
    %v1349 = vpop.f32.mrb[0].mxu0
    %1350 = vmatprep.mubr.f32.mxu0 %v183
    %1351 = vmatmul.mubr.f32.gmra.mrb[0].mxu0 %v182
    %v1352 = vpop.f32.mrb[0].mxu0
    %v1353 = vadd.f32 %v1128, %v1352
    %v1354 = vpop.f32.mrb[0].mxu0
    %1355 = vmatprep.mubr.f32.mxu0 %v187
    %1356 = vmatmul.mubr.f32.gmra.mrb[0].mxu0 %v186
    %v1357 = vpop.f32.mrb[0].mxu0
    %v1358 = vadd.f32 %v1133, %v1357
    %v1359 = vpop.f32.mrb[0].mxu0
    %1360 = vdwg.mxu0
    %v1361 = vmax.f32 %v721, 0.0
    %v1362 = vmax.f32 %v723, 0.0
    %v1363 = vmax.f32 %v1203, 0.0
    %v1364 = vmax.f32 %v727, 0.0
    %v1365 = vmax.f32 %v729, 0.0
    %v1366 = vmax.f32 %v1208, 0.0
    %v1367 = vmax.f32 %v733, 0.0
    %v1368 = vmax.f32 %v735, 0.0
    %v1369 = vmax.f32 %v1213, 0.0
    %v1370 = vmax.f32 %v739, 0.0
    %v1371 = vmax.f32 %v741, 0.0
    %v1372 = vmax.f32 %v1218, 0.0
    %v1373 = vmax.f32 %v745, 0.0
    %v1374 = vmax.f32 %v747, 0.0
    %v1375 = vmax.f32 %v1223, 0.0
    %v1376 = vmax.f32 %v751, 0.0
    %v1377 = vmax.f32 %v753, 0.0
    %v1378 = vmax.f32 %v1228, 0.0
    %v1379 = vmax.f32 %v757, 0.0
    %v1380 = vmax.f32 %v759, 0.0
    %v1381 = vmax.f32 %v1233, 0.0
    %v1382 = vmax.f32 %v763, 0.0
    %v1383 = vmax.f32 %v765, 0.0
    %v1384 = vmax.f32 %v1238, 0.0
    %v1385 = vmax.f32 %v769, 0.0
    %v1386 = vmax.f32 %v771, 0.0
    %v1387 = vmax.f32 %v1243, 0.0
    %v1388 = vmax.f32 %v775, 0.0
    %v1389 = vmax.f32 %v777, 0.0
    %v1390 = vmax.f32 %v1248, 0.0
    %v1391 = vmax.f32 %v781, 0.0
    %v1392 = vmax.f32 %v783, 0.0
    %v1393 = vmax.f32 %v1253, 0.0
    %v1394 = vmax.f32 %v787, 0.0
    %v1395 = vmax.f32 %v789, 0.0
    %v1396 = vmax.f32 %v1258, 0.0
    %v1397 = vmax.f32 %v793, 0.0
    %v1398 = vmax.f32 %v795, 0.0
    %v1399 = vmax.f32 %v1263, 0.0
    %v1400 = vmax.f32 %v799, 0.0
    %v1401 = vmax.f32 %v801, 0.0
    %v1402 = vmax.f32 %v1268, 0.0
    %v1403 = vmax.f32 %v805, 0.0
    %v1404 = vmax.f32 %v807, 0.0
    %v1405 = vmax.f32 %v1273, 0.0
    %v1406 = vmax.f32 %v811, 0.0
    %v1407 = vmax.f32 %v813, 0.0
    %v1408 = vmax.f32 %v1278, 0.0
    %v1409 = vmax.f32 %v817, 0.0
    %v1410 = vmax.f32 %v819, 0.0
    %v1411 = vmax.f32 %v1283, 0.0
    %v1412 = vmax.f32 %v823, 0.0
    %v1413 = vmax.f32 %v825, 0.0
    %v1414 = vmax.f32 %v1288, 0.0
    %v1415 = vmax.f32 %v829, 0.0
    %v1416 = vmax.f32 %v831, 0.0
    %v1417 = vmax.f32 %v1293, 0.0
    %v1418 = vmax.f32 %v835, 0.0
    %v1419 = vmax.f32 %v837, 0.0
    %v1420 = vmax.f32 %v1298, 0.0
    %v1421 = vmax.f32 %v841, 0.0
    %v1422 = vmax.f32 %v843, 0.0
    %v1423 = vmax.f32 %v1303, 0.0
    %v1424 = vmax.f32 %v847, 0.0
    %v1425 = vmax.f32 %v849, 0.0
    %v1426 = vmax.f32 %v1308, 0.0
    %v1427 = vmax.f32 %v853, 0.0
    %v1428 = vmax.f32 %v855, 0.0
    %v1429 = vmax.f32 %v1313, 0.0
    %v1430 = vmax.f32 %v859, 0.0
    %v1431 = vmax.f32 %v861, 0.0
    %v1432 = vmax.f32 %v1318, 0.0
    %v1433 = vmax.f32 %v865, 0.0
    %v1434 = vmax.f32 %v867, 0.0
    %v1435 = vmax.f32 %v1323, 0.0
    %v1436 = vmax.f32 %v871, 0.0
    %v1437 = vmax.f32 %v873, 0.0
    %v1438 = vmax.f32 %v1328, 0.0
    %v1439 = vmax.f32 %v877, 0.0
    %v1440 = vmax.f32 %v879, 0.0
    %v1441 = vmax.f32 %v1333, 0.0
    %v1442 = vmax.f32 %v883, 0.0
    %v1443 = vmax.f32 %v885, 0.0
    %v1444 = vmax.f32 %v1338, 0.0
    %v1445 = vmax.f32 %v889, 0.0
    %v1446 = vmax.f32 %v891, 0.0
    %v1447 = vmax.f32 %v1343, 0.0
    %v1448 = vmax.f32 %v895, 0.0
    %v1449 = vmax.f32 %v897, 0.0
    %v1450 = vmax.f32 %v1348, 0.0
    %v1451 = vmax.f32 %v901, 0.0
    %v1452 = vmax.f32 %v903, 0.0
    %v1453 = vmax.f32 %v1353, 0.0
    %v1454 = vmax.f32 %v907, 0.0
    %v1455 = vmax.f32 %v909, 0.0
    %v1456 = vmax.f32 %v1358, 0.0
    %v1457 = vld [vmem:[%s3] sm:$0xff]
    %v1458 = vld [vmem:[%s3 + $0x8] sm:$0xff]
    %v1459 = vld [vmem:[%s3 + $0x10] sm:$0xff]
    %v1460 = vld [vmem:[%s3 + $0x18] sm:$0xff]
    %v1461 = vld [vmem:[%s3 + $0x20] sm:$0xff]
    %v1462 = vld [vmem:[%s3 + $0x28] sm:$0xff]
    %v1463 = vld [vmem:[%s3 + $0x30] sm:$0xff]
    %v1464 = vld [vmem:[%s3 + $0x38] sm:$0xff]
    %v1465 = vld [vmem:[%s3 + $0x40] sm:$0xff]
    %v1466 = vld [vmem:[%s3 + $0x48] sm:$0xff]
    %v1467 = vld [vmem:[%s3 + $0x50] sm:$0xff]
    %v1468 = vld [vmem:[%s3 + $0x58] sm:$0xff]
    %v1469 = vld [vmem:[%s3 + $0x60] sm:$0xff]
    %v1470 = vld [vmem:[%s3 + $0x68] sm:$0xff]
    %v1471 = vld [vmem:[%s3 + $0x70] sm:$0xff]
    %v1472 = vld [vmem:[%s3 + $0x78] sm:$0xff]
    %v1473 = vld [vmem:[%s3 + $0x80] sm:$0xff]
    %v1474 = vld [vmem:[%s3 + $0x88] sm:$0xff]
    %v1475 = vld [vmem:[%s3 + $0x90] sm:$0xff]
    %v1476 = vld [vmem:[%s3 + $0x98] sm:$0xff]
    %v1477 = vld [vmem:[%s3 + $0xa0] sm:$0xff]
    %v1478 = vld [vmem:[%s3 + $0xa8] sm:$0xff]
    %v1479 = vld [vmem:[%s3 + $0xb0] sm:$0xff]
    %v1480 = vld [vmem:[%s3 + $0xb8] sm:$0xff]
    %v1481 = vld [vmem:[%s3 + $0xc0] sm:$0xff]
    %v1482 = vld [vmem:[%s3 + $0xc8] sm:$0xff]
    %v1483 = vld [vmem:[%s3 + $0xd0] sm:$0xff]
    %v1484 = vld [vmem:[%s3 + $0xd8] sm:$0xff]
    %v1485 = vld [vmem:[%s3 + $0xe0] sm:$0xff]
    %v1486 = vld [vmem:[%s3 + $0xe8] sm:$0xff]
    %v1487 = vld [vmem:[%s3 + $0xf0] sm:$0xff]
    %v1488 = vld [vmem:[%s3 + $0xf8] sm:$0xff]
    %v1489 = vld [vmem:[%s3 + $0x100] sm:$0xff]
    %v1490 = vld [vmem:[%s3 + $0x108] sm:$0xff]
    %v1491 = vld [vmem:[%s3 + $0x110] sm:$0xff]
    %v1492 = vld [vmem:[%s3 + $0x118] sm:$0xff]
    %v1493 = vld [vmem:[%s3 + $0x120] sm:$0xff]
    %v1494 = vld [vmem:[%s3 + $0x128] sm:$0xff]
    %v1495 = vld [vmem:[%s3 + $0x130] sm:$0xff]
    %v1496 = vld [vmem:[%s3 + $0x138] sm:$0xff]
    %v1497 = vld [vmem:[%s3 + $0x140] sm:$0xff]
    %v1498 = vld [vmem:[%s3 + $0x148] sm:$0xff]
    %v1499 = vld [vmem:[%s3 + $0x150] sm:$0xff]
    %v1500 = vld [vmem:[%s3 + $0x158] sm:$0xff]
    %v1501 = vld [vmem:[%s3 + $0x160] sm:$0xff]
    %v1502 = vld [vmem:[%s3 + $0x168] sm:$0xff]
    %v1503 = vld [vmem:[%s3 + $0x170] sm:$0xff]
    %v1504 = vld [vmem:[%s3 + $0x178] sm:$0xff]
    %v1505 = vld [vmem:[%s3 + $0x180] sm:$0xff]
    %v1506 = vld [vmem:[%s3 + $0x188] sm:$0xff]
    %v1507 = vld [vmem:[%s3 + $0x190] sm:$0xff]
    %v1508 = vld [vmem:[%s3 + $0x198] sm:$0xff]
    %v1509 = vld [vmem:[%s3 + $0x1a0] sm:$0xff]
    %v1510 = vld [vmem:[%s3 + $0x1a8] sm:$0xff]
    %v1511 = vld [vmem:[%s3 + $0x1b0] sm:$0xff]
    %v1512 = vld [vmem:[%s3 + $0x1b8] sm:$0xff]
    %v1513 = vld [vmem:[%s3 + $0x1c0] sm:$0xff]
    %v1514 = vld [vmem:[%s3 + $0x1c8] sm:$0xff]
    %v1515 = vld [vmem:[%s3 + $0x1d0] sm:$0xff]
    %v1516 = vld [vmem:[%s3 + $0x1d8] sm:$0xff]
    %v1517 = vld [vmem:[%s3 + $0x1e0] sm:$0xff]
    %v1518 = vld [vmem:[%s3 + $0x1e8] sm:$0xff]
    %v1519 = vld [vmem:[%s3 + $0x1f0] sm:$0xff]
    %v1520 = vld [vmem:[%s3 + $0x1f8] sm:$0xff]
    %v1521 = vld [vmem:[%s3 + $0x200] sm:$0xff]
    %v1522 = vld [vmem:[%s3 + $0x208] sm:$0xff]
    %v1523 = vld [vmem:[%s3 + $0x210] sm:$0xff]
    %v1524 = vld [vmem:[%s3 + $0x218] sm:$0xff]
    %v1525 = vld [vmem:[%s3 + $0x220] sm:$0xff]
    %v1526 = vld [vmem:[%s3 + $0x228] sm:$0xff]
    %v1527 = vld [vmem:[%s3 + $0x230] sm:$0xff]
    %v1528 = vld [vmem:[%s3 + $0x238] sm:$0xff]
    %v1529 = vld [vmem:[%s3 + $0x240] sm:$0xff]
    %v1530 = vld [vmem:[%s3 + $0x248] sm:$0xff]
    %v1531 = vld [vmem:[%s3 + $0x250] sm:$0xff]
    %v1532 = vld [vmem:[%s3 + $0x258] sm:$0xff]
    %v1533 = vld [vmem:[%s3 + $0x260] sm:$0xff]
    %v1534 = vld [vmem:[%s3 + $0x268] sm:$0xff]
    %v1535 = vld [vmem:[%s3 + $0x270] sm:$0xff]
    %v1536 = vld [vmem:[%s3 + $0x278] sm:$0xff]
    %v1537 = vld [vmem:[%s3 + $0x280] sm:$0xff]
    %v1538 = vld [vmem:[%s3 + $0x288] sm:$0xff]
    %v1539 = vld [vmem:[%s3 + $0x290] sm:$0xff]
    %v1540 = vld [vmem:[%s3 + $0x298] sm:$0xff]
    %v1541 = vld [vmem:[%s3 + $0x2a0] sm:$0xff]
    %v1542 = vld [vmem:[%s3 + $0x2a8] sm:$0xff]
    %v1543 = vld [vmem:[%s3 + $0x2b0] sm:$0xff]
    %v1544 = vld [vmem:[%s3 + $0x2b8] sm:$0xff]
    %v1545 = vld [vmem:[%s3 + $0x2c0] sm:$0xff]
    %v1546 = vld [vmem:[%s3 + $0x2c8] sm:$0xff]
    %v1547 = vld [vmem:[%s3 + $0x2d0] sm:$0xff]
    %v1548 = vld [vmem:[%s3 + $0x2d8] sm:$0xff]
    %v1549 = vld [vmem:[%s3 + $0x2e0] sm:$0xff]
    %v1550 = vld [vmem:[%s3 + $0x2e8] sm:$0xff]
    %v1551 = vld [vmem:[%s3 + $0x2f0] sm:$0xff]
    %v1552 = vld [vmem:[%s3 + $0x2f8] sm:$0xff]
    %v1553 = vld [vmem:[%s4] sm:$0x3]
    %v1555 = vlaneseq
    %v1556 = vshrl.u32 %v1555, 7
    %v1557 = vsub.s32 0, %v1556
    %v1558 = vrot.slane %v1553, %v1557
    %v1559 = vlaneseq
    %v1560 = vshrl.u32 %v1559, 7
    %v1561 = vsub.s32 1, %v1560
    %v1562 = vrot.slane %v1553, %v1561
    %1565 = vmatprep.subr.mxu0 %v1458
    %1566 = vmatpush1.msra.mxu0 %v1457
    %1567 = vmatprep.subr.mxu0 %v1460
    %1568 = vmatpush1.msra.mxu0 %v1459
    %1569 = vmatprep.subr.mxu0 %v1462
    %1570 = vmatpush1.msra.mxu0 %v1461
    %1571 = vmatprep.subr.mxu0 %v1464
    %1572 = vmatpush1.msra.mxu0 %v1463
    %1573 = vmatprep.subr.mxu0 %v1466
    %1574 = vmatpush1.msra.mxu0 %v1465
    %1575 = vmatprep.subr.mxu0 %v1468
    %1576 = vmatpush1.msra.mxu0 %v1467
    %1577 = vmatprep.subr.mxu0 %v1470
    %1578 = vmatpush1.msra.mxu0 %v1469
    %1579 = vmatprep.subr.mxu0 %v1472
    %1580 = vmatpush1.msra.mxu0 %v1471
    %1581 = vmatprep.subr.mxu0 %v1474
    %1582 = vmatpush1.msra.mxu0 %v1473
    %1583 = vmatprep.subr.mxu0 %v1476
    %1584 = vmatpush1.msra.mxu0 %v1475
    %1585 = vmatprep.subr.mxu0 %v1478
    %1586 = vmatpush1.msra.mxu0 %v1477
    %1587 = vmatprep.subr.mxu0 %v1480
    %1588 = vmatpush1.msra.mxu0 %v1479
    %1589 = vmatprep.subr.mxu0 %v1482
    %1590 = vmatpush1.msra.mxu0 %v1481
    %1591 = vmatprep.subr.mxu0 %v1484
    %1592 = vmatpush1.msra.mxu0 %v1483
    %1593 = vmatprep.subr.mxu0 %v1486
    %1594 = vmatpush1.msra.mxu0 %v1485
    %1595 = vmatprep.subr.mxu0 %v1488
    %1596 = vmatpush1.msra.mxu0 %v1487
    %1597 = vmatprep.subr.mxu0 %v1490
    %1598 = vmatpush1.msra.mxu0 %v1489
    %1599 = vmatprep.subr.mxu0 %v1492
    %1600 = vmatpush1.msra.mxu0 %v1491
    %1601 = vmatprep.subr.mxu0 %v1494
    %1602 = vmatpush1.msra.mxu0 %v1493
    %1603 = vmatprep.subr.mxu0 %v1496
    %1604 = vmatpush1.msra.mxu0 %v1495
    %1605 = vmatprep.subr.mxu0 %v1498
    %1606 = vmatpush1.msra.mxu0 %v1497
    %1607 = vmatprep.subr.mxu0 %v1500
    %1608 = vmatpush1.msra.mxu0 %v1499
    %1609 = vmatprep.subr.mxu0 %v1502
    %1610 = vmatpush1.msra.mxu0 %v1501
    %1611 = vmatprep.subr.mxu0 %v1504
    %1612 = vmatpush1.msra.mxu0 %v1503
    %1613 = vmatprep.subr.mxu0 %v1506
    %1614 = vmatpush1.msra.mxu0 %v1505
    %1615 = vmatprep.subr.mxu0 %v1508
    %1616 = vmatpush1.msra.mxu0 %v1507
    %1617 = vmatprep.subr.mxu0 %v1510
    %1618 = vmatpush1.msra.mxu0 %v1509
    %1619 = vmatprep.subr.mxu0 %v1512
    %1620 = vmatpush1.msra.mxu0 %v1511
    %1621 = vmatprep.subr.mxu0 %v1514
    %1622 = vmatpush1.msra.mxu0 %v1513
    %1623 = vmatprep.subr.mxu0 %v1516
    %1624 = vmatpush1.msra.mxu0 %v1515
    %1625 = vmatprep.subr.mxu0 %v1518
    %1626 = vmatpush1.msra.mxu0 %v1517
    %1627 = vmatprep.subr.mxu0 %v1520
    %1628 = vmatpush1.msra.mxu0 %v1519
    %1629 = vmatprep.mubr.f32.mxu0 %v1362
    %1630 = vmatmul.mubr.f32.gmra.mrb[0].mxu0 %v1361
    %v1631 = vpop.f32.mrb[0].mxu0
    %v1632 = vadd.f32 %v1558, %v1631
    %v1633 = vpop.f32.mrb[0].mxu0
    %v1634 = vadd.f32 %v1562, %v1633
    %1635 = vmatprep.mubr.f32.mxu0 %v1365
    %1636 = vmatmul.mubr.f32.gmra.mrb[0].mxu0 %v1364
    %v1637 = vpop.f32.mrb[0].mxu0
    %v1638 = vadd.f32 %v1558, %v1637
    %v1639 = vpop.f32.mrb[0].mxu0
    %v1640 = vadd.f32 %v1562, %v1639
    %1641 = vmatprep.mubr.f32.mxu0 %v1368
    %1642 = vmatmul.mubr.f32.gmra.mrb[0].mxu0 %v1367
    %v1643 = vpop.f32.mrb[0].mxu0
    %v1644 = vadd.f32 %v1558, %v1643
    %v1645 = vpop.f32.mrb[0].mxu0
    %v1646 = vadd.f32 %v1562, %v1645
    %1647 = vmatprep.mubr.f32.mxu0 %v1371
    %1648 = vmatmul.mubr.f32.gmra.mrb[0].mxu0 %v1370
    %v1649 = vpop.f32.mrb[0].mxu0
    %v1650 = vadd.f32 %v1558, %v1649
    %v1651 = vpop.f32.mrb[0].mxu0
    %v1652 = vadd.f32 %v1562, %v1651
    %1653 = vmatprep.mubr.f32.mxu0 %v1374
    %1654 = vmatmul.mubr.f32.gmra.mrb[0].mxu0 %v1373
    %v1655 = vpop.f32.mrb[0].mxu0
    %v1656 = vadd.f32 %v1558, %v1655
    %v1657 = vpop.f32.mrb[0].mxu0
    %v1658 = vadd.f32 %v1562, %v1657
    %1659 = vmatprep.mubr.f32.mxu0 %v1377
    %1660 = vmatmul.mubr.f32.gmra.mrb[0].mxu0 %v1376
    %v1661 = vpop.f32.mrb[0].mxu0
    %v1662 = vadd.f32 %v1558, %v1661
    %v1663 = vpop.f32.mrb[0].mxu0
    %v1664 = vadd.f32 %v1562, %v1663
    %1665 = vmatprep.mubr.f32.mxu0 %v1380
    %1666 = vmatmul.mubr.f32.gmra.mrb[0].mxu0 %v1379
    %v1667 = vpop.f32.mrb[0].mxu0
    %v1668 = vadd.f32 %v1558, %v1667
    %v1669 = vpop.f32.mrb[0].mxu0
    %v1670 = vadd.f32 %v1562, %v1669
    %1671 = vmatprep.mubr.f32.mxu0 %v1383
    %1672 = vmatmul.mubr.f32.gmra.mrb[0].mxu0 %v1382
    %v1673 = vpop.f32.mrb[0].mxu0
    %v1674 = vadd.f32 %v1558, %v1673
    %v1675 = vpop.f32.mrb[0].mxu0
    %v1676 = vadd.f32 %v1562, %v1675
    %1677 = vmatprep.mubr.f32.mxu0 %v1386
    %1678 = vmatmul.mubr.f32.gmra.mrb[0].mxu0 %v1385
    %v1679 = vpop.f32.mrb[0].mxu0
    %v1680 = vadd.f32 %v1558, %v1679
    %v1681 = vpop.f32.mrb[0].mxu0
    %v1682 = vadd.f32 %v1562, %v1681
    %1683 = vmatprep.mubr.f32.mxu0 %v1389
    %1684 = vmatmul.mubr.f32.gmra.mrb[0].mxu0 %v1388
    %v1685 = vpop.f32.mrb[0].mxu0
    %v1686 = vadd.f32 %v1558, %v1685
    %v1687 = vpop.f32.mrb[0].mxu0
    %v1688 = vadd.f32 %v1562, %v1687
    %1689 = vmatprep.mubr.f32.mxu0 %v1392
    %1690 = vmatmul.mubr.f32.gmra.mrb[0].mxu0 %v1391
    %v1691 = vpop.f32.mrb[0].mxu0
    %v1692 = vadd.f32 %v1558, %v1691
    %v1693 = vpop.f32.mrb[0].mxu0
    %v1694 = vadd.f32 %v1562, %v1693
    %1695 = vmatprep.mubr.f32.mxu0 %v1395
    %1696 = vmatmul.mubr.f32.gmra.mrb[0].mxu0 %v1394
    %v1697 = vpop.f32.mrb[0].mxu0
    %v1698 = vadd.f32 %v1558, %v1697
    %v1699 = vpop.f32.mrb[0].mxu0
    %v1700 = vadd.f32 %v1562, %v1699
    %1701 = vmatprep.mubr.f32.mxu0 %v1398
    %1702 = vmatmul.mubr.f32.gmra.mrb[0].mxu0 %v1397
    %v1703 = vpop.f32.mrb[0].mxu0
    %v1704 = vadd.f32 %v1558, %v1703
    %v1705 = vpop.f32.mrb[0].mxu0
    %v1706 = vadd.f32 %v1562, %v1705
    %1707 = vmatprep.mubr.f32.mxu0 %v1401
    %1708 = vmatmul.mubr.f32.gmra.mrb[0].mxu0 %v1400
    %v1709 = vpop.f32.mrb[0].mxu0
    %v1710 = vadd.f32 %v1558, %v1709
    %v1711 = vpop.f32.mrb[0].mxu0
    %v1712 = vadd.f32 %v1562, %v1711
    %1713 = vmatprep.mubr.f32.mxu0 %v1404
    %1714 = vmatmul.mubr.f32.gmra.mrb[0].mxu0 %v1403
    %v1715 = vpop.f32.mrb[0].mxu0
    %v1716 = vadd.f32 %v1558, %v1715
    %v1717 = vpop.f32.mrb[0].mxu0
    %v1718 = vadd.f32 %v1562, %v1717
    %1719 = vmatprep.mubr.f32.mxu0 %v1407
    %1720 = vmatmul.mubr.f32.gmra.mrb[0].mxu0 %v1406
    %v1721 = vpop.f32.mrb[0].mxu0
    %v1722 = vadd.f32 %v1558, %v1721
    %v1723 = vpop.f32.mrb[0].mxu0
    %v1724 = vadd.f32 %v1562, %v1723
    %1725 = vmatprep.mubr.f32.mxu0 %v1410
    %1726 = vmatmul.mubr.f32.gmra.mrb[0].mxu0 %v1409
    %v1727 = vpop.f32.mrb[0].mxu0
    %v1728 = vadd.f32 %v1558, %v1727
    %v1729 = vpop.f32.mrb[0].mxu0
    %v1730 = vadd.f32 %v1562, %v1729
    %1731 = vmatprep.mubr.f32.mxu0 %v1413
    %1732 = vmatmul.mubr.f32.gmra.mrb[0].mxu0 %v1412
    %v1733 = vpop.f32.mrb[0].mxu0
    %v1734 = vadd.f32 %v1558, %v1733
    %v1735 = vpop.f32.mrb[0].mxu0
    %v1736 = vadd.f32 %v1562, %v1735
    %1737 = vmatprep.mubr.f32.mxu0 %v1416
    %1738 = vmatmul.mubr.f32.gmra.mrb[0].mxu0 %v1415
    %v1739 = vpop.f32.mrb[0].mxu0
    %v1740 = vadd.f32 %v1558, %v1739
    %v1741 = vpop.f32.mrb[0].mxu0
    %v1742 = vadd.f32 %v1562, %v1741
    %1743 = vmatprep.mubr.f32.mxu0 %v1419
    %1744 = vmatmul.mubr.f32.gmra.mrb[0].mxu0 %v1418
    %v1745 = vpop.f32.mrb[0].mxu0
    %v1746 = vadd.f32 %v1558, %v1745
    %v1747 = vpop.f32.mrb[0].mxu0
    %v1748 = vadd.f32 %v1562, %v1747
    %1749 = vmatprep.mubr.f32.mxu0 %v1422
    %1750 = vmatmul.mubr.f32.gmra.mrb[0].mxu0 %v1421
    %v1751 = vpop.f32.mrb[0].mxu0
    %v1752 = vadd.f32 %v1558, %v1751
    %v1753 = vpop.f32.mrb[0].mxu0
    %v1754 = vadd.f32 %v1562, %v1753
    %1755 = vmatprep.mubr.f32.mxu0 %v1425
    %1756 = vmatmul.mubr.f32.gmra.mrb[0].mxu0 %v1424
    %v1757 = vpop.f32.mrb[0].mxu0
    %v1758 = vadd.f32 %v1558, %v1757
    %v1759 = vpop.f32.mrb[0].mxu0
    %v1760 = vadd.f32 %v1562, %v1759
    %1761 = vmatprep.mubr.f32.mxu0 %v1428
    %1762 = vmatmul.mubr.f32.gmra.mrb[0].mxu0 %v1427
    %v1763 = vpop.f32.mrb[0].mxu0
    %v1764 = vadd.f32 %v1558, %v1763
    %v1765 = vpop.f32.mrb[0].mxu0
    %v1766 = vadd.f32 %v1562, %v1765
    %1767 = vmatprep.mubr.f32.mxu0 %v1431
    %1768 = vmatmul.mubr.f32.gmra.mrb[0].mxu0 %v1430
    %v1769 = vpop.f32.mrb[0].mxu0
    %v1770 = vadd.f32 %v1558, %v1769
    %v1771 = vpop.f32.mrb[0].mxu0
    %v1772 = vadd.f32 %v1562, %v1771
    %1773 = vmatprep.mubr.f32.mxu0 %v1434
    %1774 = vmatmul.mubr.f32.gmra.mrb[0].mxu0 %v1433
    %v1775 = vpop.f32.mrb[0].mxu0
    %v1776 = vadd.f32 %v1558, %v1775
    %v1777 = vpop.f32.mrb[0].mxu0
    %v1778 = vadd.f32 %v1562, %v1777
    %1779 = vmatprep.mubr.f32.mxu0 %v1437
    %1780 = vmatmul.mubr.f32.gmra.mrb[0].mxu0 %v1436
    %v1781 = vpop.f32.mrb[0].mxu0
    %v1782 = vadd.f32 %v1558, %v1781
    %v1783 = vpop.f32.mrb[0].mxu0
    %v1784 = vadd.f32 %v1562, %v1783
    %1785 = vmatprep.mubr.f32.mxu0 %v1440
    %1786 = vmatmul.mubr.f32.gmra.mrb[0].mxu0 %v1439
    %v1787 = vpop.f32.mrb[0].mxu0
    %v1788 = vadd.f32 %v1558, %v1787
    %v1789 = vpop.f32.mrb[0].mxu0
    %v1790 = vadd.f32 %v1562, %v1789
    %1791 = vmatprep.mubr.f32.mxu0 %v1443
    %1792 = vmatmul.mubr.f32.gmra.mrb[0].mxu0 %v1442
    %v1793 = vpop.f32.mrb[0].mxu0
    %v1794 = vadd.f32 %v1558, %v1793
    %v1795 = vpop.f32.mrb[0].mxu0
    %v1796 = vadd.f32 %v1562, %v1795
    %1797 = vmatprep.mubr.f32.mxu0 %v1446
    %1798 = vmatmul.mubr.f32.gmra.mrb[0].mxu0 %v1445
    %v1799 = vpop.f32.mrb[0].mxu0
    %v1800 = vadd.f32 %v1558, %v1799
    %v1801 = vpop.f32.mrb[0].mxu0
    %v1802 = vadd.f32 %v1562, %v1801
    %1803 = vmatprep.mubr.f32.mxu0 %v1449
    %1804 = vmatmul.mubr.f32.gmra.mrb[0].mxu0 %v1448
    %v1805 = vpop.f32.mrb[0].mxu0
    %v1806 = vadd.f32 %v1558, %v1805
    %v1807 = vpop.f32.mrb[0].mxu0
    %v1808 = vadd.f32 %v1562, %v1807
    %1809 = vmatprep.mubr.f32.mxu0 %v1452
    %1810 = vmatmul.mubr.f32.gmra.mrb[0].mxu0 %v1451
    %v1811 = vpop.f32.mrb[0].mxu0
    %v1812 = vadd.f32 %v1558, %v1811
    %v1813 = vpop.f32.mrb[0].mxu0
    %v1814 = vadd.f32 %v1562, %v1813
    %1815 = vmatprep.mubr.f32.mxu0 %v1455
    %1816 = vmatmul.mubr.f32.gmra.mrb[0].mxu0 %v1454
    %v1817 = vpop.f32.mrb[0].mxu0
    %v1818 = vadd.f32 %v1558, %v1817
    %v1819 = vpop.f32.mrb[0].mxu0
    %v1820 = vadd.f32 %v1562, %v1819
    %1821 = vdwg.mxu0
    %1822 = vmatprep.subr.mxu0 %v1522
    %1823 = vmatpush1.msra.mxu0 %v1521
    %1824 = vmatprep.subr.mxu0 %v1524
    %1825 = vmatpush1.msra.mxu0 %v1523
    %1826 = vmatprep.subr.mxu0 %v1526
    %1827 = vmatpush1.msra.mxu0 %v1525
    %1828 = vmatprep.subr.mxu0 %v1528
    %1829 = vmatpush1.msra.mxu0 %v1527
    %1830 = vmatprep.subr.mxu0 %v1530
    %1831 = vmatpush1.msra.mxu0 %v1529
    %1832 = vmatprep.subr.mxu0 %v1532
    %1833 = vmatpush1.msra.mxu0 %v1531
    %1834 = vmatprep.subr.mxu0 %v1534
    %1835 = vmatpush1.msra.mxu0 %v1533
    %1836 = vmatprep.subr.mxu0 %v1536
    %1837 = vmatpush1.msra.mxu0 %v1535
    %1838 = vmatprep.subr.mxu0 %v1538
    %1839 = vmatpush1.msra.mxu0 %v1537
    %1840 = vmatprep.subr.mxu0 %v1540
    %1841 = vmatpush1.msra.mxu0 %v1539
    %1842 = vmatprep.subr.mxu0 %v1542
    %1843 = vmatpush1.msra.mxu0 %v1541
    %1844 = vmatprep.subr.mxu0 %v1544
    %1845 = vmatpush1.msra.mxu0 %v1543
    %1846 = vmatprep.subr.mxu0 %v1546
    %1847 = vmatpush1.msra.mxu0 %v1545
    %1848 = vmatprep.subr.mxu0 %v1548
    %1849 = vmatpush1.msra.mxu0 %v1547
    %1850 = vmatprep.subr.mxu0 %v1550
    %1851 = vmatpush1.msra.mxu0 %v1549
    %1852 = vmatprep.subr.mxu0 %v1552
    %1853 = vmatpush1.msra.mxu0 %v1551
    %1854 = vmatprep.subr.mxu0 0.0
    %1855 = vmatpush1.msra.mxu0 0.0
    %1856 = vmatprep.subr.mxu0 0.0
    %1857 = vmatpush1.msra.mxu0 0.0
    %1858 = vmatprep.subr.mxu0 0.0
    %1859 = vmatpush1.msra.mxu0 0.0
    %1860 = vmatprep.subr.mxu0 0.0
    %1861 = vmatpush1.msra.mxu0 0.0
    %1862 = vmatprep.subr.mxu0 0.0
    %1863 = vmatpush1.msra.mxu0 0.0
    %1864 = vmatprep.subr.mxu0 0.0
    %1865 = vmatpush1.msra.mxu0 0.0
    %1866 = vmatprep.subr.mxu0 0.0
    %1867 = vmatpush1.msra.mxu0 0.0
    %1868 = vmatprep.subr.mxu0 0.0
    %1869 = vmatpush1.msra.mxu0 0.0
    %1870 = vmatprep.subr.mxu0 0.0
    %1871 = vmatpush1.msra.mxu0 0.0
    %1872 = vmatprep.subr.mxu0 0.0
    %1873 = vmatpush1.msra.mxu0 0.0
    %1874 = vmatprep.subr.mxu0 0.0
    %1875 = vmatpush1.msra.mxu0 0.0
    %1876 = vmatprep.subr.mxu0 0.0
    %1877 = vmatpush1.msra.mxu0 0.0
    %1878 = vmatprep.subr.mxu0 0.0
    %1879 = vmatpush1.msra.mxu0 0.0
    %1880 = vmatprep.subr.mxu0 0.0
    %1881 = vmatpush1.msra.mxu0 0.0
    %1882 = vmatprep.subr.mxu0 0.0
    %1883 = vmatpush1.msra.mxu0 0.0
    %1884 = vmatprep.subr.mxu0 0.0
    %1885 = vmatpush1.msra.mxu0 0.0
    %1886 = vmatprep.mubr.f32.mxu0 0.0
    %1887 = vmatmul.mubr.f32.gmra.mrb[0].mxu0 %v1363
    %v1888 = vpop.f32.mrb[0].mxu0
    %v1889 = vadd.f32 %v1632, %v1888
    %v1890 = vpop.f32.mrb[0].mxu0
    %v1891 = vadd.f32 %v1634, %v1890
    %1892 = vmatprep.mubr.f32.mxu0 0.0
    %1893 = vmatmul.mubr.f32.gmra.mrb[0].mxu0 %v1366
    %v1894 = vpop.f32.mrb[0].mxu0
    %v1895 = vadd.f32 %v1638, %v1894
    %v1896 = vpop.f32.mrb[0].mxu0
    %v1897 = vadd.f32 %v1640, %v1896
    %1898 = vmatprep.mubr.f32.mxu0 0.0
    %1899 = vmatmul.mubr.f32.gmra.mrb[0].mxu0 %v1369
    %v1900 = vpop.f32.mrb[0].mxu0
    %v1901 = vadd.f32 %v1644, %v1900
    %v1902 = vpop.f32.mrb[0].mxu0
    %v1903 = vadd.f32 %v1646, %v1902
    %1904 = vmatprep.mubr.f32.mxu0 0.0
    %1905 = vmatmul.mubr.f32.gmra.mrb[0].mxu0 %v1372
    %v1906 = vpop.f32.mrb[0].mxu0
    %v1907 = vadd.f32 %v1650, %v1906
    %v1908 = vpop.f32.mrb[0].mxu0
    %v1909 = vadd.f32 %v1652, %v1908
    %1910 = vmatprep.mubr.f32.mxu0 0.0
    %1911 = vmatmul.mubr.f32.gmra.mrb[0].mxu0 %v1375
    %v1912 = vpop.f32.mrb[0].mxu0
    %v1913 = vadd.f32 %v1656, %v1912
    %v1914 = vpop.f32.mrb[0].mxu0
    %v1915 = vadd.f32 %v1658, %v1914
    %1916 = vmatprep.mubr.f32.mxu0 0.0
    %1917 = vmatmul.mubr.f32.gmra.mrb[0].mxu0 %v1378
    %v1918 = vpop.f32.mrb[0].mxu0
    %v1919 = vadd.f32 %v1662, %v1918
    %v1920 = vpop.f32.mrb[0].mxu0
    %v1921 = vadd.f32 %v1664, %v1920
    %1922 = vmatprep.mubr.f32.mxu0 0.0
    %1923 = vmatmul.mubr.f32.gmra.mrb[0].mxu0 %v1381
    %v1924 = vpop.f32.mrb[0].mxu0
    %v1925 = vadd.f32 %v1668, %v1924
    %v1926 = vpop.f32.mrb[0].mxu0
    %v1927 = vadd.f32 %v1670, %v1926
    %1928 = vmatprep.mubr.f32.mxu0 0.0
    %1929 = vmatmul.mubr.f32.gmra.mrb[0].mxu0 %v1384
    %v1930 = vpop.f32.mrb[0].mxu0
    %v1931 = vadd.f32 %v1674, %v1930
    %v1932 = vpop.f32.mrb[0].mxu0
    %v1933 = vadd.f32 %v1676, %v1932
    %1934 = vmatprep.mubr.f32.mxu0 0.0
    %1935 = vmatmul.mubr.f32.gmra.mrb[0].mxu0 %v1387
    %v1936 = vpop.f32.mrb[0].mxu0
    %v1937 = vadd.f32 %v1680, %v1936
    %v1938 = vpop.f32.mrb[0].mxu0
    %v1939 = vadd.f32 %v1682, %v1938
    %1940 = vmatprep.mubr.f32.mxu0 0.0
    %1941 = vmatmul.mubr.f32.gmra.mrb[0].mxu0 %v1390
    %v1942 = vpop.f32.mrb[0].mxu0
    %v1943 = vadd.f32 %v1686, %v1942
    %v1944 = vpop.f32.mrb[0].mxu0
    %v1945 = vadd.f32 %v1688, %v1944
    %1946 = vmatprep.mubr.f32.mxu0 0.0
    %1947 = vmatmul.mubr.f32.gmra.mrb[0].mxu0 %v1393
    %v1948 = vpop.f32.mrb[0].mxu0
    %v1949 = vadd.f32 %v1692, %v1948
    %v1950 = vpop.f32.mrb[0].mxu0
    %v1951 = vadd.f32 %v1694, %v1950
    %1952 = vmatprep.mubr.f32.mxu0 0.0
    %1953 = vmatmul.mubr.f32.gmra.mrb[0].mxu0 %v1396
    %v1954 = vpop.f32.mrb[0].mxu0
    %v1955 = vadd.f32 %v1698, %v1954
    %v1956 = vpop.f32.mrb[0].mxu0
    %v1957 = vadd.f32 %v1700, %v1956
    %1958 = vmatprep.mubr.f32.mxu0 0.0
    %1959 = vmatmul.mubr.f32.gmra.mrb[0].mxu0 %v1399
    %v1960 = vpop.f32.mrb[0].mxu0
    %v1961 = vadd.f32 %v1704, %v1960
    %v1962 = vpop.f32.mrb[0].mxu0
    %v1963 = vadd.f32 %v1706, %v1962
    %1964 = vmatprep.mubr.f32.mxu0 0.0
    %1965 = vmatmul.mubr.f32.gmra.mrb[0].mxu0 %v1402
    %v1966 = vpop.f32.mrb[0].mxu0
    %v1967 = vadd.f32 %v1710, %v1966
    %v1968 = vpop.f32.mrb[0].mxu0
    %v1969 = vadd.f32 %v1712, %v1968
    %1970 = vmatprep.mubr.f32.mxu0 0.0
    %1971 = vmatmul.mubr.f32.gmra.mrb[0].mxu0 %v1405
    %v1972 = vpop.f32.mrb[0].mxu0
    %v1973 = vadd.f32 %v1716, %v1972
    %v1974 = vpop.f32.mrb[0].mxu0
    %v1975 = vadd.f32 %v1718, %v1974
    %1976 = vmatprep.mubr.f32.mxu0 0.0
    %1977 = vmatmul.mubr.f32.gmra.mrb[0].mxu0 %v1408
    %v1978 = vpop.f32.mrb[0].mxu0
    %v1979 = vadd.f32 %v1722, %v1978
    %v1980 = vpop.f32.mrb[0].mxu0
    %v1981 = vadd.f32 %v1724, %v1980
    %1982 = vmatprep.mubr.f32.mxu0 0.0
    %1983 = vmatmul.mubr.f32.gmra.mrb[0].mxu0 %v1411
    %v1984 = vpop.f32.mrb[0].mxu0
    %v1985 = vadd.f32 %v1728, %v1984
    %v1986 = vpop.f32.mrb[0].mxu0
    %v1987 = vadd.f32 %v1730, %v1986
    %1988 = vmatprep.mubr.f32.mxu0 0.0
    %1989 = vmatmul.mubr.f32.gmra.mrb[0].mxu0 %v1414
    %v1990 = vpop.f32.mrb[0].mxu0
    %v1991 = vadd.f32 %v1734, %v1990
    %v1992 = vpop.f32.mrb[0].mxu0
    %v1993 = vadd.f32 %v1736, %v1992
    %1994 = vmatprep.mubr.f32.mxu0 0.0
    %1995 = vmatmul.mubr.f32.gmra.mrb[0].mxu0 %v1417
    %v1996 = vpop.f32.mrb[0].mxu0
    %v1997 = vadd.f32 %v1740, %v1996
    %v1998 = vpop.f32.mrb[0].mxu0
    %v1999 = vadd.f32 %v1742, %v1998
    %2000 = vmatprep.mubr.f32.mxu0 0.0
    %2001 = vmatmul.mubr.f32.gmra.mrb[0].mxu0 %v1420
    %v2002 = vpop.f32.mrb[0].mxu0
    %v2003 = vadd.f32 %v1746, %v2002
    %v2004 = vpop.f32.mrb[0].mxu0
    %v2005 = vadd.f32 %v1748, %v2004
    %2006 = vmatprep.mubr.f32.mxu0 0.0
    %2007 = vmatmul.mubr.f32.gmra.mrb[0].mxu0 %v1423
    %v2008 = vpop.f32.mrb[0].mxu0
    %v2009 = vadd.f32 %v1752, %v2008
    %v2010 = vpop.f32.mrb[0].mxu0
    %v2011 = vadd.f32 %v1754, %v2010
    %2012 = vmatprep.mubr.f32.mxu0 0.0
    %2013 = vmatmul.mubr.f32.gmra.mrb[0].mxu0 %v1426
    %v2014 = vpop.f32.mrb[0].mxu0
    %v2015 = vadd.f32 %v1758, %v2014
    %v2016 = vpop.f32.mrb[0].mxu0
    %v2017 = vadd.f32 %v1760, %v2016
    %2018 = vmatprep.mubr.f32.mxu0 0.0
    %2019 = vmatmul.mubr.f32.gmra.mrb[0].mxu0 %v1429
    %v2020 = vpop.f32.mrb[0].mxu0
    %v2021 = vadd.f32 %v1764, %v2020
    %v2022 = vpop.f32.mrb[0].mxu0
    %v2023 = vadd.f32 %v1766, %v2022
    %2024 = vmatprep.mubr.f32.mxu0 0.0
    %2025 = vmatmul.mubr.f32.gmra.mrb[0].mxu0 %v1432
    %v2026 = vpop.f32.mrb[0].mxu0
    %v2027 = vadd.f32 %v1770, %v2026
    %v2028 = vpop.f32.mrb[0].mxu0
    %v2029 = vadd.f32 %v1772, %v2028
    %2030 = vmatprep.mubr.f32.mxu0 0.0
    %2031 = vmatmul.mubr.f32.gmra.mrb[0].mxu0 %v1435
    %v2032 = vpop.f32.mrb[0].mxu0
    %v2033 = vadd.f32 %v1776, %v2032
    %v2034 = vpop.f32.mrb[0].mxu0
    %v2035 = vadd.f32 %v1778, %v2034
    %2036 = vmatprep.mubr.f32.mxu0 0.0
    %2037 = vmatmul.mubr.f32.gmra.mrb[0].mxu0 %v1438
    %v2038 = vpop.f32.mrb[0].mxu0
    %v2039 = vadd.f32 %v1782, %v2038
    %v2040 = vpop.f32.mrb[0].mxu0
    %v2041 = vadd.f32 %v1784, %v2040
    %2042 = vmatprep.mubr.f32.mxu0 0.0
    %2043 = vmatmul.mubr.f32.gmra.mrb[0].mxu0 %v1441
    %v2044 = vpop.f32.mrb[0].mxu0
    %v2045 = vadd.f32 %v1788, %v2044
    %v2046 = vpop.f32.mrb[0].mxu0
    %v2047 = vadd.f32 %v1790, %v2046
    %2048 = vmatprep.mubr.f32.mxu0 0.0
    %2049 = vmatmul.mubr.f32.gmra.mrb[0].mxu0 %v1444
    %v2050 = vpop.f32.mrb[0].mxu0
    %v2051 = vadd.f32 %v1794, %v2050
    %v2052 = vpop.f32.mrb[0].mxu0
    %v2053 = vadd.f32 %v1796, %v2052
    %2054 = vmatprep.mubr.f32.mxu0 0.0
    %2055 = vmatmul.mubr.f32.gmra.mrb[0].mxu0 %v1447
    %v2056 = vpop.f32.mrb[0].mxu0
    %v2057 = vadd.f32 %v1800, %v2056
    %v2058 = vpop.f32.mrb[0].mxu0
    %v2059 = vadd.f32 %v1802, %v2058
    %2060 = vmatprep.mubr.f32.mxu0 0.0
    %2061 = vmatmul.mubr.f32.gmra.mrb[0].mxu0 %v1450
    %v2062 = vpop.f32.mrb[0].mxu0
    %v2063 = vadd.f32 %v1806, %v2062
    %v2064 = vpop.f32.mrb[0].mxu0
    %v2065 = vadd.f32 %v1808, %v2064
    %2066 = vmatprep.mubr.f32.mxu0 0.0
    %2067 = vmatmul.mubr.f32.gmra.mrb[0].mxu0 %v1453
    %v2068 = vpop.f32.mrb[0].mxu0
    %v2069 = vadd.f32 %v1812, %v2068
    %v2070 = vpop.f32.mrb[0].mxu0
    %v2071 = vadd.f32 %v1814, %v2070
    %2072 = vmatprep.mubr.f32.mxu0 0.0
    %2073 = vmatmul.mubr.f32.gmra.mrb[0].mxu0 %v1456
    %v2074 = vpop.f32.mrb[0].mxu0
    %v2075 = vadd.f32 %v1818, %v2074
    %v2076 = vpop.f32.mrb[0].mxu0
    %v2077 = vadd.f32 %v1820, %v2076
    %2078 = vdwg.mxu0
    %v2079 = vmax.f32 %v1889, 0.0
    %v2080 = vmax.f32 %v1891, 0.0
    %v2081 = vmax.f32 %v1895, 0.0
    %v2082 = vmax.f32 %v1897, 0.0
    %v2083 = vmax.f32 %v1901, 0.0
    %v2084 = vmax.f32 %v1903, 0.0
    %v2085 = vmax.f32 %v1907, 0.0
    %v2086 = vmax.f32 %v1909, 0.0
    %v2087 = vmax.f32 %v1913, 0.0
    %v2088 = vmax.f32 %v1915, 0.0
    %v2089 = vmax.f32 %v1919, 0.0
    %v2090 = vmax.f32 %v1921, 0.0
    %v2091 = vmax.f32 %v1925, 0.0
    %v2092 = vmax.f32 %v1927, 0.0
    %v2093 = vmax.f32 %v1931, 0.0
    %v2094 = vmax.f32 %v1933, 0.0
    %v2095 = vmax.f32 %v1937, 0.0
    %v2096 = vmax.f32 %v1939, 0.0
    %v2097 = vmax.f32 %v1943, 0.0
    %v2098 = vmax.f32 %v1945, 0.0
    %v2099 = vmax.f32 %v1949, 0.0
    %v2100 = vmax.f32 %v1951, 0.0
    %v2101 = vmax.f32 %v1955, 0.0
    %v2102 = vmax.f32 %v1957, 0.0
    %v2103 = vmax.f32 %v1961, 0.0
    %v2104 = vmax.f32 %v1963, 0.0
    %v2105 = vmax.f32 %v1967, 0.0
    %v2106 = vmax.f32 %v1969, 0.0
    %v2107 = vmax.f32 %v1973, 0.0
    %v2108 = vmax.f32 %v1975, 0.0
    %v2109 = vmax.f32 %v1979, 0.0
    %v2110 = vmax.f32 %v1981, 0.0
    %v2111 = vmax.f32 %v1985, 0.0
    %v2112 = vmax.f32 %v1987, 0.0
    %v2113 = vmax.f32 %v1991, 0.0
    %v2114 = vmax.f32 %v1993, 0.0
    %v2115 = vmax.f32 %v1997, 0.0
    %v2116 = vmax.f32 %v1999, 0.0
    %v2117 = vmax.f32 %v2003, 0.0
    %v2118 = vmax.f32 %v2005, 0.0
    %v2119 = vmax.f32 %v2009, 0.0
    %v2120 = vmax.f32 %v2011, 0.0
    %v2121 = vmax.f32 %v2015, 0.0
    %v2122 = vmax.f32 %v2017, 0.0
    %v2123 = vmax.f32 %v2021, 0.0
    %v2124 = vmax.f32 %v2023, 0.0
    %v2125 = vmax.f32 %v2027, 0.0
    %v2126 = vmax.f32 %v2029, 0.0
    %v2127 = vmax.f32 %v2033, 0.0
    %v2128 = vmax.f32 %v2035, 0.0
    %v2129 = vmax.f32 %v2039, 0.0
    %v2130 = vmax.f32 %v2041, 0.0
    %v2131 = vmax.f32 %v2045, 0.0
    %v2132 = vmax.f32 %v2047, 0.0
    %v2133 = vmax.f32 %v2051, 0.0
    %v2134 = vmax.f32 %v2053, 0.0
    %v2135 = vmax.f32 %v2057, 0.0
    %v2136 = vmax.f32 %v2059, 0.0
    %v2137 = vmax.f32 %v2063, 0.0
    %v2138 = vmax.f32 %v2065, 0.0
    %v2139 = vmax.f32 %v2069, 0.0
    %v2140 = vmax.f32 %v2071, 0.0
    %v2141 = vmax.f32 %v2075, 0.0
    %v2142 = vmax.f32 %v2077, 0.0
    %v2143 = vld [vmem:[%s5] sm:$0xff]
    %v2144 = vld [vmem:[%s5 + $0x8] sm:$0xff]
    %v2145 = vld [vmem:[%s5 + $0x10] sm:$0xff]
    %v2146 = vld [vmem:[%s5 + $0x18] sm:$0xff]
    %v2147 = vld [vmem:[%s5 + $0x20] sm:$0xff]
    %v2148 = vld [vmem:[%s5 + $0x28] sm:$0xff]
    %v2149 = vld [vmem:[%s5 + $0x30] sm:$0xff]
    %v2150 = vld [vmem:[%s5 + $0x38] sm:$0xff]
    %v2151 = vld [vmem:[%s5 + $0x40] sm:$0xff]
    %v2152 = vld [vmem:[%s5 + $0x48] sm:$0xff]
    %v2153 = vld [vmem:[%s5 + $0x50] sm:$0xff]
    %v2154 = vld [vmem:[%s5 + $0x58] sm:$0xff]
    %v2155 = vld [vmem:[%s5 + $0x60] sm:$0xff]
    %v2156 = vld [vmem:[%s5 + $0x68] sm:$0xff]
    %v2157 = vld [vmem:[%s5 + $0x70] sm:$0xff]
    %v2158 = vld [vmem:[%s5 + $0x78] sm:$0xff]
    %v2159 = vld [vmem:[%s5 + $0x80] sm:$0xff]
    %v2160 = vld [vmem:[%s5 + $0x88] sm:$0xff]
    %v2161 = vld [vmem:[%s5 + $0x90] sm:$0xff]
    %v2162 = vld [vmem:[%s5 + $0x98] sm:$0xff]
    %v2163 = vld [vmem:[%s5 + $0xa0] sm:$0xff]
    %v2164 = vld [vmem:[%s5 + $0xa8] sm:$0xff]
    %v2165 = vld [vmem:[%s5 + $0xb0] sm:$0xff]
    %v2166 = vld [vmem:[%s5 + $0xb8] sm:$0xff]
    %v2167 = vld [vmem:[%s5 + $0xc0] sm:$0xff]
    %v2168 = vld [vmem:[%s5 + $0xc8] sm:$0xff]
    %v2169 = vld [vmem:[%s5 + $0xd0] sm:$0xff]
    %v2170 = vld [vmem:[%s5 + $0xd8] sm:$0xff]
    %v2171 = vld [vmem:[%s5 + $0xe0] sm:$0xff]
    %v2172 = vld [vmem:[%s5 + $0xe8] sm:$0xff]
    %v2173 = vld [vmem:[%s5 + $0xf0] sm:$0xff]
    %v2174 = vld [vmem:[%s5 + $0xf8] sm:$0xff]
    %v2175 = vld [vmem:[%s6] sm:$0x1]
    %v2177 = vlaneseq
    %v2178 = vshrl.u32 %v2177, 7
    %v2179 = vsub.s32 0, %v2178
    %v2180 = vrot.slane %v2175, %v2179
    %2182 = vmatprep.subr.mxu0 0.0
    %2183 = vmatpush1.msra.mxu0 %v2143
    %2184 = vmatprep.subr.mxu0 0.0
    %2185 = vmatpush1.msra.mxu0 %v2144
    %2186 = vmatprep.subr.mxu0 0.0
    %2187 = vmatpush1.msra.mxu0 %v2145
    %2188 = vmatprep.subr.mxu0 0.0
    %2189 = vmatpush1.msra.mxu0 %v2146
    %2190 = vmatprep.subr.mxu0 0.0
    %2191 = vmatpush1.msra.mxu0 %v2147
    %2192 = vmatprep.subr.mxu0 0.0
    %2193 = vmatpush1.msra.mxu0 %v2148
    %2194 = vmatprep.subr.mxu0 0.0
    %2195 = vmatpush1.msra.mxu0 %v2149
    %2196 = vmatprep.subr.mxu0 0.0
    %2197 = vmatpush1.msra.mxu0 %v2150
    %2198 = vmatprep.subr.mxu0 0.0
    %2199 = vmatpush1.msra.mxu0 %v2151
    %2200 = vmatprep.subr.mxu0 0.0
    %2201 = vmatpush1.msra.mxu0 %v2152
    %2202 = vmatprep.subr.mxu0 0.0
    %2203 = vmatpush1.msra.mxu0 %v2153
    %2204 = vmatprep.subr.mxu0 0.0
    %2205 = vmatpush1.msra.mxu0 %v2154
    %2206 = vmatprep.subr.mxu0 0.0
    %2207 = vmatpush1.msra.mxu0 %v2155
    %2208 = vmatprep.subr.mxu0 0.0
    %2209 = vmatpush1.msra.mxu0 %v2156
    %2210 = vmatprep.subr.mxu0 0.0
    %2211 = vmatpush1.msra.mxu0 %v2157
    %2212 = vmatprep.subr.mxu0 0.0
    %2213 = vmatpush1.msra.mxu0 %v2158
    %2214 = vmatprep.subr.mxu0 0.0
    %2215 = vmatpush1.msra.mxu0 %v2159
    %2216 = vmatprep.subr.mxu0 0.0
    %2217 = vmatpush1.msra.mxu0 %v2160
    %2218 = vmatprep.subr.mxu0 0.0
    %2219 = vmatpush1.msra.mxu0 %v2161
    %2220 = vmatprep.subr.mxu0 0.0
    %2221 = vmatpush1.msra.mxu0 %v2162
    %2222 = vmatprep.subr.mxu0 0.0
    %2223 = vmatpush1.msra.mxu0 %v2163
    %2224 = vmatprep.subr.mxu0 0.0
    %2225 = vmatpush1.msra.mxu0 %v2164
    %2226 = vmatprep.subr.mxu0 0.0
    %2227 = vmatpush1.msra.mxu0 %v2165
    %2228 = vmatprep.subr.mxu0 0.0
    %2229 = vmatpush1.msra.mxu0 %v2166
    %2230 = vmatprep.subr.mxu0 0.0
    %2231 = vmatpush1.msra.mxu0 %v2167
    %2232 = vmatprep.subr.mxu0 0.0
    %2233 = vmatpush1.msra.mxu0 %v2168
    %2234 = vmatprep.subr.mxu0 0.0
    %2235 = vmatpush1.msra.mxu0 %v2169
    %2236 = vmatprep.subr.mxu0 0.0
    %2237 = vmatpush1.msra.mxu0 %v2170
    %2238 = vmatprep.subr.mxu0 0.0
    %2239 = vmatpush1.msra.mxu0 %v2171
    %2240 = vmatprep.subr.mxu0 0.0
    %2241 = vmatpush1.msra.mxu0 %v2172
    %2242 = vmatprep.subr.mxu0 0.0
    %2243 = vmatpush1.msra.mxu0 %v2173
    %2244 = vmatprep.subr.mxu0 0.0
    %2245 = vmatpush1.msra.mxu0 %v2174
    %2246 = vmatprep.mubr.f32.mxu0 %v2080
    %2247 = vmatmul.mubr.f32.gmra.mrb[0].mxu0 %v2079
    %v2248 = vpop.f32.mrb[0].mxu0
    %v2249 = vadd.f32 %v2180, %v2248
    %v2250 = vpop.f32.mrb[0].mxu0
    %2251 = vmatprep.mubr.f32.mxu0 %v2082
    %2252 = vmatmul.mubr.f32.gmra.mrb[0].mxu0 %v2081
    %v2253 = vpop.f32.mrb[0].mxu0
    %v2254 = vadd.f32 %v2180, %v2253
    %v2255 = vpop.f32.mrb[0].mxu0
    %2256 = vmatprep.mubr.f32.mxu0 %v2084
    %2257 = vmatmul.mubr.f32.gmra.mrb[0].mxu0 %v2083
    %v2258 = vpop.f32.mrb[0].mxu0
    %v2259 = vadd.f32 %v2180, %v2258
    %v2260 = vpop.f32.mrb[0].mxu0
    %2261 = vmatprep.mubr.f32.mxu0 %v2086
    %2262 = vmatmul.mubr.f32.gmra.mrb[0].mxu0 %v2085
    %v2263 = vpop.f32.mrb[0].mxu0
    %v2264 = vadd.f32 %v2180, %v2263
    %v2265 = vpop.f32.mrb[0].mxu0
    %2266 = vmatprep.mubr.f32.mxu0 %v2088
    %2267 = vmatmul.mubr.f32.gmra.mrb[0].mxu0 %v2087
    %v2268 = vpop.f32.mrb[0].mxu0
    %v2269 = vadd.f32 %v2180, %v2268
    %v2270 = vpop.f32.mrb[0].mxu0
    %2271 = vmatprep.mubr.f32.mxu0 %v2090
    %2272 = vmatmul.mubr.f32.gmra.mrb[0].mxu0 %v2089
    %v2273 = vpop.f32.mrb[0].mxu0
    %v2274 = vadd.f32 %v2180, %v2273
    %v2275 = vpop.f32.mrb[0].mxu0
    %2276 = vmatprep.mubr.f32.mxu0 %v2092
    %2277 = vmatmul.mubr.f32.gmra.mrb[0].mxu0 %v2091
    %v2278 = vpop.f32.mrb[0].mxu0
    %v2279 = vadd.f32 %v2180, %v2278
    %v2280 = vpop.f32.mrb[0].mxu0
    %2281 = vmatprep.mubr.f32.mxu0 %v2094
    %2282 = vmatmul.mubr.f32.gmra.mrb[0].mxu0 %v2093
    %v2283 = vpop.f32.mrb[0].mxu0
    %v2284 = vadd.f32 %v2180, %v2283
    %v2285 = vpop.f32.mrb[0].mxu0
    %2286 = vmatprep.mubr.f32.mxu0 %v2096
    %2287 = vmatmul.mubr.f32.gmra.mrb[0].mxu0 %v2095
    %v2288 = vpop.f32.mrb[0].mxu0
    %v2289 = vadd.f32 %v2180, %v2288
    %v2290 = vpop.f32.mrb[0].mxu0
    %2291 = vmatprep.mubr.f32.mxu0 %v2098
    %2292 = vmatmul.mubr.f32.gmra.mrb[0].mxu0 %v2097
    %v2293 = vpop.f32.mrb[0].mxu0
    %v2294 = vadd.f32 %v2180, %v2293
    %v2295 = vpop.f32.mrb[0].mxu0
    %2296 = vmatprep.mubr.f32.mxu0 %v2100
    %2297 = vmatmul.mubr.f32.gmra.mrb[0].mxu0 %v2099
    %v2298 = vpop.f32.mrb[0].mxu0
    %v2299 = vadd.f32 %v2180, %v2298
    %v2300 = vpop.f32.mrb[0].mxu0
    %2301 = vmatprep.mubr.f32.mxu0 %v2102
    %2302 = vmatmul.mubr.f32.gmra.mrb[0].mxu0 %v2101
    %v2303 = vpop.f32.mrb[0].mxu0
    %v2304 = vadd.f32 %v2180, %v2303
    %v2305 = vpop.f32.mrb[0].mxu0
    %2306 = vmatprep.mubr.f32.mxu0 %v2104
    %2307 = vmatmul.mubr.f32.gmra.mrb[0].mxu0 %v2103
    %v2308 = vpop.f32.mrb[0].mxu0
    %v2309 = vadd.f32 %v2180, %v2308
    %v2310 = vpop.f32.mrb[0].mxu0
    %2311 = vmatprep.mubr.f32.mxu0 %v2106
    %2312 = vmatmul.mubr.f32.gmra.mrb[0].mxu0 %v2105
    %v2313 = vpop.f32.mrb[0].mxu0
    %v2314 = vadd.f32 %v2180, %v2313
    %v2315 = vpop.f32.mrb[0].mxu0
    %2316 = vmatprep.mubr.f32.mxu0 %v2108
    %2317 = vmatmul.mubr.f32.gmra.mrb[0].mxu0 %v2107
    %v2318 = vpop.f32.mrb[0].mxu0
    %v2319 = vadd.f32 %v2180, %v2318
    %v2320 = vpop.f32.mrb[0].mxu0
    %2321 = vmatprep.mubr.f32.mxu0 %v2110
    %2322 = vmatmul.mubr.f32.gmra.mrb[0].mxu0 %v2109
    %v2323 = vpop.f32.mrb[0].mxu0
    %v2324 = vadd.f32 %v2180, %v2323
    %v2325 = vpop.f32.mrb[0].mxu0
    %2326 = vmatprep.mubr.f32.mxu0 %v2112
    %2327 = vmatmul.mubr.f32.gmra.mrb[0].mxu0 %v2111
    %v2328 = vpop.f32.mrb[0].mxu0
    %v2329 = vadd.f32 %v2180, %v2328
    %v2330 = vpop.f32.mrb[0].mxu0
    %2331 = vmatprep.mubr.f32.mxu0 %v2114
    %2332 = vmatmul.mubr.f32.gmra.mrb[0].mxu0 %v2113
    %v2333 = vpop.f32.mrb[0].mxu0
    %v2334 = vadd.f32 %v2180, %v2333
    %v2335 = vpop.f32.mrb[0].mxu0
    %2336 = vmatprep.mubr.f32.mxu0 %v2116
    %2337 = vmatmul.mubr.f32.gmra.mrb[0].mxu0 %v2115
    %v2338 = vpop.f32.mrb[0].mxu0
    %v2339 = vadd.f32 %v2180, %v2338
    %v2340 = vpop.f32.mrb[0].mxu0
    %2341 = vmatprep.mubr.f32.mxu0 %v2118
    %2342 = vmatmul.mubr.f32.gmra.mrb[0].mxu0 %v2117
    %v2343 = vpop.f32.mrb[0].mxu0
    %v2344 = vadd.f32 %v2180, %v2343
    %v2345 = vpop.f32.mrb[0].mxu0
    %2346 = vmatprep.mubr.f32.mxu0 %v2120
    %2347 = vmatmul.mubr.f32.gmra.mrb[0].mxu0 %v2119
    %v2348 = vpop.f32.mrb[0].mxu0
    %v2349 = vadd.f32 %v2180, %v2348
    %v2350 = vpop.f32.mrb[0].mxu0
    %2351 = vmatprep.mubr.f32.mxu0 %v2122
    %2352 = vmatmul.mubr.f32.gmra.mrb[0].mxu0 %v2121
    %v2353 = vpop.f32.mrb[0].mxu0
    %v2354 = vadd.f32 %v2180, %v2353
    %v2355 = vpop.f32.mrb[0].mxu0
    %2356 = vmatprep.mubr.f32.mxu0 %v2124
    %2357 = vmatmul.mubr.f32.gmra.mrb[0].mxu0 %v2123
    %v2358 = vpop.f32.mrb[0].mxu0
    %v2359 = vadd.f32 %v2180, %v2358
    %v2360 = vpop.f32.mrb[0].mxu0
    %2361 = vmatprep.mubr.f32.mxu0 %v2126
    %2362 = vmatmul.mubr.f32.gmra.mrb[0].mxu0 %v2125
    %v2363 = vpop.f32.mrb[0].mxu0
    %v2364 = vadd.f32 %v2180, %v2363
    %v2365 = vpop.f32.mrb[0].mxu0
    %2366 = vmatprep.mubr.f32.mxu0 %v2128
    %2367 = vmatmul.mubr.f32.gmra.mrb[0].mxu0 %v2127
    %v2368 = vpop.f32.mrb[0].mxu0
    %v2369 = vadd.f32 %v2180, %v2368
    %v2370 = vpop.f32.mrb[0].mxu0
    %2371 = vmatprep.mubr.f32.mxu0 %v2130
    %2372 = vmatmul.mubr.f32.gmra.mrb[0].mxu0 %v2129
    %v2373 = vpop.f32.mrb[0].mxu0
    %v2374 = vadd.f32 %v2180, %v2373
    %v2375 = vpop.f32.mrb[0].mxu0
    %2376 = vmatprep.mubr.f32.mxu0 %v2132
    %2377 = vmatmul.mubr.f32.gmra.mrb[0].mxu0 %v2131
    %v2378 = vpop.f32.mrb[0].mxu0
    %v2379 = vadd.f32 %v2180, %v2378
    %v2380 = vpop.f32.mrb[0].mxu0
    %2381 = vmatprep.mubr.f32.mxu0 %v2134
    %2382 = vmatmul.mubr.f32.gmra.mrb[0].mxu0 %v2133
    %v2383 = vpop.f32.mrb[0].mxu0
    %v2384 = vadd.f32 %v2180, %v2383
    %v2385 = vpop.f32.mrb[0].mxu0
    %2386 = vmatprep.mubr.f32.mxu0 %v2136
    %2387 = vmatmul.mubr.f32.gmra.mrb[0].mxu0 %v2135
    %v2388 = vpop.f32.mrb[0].mxu0
    %v2389 = vadd.f32 %v2180, %v2388
    %v2390 = vpop.f32.mrb[0].mxu0
    %2391 = vmatprep.mubr.f32.mxu0 %v2138
    %2392 = vmatmul.mubr.f32.gmra.mrb[0].mxu0 %v2137
    %v2393 = vpop.f32.mrb[0].mxu0
    %v2394 = vadd.f32 %v2180, %v2393
    %v2395 = vpop.f32.mrb[0].mxu0
    %2396 = vmatprep.mubr.f32.mxu0 %v2140
    %2397 = vmatmul.mubr.f32.gmra.mrb[0].mxu0 %v2139
    %v2398 = vpop.f32.mrb[0].mxu0
    %v2399 = vadd.f32 %v2180, %v2398
    %v2400 = vpop.f32.mrb[0].mxu0
    %2401 = vmatprep.mubr.f32.mxu0 %v2142
    %2402 = vmatmul.mubr.f32.gmra.mrb[0].mxu0 %v2141
    %v2403 = vpop.f32.mrb[0].mxu0
    %v2404 = vadd.f32 %v2180, %v2403
    %v2405 = vpop.f32.mrb[0].mxu0
    %2406 = vdwg.mxu0
    %v2407 = vmax.f32 %v2249, 0.0
    %v2408 = vmax.f32 %v2254, 0.0
    %v2409 = vmax.f32 %v2259, 0.0
    %v2410 = vmax.f32 %v2264, 0.0
    %v2411 = vmax.f32 %v2269, 0.0
    %v2412 = vmax.f32 %v2274, 0.0
    %v2413 = vmax.f32 %v2279, 0.0
    %v2414 = vmax.f32 %v2284, 0.0
    %v2415 = vmax.f32 %v2289, 0.0
    %v2416 = vmax.f32 %v2294, 0.0
    %v2417 = vmax.f32 %v2299, 0.0
    %v2418 = vmax.f32 %v2304, 0.0
    %v2419 = vmax.f32 %v2309, 0.0
    %v2420 = vmax.f32 %v2314, 0.0
    %v2421 = vmax.f32 %v2319, 0.0
    %v2422 = vmax.f32 %v2324, 0.0
    %v2423 = vmax.f32 %v2329, 0.0
    %v2424 = vmax.f32 %v2334, 0.0
    %v2425 = vmax.f32 %v2339, 0.0
    %v2426 = vmax.f32 %v2344, 0.0
    %v2427 = vmax.f32 %v2349, 0.0
    %v2428 = vmax.f32 %v2354, 0.0
    %v2429 = vmax.f32 %v2359, 0.0
    %v2430 = vmax.f32 %v2364, 0.0
    %v2431 = vmax.f32 %v2369, 0.0
    %v2432 = vmax.f32 %v2374, 0.0
    %v2433 = vmax.f32 %v2379, 0.0
    %v2434 = vmax.f32 %v2384, 0.0
    %v2435 = vmax.f32 %v2389, 0.0
    %v2436 = vmax.f32 %v2394, 0.0
    %v2437 = vmax.f32 %v2399, 0.0
    %v2438 = vmax.f32 %v2404, 0.0
    %v2439 = vld [vmem:[#allocation4] sm:$0xff]
    %v2440 = vld [vmem:[#allocation4 + $0x8] sm:$0xff]
    %v2441 = vld [vmem:[#allocation4 + $0x10] sm:$0xff]
    %v2442 = vld [vmem:[#allocation4 + $0x18] sm:$0xff]
    %v2443 = vld [vmem:[#allocation4 + $0x20] sm:$0xff]
    %v2444 = vld [vmem:[#allocation4 + $0x28] sm:$0xff]
    %v2445 = vld [vmem:[#allocation4 + $0x30] sm:$0xff]
    %v2446 = vld [vmem:[#allocation4 + $0x38] sm:$0xff]
    %v2447 = vld [vmem:[#allocation4 + $0x40] sm:$0xff]
    %v2448 = vld [vmem:[#allocation4 + $0x48] sm:$0xff]
    %v2449 = vld [vmem:[#allocation4 + $0x50] sm:$0xff]
    %v2450 = vld [vmem:[#allocation4 + $0x58] sm:$0xff]
    %v2451 = vld [vmem:[#allocation4 + $0x60] sm:$0xff]
    %v2452 = vld [vmem:[#allocation4 + $0x68] sm:$0xff]
    %v2453 = vld [vmem:[#allocation4 + $0x70] sm:$0xff]
    %v2454 = vld [vmem:[#allocation4 + $0x78] sm:$0xff]
    %v2455 = vld [vmem:[%s8] sm:$0x1]
    %v2457 = vlaneseq
    %v2458 = vshrl.u32 %v2457, 7
    %v2459 = vsub.s32 0, %v2458
    %v2460 = vrot.slane %v2455, %v2459
    %2462 = vmatprep.subr.mxu0 0.0
    %2463 = vmatpush1.msra.mxu0 %v2439
    %2464 = vmatprep.subr.mxu0 0.0
    %2465 = vmatpush1.msra.mxu0 %v2440
    %2466 = vmatprep.subr.mxu0 0.0
    %2467 = vmatpush1.msra.mxu0 %v2441
    %2468 = vmatprep.subr.mxu0 0.0
    %2469 = vmatpush1.msra.mxu0 %v2442
    %2470 = vmatprep.subr.mxu0 0.0
    %2471 = vmatpush1.msra.mxu0 %v2443
    %2472 = vmatprep.subr.mxu0 0.0
    %2473 = vmatpush1.msra.mxu0 %v2444
    %2474 = vmatprep.subr.mxu0 0.0
    %2475 = vmatpush1.msra.mxu0 %v2445
    %2476 = vmatprep.subr.mxu0 0.0
    %2477 = vmatpush1.msra.mxu0 %v2446
    %2478 = vmatprep.subr.mxu0 0.0
    %2479 = vmatpush1.msra.mxu0 %v2447
    %2480 = vmatprep.subr.mxu0 0.0
    %2481 = vmatpush1.msra.mxu0 %v2448
    %2482 = vmatprep.subr.mxu0 0.0
    %2483 = vmatpush1.msra.mxu0 %v2449
    %2484 = vmatprep.subr.mxu0 0.0
    %2485 = vmatpush1.msra.mxu0 %v2450
    %2486 = vmatprep.subr.mxu0 0.0
    %2487 = vmatpush1.msra.mxu0 %v2451
    %2488 = vmatprep.subr.mxu0 0.0
    %2489 = vmatpush1.msra.mxu0 %v2452
    %2490 = vmatprep.subr.mxu0 0.0
    %2491 = vmatpush1.msra.mxu0 %v2453
    %2492 = vmatprep.subr.mxu0 0.0
    %2493 = vmatpush1.msra.mxu0 %v2454
    %2494 = vmatprep.subr.mxu0 0.0
    %2495 = vmatpush1.msra.mxu0 0.0
    %2496 = vmatprep.subr.mxu0 0.0
    %2497 = vmatpush1.msra.mxu0 0.0
    %2498 = vmatprep.subr.mxu0 0.0
    %2499 = vmatpush1.msra.mxu0 0.0
    %2500 = vmatprep.subr.mxu0 0.0
    %2501 = vmatpush1.msra.mxu0 0.0
    %2502 = vmatprep.subr.mxu0 0.0
    %2503 = vmatpush1.msra.mxu0 0.0
    %2504 = vmatprep.subr.mxu0 0.0
    %2505 = vmatpush1.msra.mxu0 0.0
    %2506 = vmatprep.subr.mxu0 0.0
    %2507 = vmatpush1.msra.mxu0 0.0
    %2508 = vmatprep.subr.mxu0 0.0
    %2509 = vmatpush1.msra.mxu0 0.0
    %2510 = vmatprep.subr.mxu0 0.0
    %2511 = vmatpush1.msra.mxu0 0.0
    %2512 = vmatprep.subr.mxu0 0.0
    %2513 = vmatpush1.msra.mxu0 0.0
    %2514 = vmatprep.subr.mxu0 0.0
    %2515 = vmatpush1.msra.mxu0 0.0
    %2516 = vmatprep.subr.mxu0 0.0
    %2517 = vmatpush1.msra.mxu0 0.0
    %2518 = vmatprep.subr.mxu0 0.0
    %2519 = vmatpush1.msra.mxu0 0.0
    %2520 = vmatprep.subr.mxu0 0.0
    %2521 = vmatpush1.msra.mxu0 0.0
    %2522 = vmatprep.subr.mxu0 0.0
    %2523 = vmatpush1.msra.mxu0 0.0
    %2524 = vmatprep.subr.mxu0 0.0
    %2525 = vmatpush1.msra.mxu0 0.0
    %2526 = vmatprep.mubr.f32.mxu0 0.0
    %2527 = vmatmul.mubr.f32.gmra.mrb[0].mxu0 %v2407
    %v2528 = vpop.f32.mrb[0].mxu0
    %v2529 = vadd.f32 %v2460, %v2528
    %v2530 = vpop.f32.mrb[0].mxu0
    %2531 = vmatprep.mubr.f32.mxu0 0.0
    %2532 = vmatmul.mubr.f32.gmra.mrb[0].mxu0 %v2408
    %v2533 = vpop.f32.mrb[0].mxu0
    %v2534 = vadd.f32 %v2460, %v2533
    %v2535 = vpop.f32.mrb[0].mxu0
    %2536 = vmatprep.mubr.f32.mxu0 0.0
    %2537 = vmatmul.mubr.f32.gmra.mrb[0].mxu0 %v2409
    %v2538 = vpop.f32.mrb[0].mxu0
    %v2539 = vadd.f32 %v2460, %v2538
    %v2540 = vpop.f32.mrb[0].mxu0
    %2541 = vmatprep.mubr.f32.mxu0 0.0
    %2542 = vmatmul.mubr.f32.gmra.mrb[0].mxu0 %v2410
    %v2543 = vpop.f32.mrb[0].mxu0
    %v2544 = vadd.f32 %v2460, %v2543
    %v2545 = vpop.f32.mrb[0].mxu0
    %2546 = vmatprep.mubr.f32.mxu0 0.0
    %2547 = vmatmul.mubr.f32.gmra.mrb[0].mxu0 %v2411
    %v2548 = vpop.f32.mrb[0].mxu0
    %v2549 = vadd.f32 %v2460, %v2548
    %v2550 = vpop.f32.mrb[0].mxu0
    %2551 = vmatprep.mubr.f32.mxu0 0.0
    %2552 = vmatmul.mubr.f32.gmra.mrb[0].mxu0 %v2412
    %v2553 = vpop.f32.mrb[0].mxu0
    %v2554 = vadd.f32 %v2460, %v2553
    %v2555 = vpop.f32.mrb[0].mxu0
    %2556 = vmatprep.mubr.f32.mxu0 0.0
    %2557 = vmatmul.mubr.f32.gmra.mrb[0].mxu0 %v2413
    %v2558 = vpop.f32.mrb[0].mxu0
    %v2559 = vadd.f32 %v2460, %v2558
    %v2560 = vpop.f32.mrb[0].mxu0
    %2561 = vmatprep.mubr.f32.mxu0 0.0
    %2562 = vmatmul.mubr.f32.gmra.mrb[0].mxu0 %v2414
    %v2563 = vpop.f32.mrb[0].mxu0
    %v2564 = vadd.f32 %v2460, %v2563
    %v2565 = vpop.f32.mrb[0].mxu0
    %2566 = vmatprep.mubr.f32.mxu0 0.0
    %2567 = vmatmul.mubr.f32.gmra.mrb[0].mxu0 %v2415
    %v2568 = vpop.f32.mrb[0].mxu0
    %v2569 = vadd.f32 %v2460, %v2568
    %v2570 = vpop.f32.mrb[0].mxu0
    %2571 = vmatprep.mubr.f32.mxu0 0.0
    %2572 = vmatmul.mubr.f32.gmra.mrb[0].mxu0 %v2416
    %v2573 = vpop.f32.mrb[0].mxu0
    %v2574 = vadd.f32 %v2460, %v2573
    %v2575 = vpop.f32.mrb[0].mxu0
    %2576 = vmatprep.mubr.f32.mxu0 0.0
    %2577 = vmatmul.mubr.f32.gmra.mrb[0].mxu0 %v2417
    %v2578 = vpop.f32.mrb[0].mxu0
    %v2579 = vadd.f32 %v2460, %v2578
    %v2580 = vpop.f32.mrb[0].mxu0
    %2581 = vmatprep.mubr.f32.mxu0 0.0
    %2582 = vmatmul.mubr.f32.gmra.mrb[0].mxu0 %v2418
    %v2583 = vpop.f32.mrb[0].mxu0
    %v2584 = vadd.f32 %v2460, %v2583
    %v2585 = vpop.f32.mrb[0].mxu0
    %2586 = vmatprep.mubr.f32.mxu0 0.0
    %2587 = vmatmul.mubr.f32.gmra.mrb[0].mxu0 %v2419
    %v2588 = vpop.f32.mrb[0].mxu0
    %v2589 = vadd.f32 %v2460, %v2588
    %v2590 = vpop.f32.mrb[0].mxu0
    %2591 = vmatprep.mubr.f32.mxu0 0.0
    %2592 = vmatmul.mubr.f32.gmra.mrb[0].mxu0 %v2420
    %v2593 = vpop.f32.mrb[0].mxu0
    %v2594 = vadd.f32 %v2460, %v2593
    %v2595 = vpop.f32.mrb[0].mxu0
    %2596 = vmatprep.mubr.f32.mxu0 0.0
    %2597 = vmatmul.mubr.f32.gmra.mrb[0].mxu0 %v2421
    %v2598 = vpop.f32.mrb[0].mxu0
    %v2599 = vadd.f32 %v2460, %v2598
    %v2600 = vpop.f32.mrb[0].mxu0
    %2601 = vmatprep.mubr.f32.mxu0 0.0
    %2602 = vmatmul.mubr.f32.gmra.mrb[0].mxu0 %v2422
    %v2603 = vpop.f32.mrb[0].mxu0
    %v2604 = vadd.f32 %v2460, %v2603
    %v2605 = vpop.f32.mrb[0].mxu0
    %2606 = vmatprep.mubr.f32.mxu0 0.0
    %2607 = vmatmul.mubr.f32.gmra.mrb[0].mxu0 %v2423
    %v2608 = vpop.f32.mrb[0].mxu0
    %v2609 = vadd.f32 %v2460, %v2608
    %v2610 = vpop.f32.mrb[0].mxu0
    %2611 = vmatprep.mubr.f32.mxu0 0.0
    %2612 = vmatmul.mubr.f32.gmra.mrb[0].mxu0 %v2424
    %v2613 = vpop.f32.mrb[0].mxu0
    %v2614 = vadd.f32 %v2460, %v2613
    %v2615 = vpop.f32.mrb[0].mxu0
    %2616 = vmatprep.mubr.f32.mxu0 0.0
    %2617 = vmatmul.mubr.f32.gmra.mrb[0].mxu0 %v2425
    %v2618 = vpop.f32.mrb[0].mxu0
    %v2619 = vadd.f32 %v2460, %v2618
    %v2620 = vpop.f32.mrb[0].mxu0
    %2621 = vmatprep.mubr.f32.mxu0 0.0
    %2622 = vmatmul.mubr.f32.gmra.mrb[0].mxu0 %v2426
    %v2623 = vpop.f32.mrb[0].mxu0
    %v2624 = vadd.f32 %v2460, %v2623
    %v2625 = vpop.f32.mrb[0].mxu0
    %2626 = vmatprep.mubr.f32.mxu0 0.0
    %2627 = vmatmul.mubr.f32.gmra.mrb[0].mxu0 %v2427
    %v2628 = vpop.f32.mrb[0].mxu0
    %v2629 = vadd.f32 %v2460, %v2628
    %v2630 = vpop.f32.mrb[0].mxu0
    %2631 = vmatprep.mubr.f32.mxu0 0.0
    %2632 = vmatmul.mubr.f32.gmra.mrb[0].mxu0 %v2428
    %v2633 = vpop.f32.mrb[0].mxu0
    %v2634 = vadd.f32 %v2460, %v2633
    %v2635 = vpop.f32.mrb[0].mxu0
    %2636 = vmatprep.mubr.f32.mxu0 0.0
    %2637 = vmatmul.mubr.f32.gmra.mrb[0].mxu0 %v2429
    %v2638 = vpop.f32.mrb[0].mxu0
    %v2639 = vadd.f32 %v2460, %v2638
    %v2640 = vpop.f32.mrb[0].mxu0
    %2641 = vmatprep.mubr.f32.mxu0 0.0
    %2642 = vmatmul.mubr.f32.gmra.mrb[0].mxu0 %v2430
    %v2643 = vpop.f32.mrb[0].mxu0
    %v2644 = vadd.f32 %v2460, %v2643
    %v2645 = vpop.f32.mrb[0].mxu0
    %2646 = vmatprep.mubr.f32.mxu0 0.0
    %2647 = vmatmul.mubr.f32.gmra.mrb[0].mxu0 %v2431
    %v2648 = vpop.f32.mrb[0].mxu0
    %v2649 = vadd.f32 %v2460, %v2648
    %v2650 = vpop.f32.mrb[0].mxu0
    %2651 = vmatprep.mubr.f32.mxu0 0.0
    %2652 = vmatmul.mubr.f32.gmra.mrb[0].mxu0 %v2432
    %v2653 = vpop.f32.mrb[0].mxu0
    %v2654 = vadd.f32 %v2460, %v2653
    %v2655 = vpop.f32.mrb[0].mxu0
    %2656 = vmatprep.mubr.f32.mxu0 0.0
    %2657 = vmatmul.mubr.f32.gmra.mrb[0].mxu0 %v2433
    %v2658 = vpop.f32.mrb[0].mxu0
    %v2659 = vadd.f32 %v2460, %v2658
    %v2660 = vpop.f32.mrb[0].mxu0
    %2661 = vmatprep.mubr.f32.mxu0 0.0
    %2662 = vmatmul.mubr.f32.gmra.mrb[0].mxu0 %v2434
    %v2663 = vpop.f32.mrb[0].mxu0
    %v2664 = vadd.f32 %v2460, %v2663
    %v2665 = vpop.f32.mrb[0].mxu0
    %2666 = vmatprep.mubr.f32.mxu0 0.0
    %2667 = vmatmul.mubr.f32.gmra.mrb[0].mxu0 %v2435
    %v2668 = vpop.f32.mrb[0].mxu0
    %v2669 = vadd.f32 %v2460, %v2668
    %v2670 = vpop.f32.mrb[0].mxu0
    %2671 = vmatprep.mubr.f32.mxu0 0.0
    %2672 = vmatmul.mubr.f32.gmra.mrb[0].mxu0 %v2436
    %v2673 = vpop.f32.mrb[0].mxu0
    %v2674 = vadd.f32 %v2460, %v2673
    %v2675 = vpop.f32.mrb[0].mxu0
    %2676 = vmatprep.mubr.f32.mxu0 0.0
    %2677 = vmatmul.mubr.f32.gmra.mrb[0].mxu0 %v2437
    %v2678 = vpop.f32.mrb[0].mxu0
    %v2679 = vadd.f32 %v2460, %v2678
    %v2680 = vpop.f32.mrb[0].mxu0
    %2681 = vmatprep.mubr.f32.mxu0 0.0
    %2682 = vmatmul.mubr.f32.gmra.mrb[0].mxu0 %v2438
    %v2683 = vpop.f32.mrb[0].mxu0
    %v2684 = vadd.f32 %v2460, %v2683
    %v2685 = vpop.f32.mrb[0].mxu0
    %2686 = vdwg.mxu0
    %v2687 = vmax.f32 %v2529, 0.0
    %v2688 = vmax.f32 %v2534, 0.0
    %v2689 = vmax.f32 %v2539, 0.0
    %v2690 = vmax.f32 %v2544, 0.0
    %v2691 = vmax.f32 %v2549, 0.0
    %v2692 = vmax.f32 %v2554, 0.0
    %v2693 = vmax.f32 %v2559, 0.0
    %v2694 = vmax.f32 %v2564, 0.0
    %v2695 = vmax.f32 %v2569, 0.0
    %v2696 = vmax.f32 %v2574, 0.0
    %v2697 = vmax.f32 %v2579, 0.0
    %v2698 = vmax.f32 %v2584, 0.0
    %v2699 = vmax.f32 %v2589, 0.0
    %v2700 = vmax.f32 %v2594, 0.0
    %v2701 = vmax.f32 %v2599, 0.0
    %v2702 = vmax.f32 %v2604, 0.0
    %v2703 = vmax.f32 %v2609, 0.0
    %v2704 = vmax.f32 %v2614, 0.0
    %v2705 = vmax.f32 %v2619, 0.0
    %v2706 = vmax.f32 %v2624, 0.0
    %v2707 = vmax.f32 %v2629, 0.0
    %v2708 = vmax.f32 %v2634, 0.0
    %v2709 = vmax.f32 %v2639, 0.0
    %v2710 = vmax.f32 %v2644, 0.0
    %v2711 = vmax.f32 %v2649, 0.0
    %v2712 = vmax.f32 %v2654, 0.0
    %v2713 = vmax.f32 %v2659, 0.0
    %v2714 = vmax.f32 %v2664, 0.0
    %v2715 = vmax.f32 %v2669, 0.0
    %v2716 = vmax.f32 %v2674, 0.0
    %v2717 = vmax.f32 %v2679, 0.0
    %v2718 = vmax.f32 %v2684, 0.0
    %2719 = vst [vmem:[%s9] sm:$0xff] %v2687
    %2720 = vst [vmem:[%s9 + $0x8] sm:$0xff] %v2688
    %2721 = vst [vmem:[%s9 + $0x10] sm:$0xff] %v2689
    %2722 = vst [vmem:[%s9 + $0x18] sm:$0xff] %v2690
    %2723 = vst [vmem:[%s9 + $0x20] sm:$0xff] %v2691
    %2724 = vst [vmem:[%s9 + $0x28] sm:$0xff] %v2692
    %2725 = vst [vmem:[%s9 + $0x30] sm:$0xff] %v2693
    %2726 = vst [vmem:[%s9 + $0x38] sm:$0xff] %v2694
    %2727 = vst [vmem:[%s9 + $0x40] sm:$0xff] %v2695
    %2728 = vst [vmem:[%s9 + $0x48] sm:$0xff] %v2696
    %2729 = vst [vmem:[%s9 + $0x50] sm:$0xff] %v2697
    %2730 = vst [vmem:[%s9 + $0x58] sm:$0xff] %v2698
    %2731 = vst [vmem:[%s9 + $0x60] sm:$0xff] %v2699
    %2732 = vst [vmem:[%s9 + $0x68] sm:$0xff] %v2700
    %2733 = vst [vmem:[%s9 + $0x70] sm:$0xff] %v2701
    %2734 = vst [vmem:[%s9 + $0x78] sm:$0xff] %v2702
    %2735 = vst [vmem:[%s9 + $0x80] sm:$0xff] %v2703
    %2736 = vst [vmem:[%s9 + $0x88] sm:$0xff] %v2704
    %2737 = vst [vmem:[%s9 + $0x90] sm:$0xff] %v2705
    %2738 = vst [vmem:[%s9 + $0x98] sm:$0xff] %v2706
    %2739 = vst [vmem:[%s9 + $0xa0] sm:$0xff] %v2707
    %2740 = vst [vmem:[%s9 + $0xa8] sm:$0xff] %v2708
    %2741 = vst [vmem:[%s9 + $0xb0] sm:$0xff] %v2709
    %2742 = vst [vmem:[%s9 + $0xb8] sm:$0xff] %v2710
    %2743 = vst [vmem:[%s9 + $0xc0] sm:$0xff] %v2711
    %2744 = vst [vmem:[%s9 + $0xc8] sm:$0xff] %v2712
    %2745 = vst [vmem:[%s9 + $0xd0] sm:$0xff] %v2713
    %2746 = vst [vmem:[%s9 + $0xd8] sm:$0xff] %v2714
    %2747 = vst [vmem:[%s9 + $0xe0] sm:$0xff] %v2715
    %2748 = vst [vmem:[%s9 + $0xe8] sm:$0xff] %v2716
    %2749 = vst [vmem:[%s9 + $0xf0] sm:$0xff] %v2717
    %2750 = vst [vmem:[%s9 + $0xf8] sm:$0xff] %v2718
    // Predicated region
    $region46: #{dqn_forward.1} parent=1 // pred_check
      _
    $region47: #{dqn_forward.1} parent=1 // pred_check_branch
      %2752 = sbr.rel (0) target = $region49
    $region48: #{dqn_forward.1} parent=1 // pred_region
      _
    $region49: #{dqn_forward.1} parent=1 // pred_fallthru
      _
    // Predicated region
    $region50: #{dqn_forward.1} parent=1 // pred_check
      _
    $region51: #{dqn_forward.1} parent=1 // pred_check_branch
      %2754 = sbr.rel (0) target = $region53
    $region52: #{dqn_forward.1} parent=1 // pred_region
      _
    $region53: #{dqn_forward.1} parent=1 // pred_fallthru
      _
    %2755 = vsyncpa [#allocation3], 1
    %2756 = vsyncpa [#allocation5], 1

</llo_original>
